<compile_context>
chip_gen: v7x
topology: tpu7x:2x2x1
jax: 0.10.0
libtpu: 0.0.40
codegen_flags: <defaults>
</compile_context>

<pallas_src>
import functools

import jax
import jax.numpy as jnp
from jax import lax
from jax.experimental import pallas as pl
from jax.experimental.pallas import tpu as pltpu

BN_EPS = 1e-5


# ----------------------------------------------------------------------------
# Fused Pallas kernel
# ----------------------------------------------------------------------------
def _mlp_bn(inp, w1, w2, vec):
    """ReLU(inp@W1 + b1) -> ReLU(.@W2 + b2) -> *scale + shift (eval-mode BN folded).

    vec rows: [b1, b2, scale, shift], each [1, D].
    """
    h1 = jnp.maximum(
        jnp.dot(inp, w1, preferred_element_type=jnp.float32) + vec[0:1, :], 0.0)
    h2 = jnp.maximum(
        jnp.dot(h1, w2, preferred_element_type=jnp.float32) + vec[1:2, :], 0.0)
    return h2 * vec[2:3, :] + vec[3:4, :]


def _make_gine_kernel(num_layers):
    def kernel(x_ref, edge_ref, src_ref, dst_ref, batch_ref, eps_ref,
               c1_ew1, c1_ew2, c1_evec, c1_mw1, c1_mw2, c1_mvec, *rest):
        if num_layers > 1:
            (ew1_cat, eb1_cat, ew2_stk, evec3_stk,
             mw1_stk, mw2_stk, mvec_stk) = rest[:7]
            rest = rest[7:]
        wl1_ref, wl2_ref, lbias_ref, o_ref = rest

        x = x_ref[...]                                          # [N, F_in]
        edge_attr = edge_ref[...]                               # [E, F_e]
        n = x.shape[0]
        num_e = edge_attr.shape[0]
        hidden = c1_mw1.shape[1]

        # One-hot gather / scatter matrices: constant across layers, built ONCE.
        # src/dst arrive lane-major as [1, E] -> contiguous lane-dense DMA + cheap
        # sublane broadcast for the compare.
        iota_ne = lax.broadcasted_iota(jnp.int32, (n, num_e), 0)
        oh_src = (src_ref[...] == iota_ne).astype(jnp.float32)  # [N,E]  src[e] == n
        oh_dst = (dst_ref[...] == iota_ne).astype(jnp.float32)  # [N,E]  dst[e] == n

        # Batched first edge-encoder matmul for layers 2..L: edge_attr is layer-invariant,
        # so one matmul with (L-1)*H output columns feeds all of them (better MXU width).
        if num_layers > 1:
            h1_all = jnp.maximum(
                jnp.dot(edge_attr, ew1_cat[...], preferred_element_type=jnp.float32)
                + eb1_cat[...], 0.0)                             # [E, (L-1)*H]

        h = x
        for l in range(num_layers):                              # unrolled (static)
            if l == 0:
                # conv1 edge_encoder (different in/out dims -> kept separate)
                edge_emb = _mlp_bn(edge_attr, c1_ew1[...], c1_ew2[...], c1_evec[...])
            else:
                i = l - 1
                h1 = h1_all[:, i * hidden:(i + 1) * hidden]      # static slice
                v3 = evec3_stk[i]                                # [3,H] = b2, scale, shift
                h2 = jnp.maximum(
                    jnp.dot(h1, ew2_stk[i], preferred_element_type=jnp.float32)
                    + v3[0:1, :], 0.0)
                edge_emb = h2 * v3[1:2, :] + v3[2:3, :]

            # propagate(aggr='add'): x_j = h[src]  (exact f32 gather via HIGHEST precision)
            x_j = lax.dot_general(
                oh_src, h, (((0,), (0,)), ((), ())),
                precision=lax.Precision.HIGHEST,
                preferred_element_type=jnp.float32)              # [E, D]
            msg = jnp.maximum(x_j + edge_emb, 0.0)               # relu(x_j + e)
            agg = jnp.dot(oh_dst, msg,
                          precision=lax.Precision.HIGHEST,
                          preferred_element_type=jnp.float32)    # [N, D] scatter-add

            pre = eps_ref[l] * h + agg                           # (1+eps) scalar from SMEM
            if l == 0:
                h = _mlp_bn(pre, c1_mw1[...], c1_mw2[...], c1_mvec[...])
            else:
                h = _mlp_bn(pre, mw1_stk[i], mw2_stk[i], mvec_stk[i])

        # global_mean_pool -> ReLU(lin1) -> dropout(identity, eval) -> lin2 -> log_softmax
        num_graphs, num_classes = o_ref.shape
        graph_iota = lax.broadcasted_iota(jnp.int32, (num_graphs, n), 0)
        oh_pool = (graph_iota == batch_ref[...]).astype(jnp.float32)      # [G, N]
        counts = jnp.maximum(jnp.sum(oh_pool, axis=1, keepdims=True), 1.0)
        pooled = jnp.dot(oh_pool, h,
                         precision=lax.Precision.HIGHEST,
                         preferred_element_type=jnp.float32)
        pooled = pooled * pl.reciprocal(counts, approx=True)

        lb = lbias_ref[...]                                      # [2, max(H, C)]
        hh = jnp.maximum(
            jnp.dot(pooled, wl1_ref[...], preferred_element_type=jnp.float32)
            + lb[0:1, :hidden], 0.0)
        logits = (jnp.dot(hh, wl2_ref[...], preferred_element_type=jnp.float32)
                  + lb[1:2, :num_classes])
        z = logits - jnp.max(logits, axis=-1, keepdims=True)
        o_ref[...] = z - jnp.log(jnp.sum(jnp.exp(z), axis=-1, keepdims=True))

    return kernel


# ----------------------------------------------------------------------------
# Parameter initialization (deterministic, PyTorch-Linear-like uniform init)
# with eval-mode BN pre-folded into (scale, shift).
# ----------------------------------------------------------------------------
def init_linear(key, fan_in, fan_out):
    k1, k2 = jax.random.split(key)
    bound = 1.0 / jnp.sqrt(float(fan_in))
    w = jax.random.uniform(k1, (fan_in, fan_out), jnp.float32, -bound, bound)
    b = jax.random.uniform(k2, (1, fan_out), jnp.float32, -bound, bound)
    return w, b


def init_mlp_bn(key, d_in, d_hidden, d_out):
    """Sequential(Linear(d_in,d_hidden), ReLU, Linear(d_hidden,d_out), ReLU, BN(d_out)).

    Eval-mode BN (here: fresh stats gamma=1, beta=0, mean=0, var=1) is folded into
    per-feature scale/shift; real checkpoints must supply their running stats here.
    """
    assert d_hidden == d_out  # GINEConv always uses equal widths for Lin2/BN
    k1, k2 = jax.random.split(key)
    w1, b1 = init_linear(k1, d_in, d_hidden)
    w2, b2 = init_linear(k2, d_hidden, d_out)
    gamma = jnp.ones((1, d_out), jnp.float32)
    beta = jnp.zeros((1, d_out), jnp.float32)
    mean = jnp.zeros((1, d_out), jnp.float32)
    var = jnp.ones((1, d_out), jnp.float32)
    scale = gamma / jnp.sqrt(var + BN_EPS)
    shift = beta - mean * scale
    vecs = jnp.concatenate([b1, b2, scale, shift], axis=0)        # [4, d_out]
    return {"w1": w1, "w2": w2, "vecs": vecs}


def init_gine_conv(key, edge_dim, dim_init, dim):
    k1, k2 = jax.random.split(key)
    return {
        "edge_encoder": init_mlp_bn(k1, edge_dim, dim_init, dim_init),
        "mlp": init_mlp_bn(k2, dim_init, dim, dim),
        "eps": jnp.zeros((1,), jnp.float32),       # initial_eps = 0
    }


def init_gine(key, num_edge_features, num_features, num_classes, num_layers, hidden):
    keys = jax.random.split(key, num_layers + 2)
    return {
        "conv1": init_gine_conv(keys[0], num_edge_features, num_features, hidden),
        "convs": [init_gine_conv(keys[1 + i], num_edge_features, hidden, hidden)
                  for i in range(num_layers - 1)],
        "lin1": init_linear(keys[num_layers], hidden, hidden),
        "lin2": init_linear(keys[num_layers + 1], hidden, num_classes),
    }


def pack_gine_params(params):
    """One-time packing of per-layer weights into a handful of kernel operands."""
    conv_params = [params["conv1"]] + list(params["convs"])
    num_layers = len(conv_params)
    c1 = conv_params[0]
    packed = {
        "conv1": (c1["edge_encoder"]["w1"], c1["edge_encoder"]["w2"],
                  c1["edge_encoder"]["vecs"],
                  c1["mlp"]["w1"], c1["mlp"]["w2"], c1["mlp"]["vecs"]),
        "one_plus_eps": 1.0 + jnp.concatenate([p["eps"] for p in conv_params]),  # [L]
    }
    if num_layers > 1:
        rest = conv_params[1:]
        packed["stacks"] = (
            jnp.concatenate([p["edge_encoder"]["w1"] for p in rest], axis=1),        # [F_e,(L-1)H]
            jnp.concatenate([p["edge_encoder"]["vecs"][0:1] for p in rest], axis=1), # [1,(L-1)H]
            jnp.stack([p["edge_encoder"]["w2"] for p in rest]),                      # [L-1,H,H]
            jnp.stack([p["edge_encoder"]["vecs"][1:4] for p in rest]),               # [L-1,3,H]
            jnp.stack([p["mlp"]["w1"] for p in rest]),                               # [L-1,H,H]
            jnp.stack([p["mlp"]["w2"] for p in rest]),                               # [L-1,H,H]
            jnp.stack([p["mlp"]["vecs"] for p in rest]),                             # [L-1,4,H]
        )
    wl1, bl1 = params["lin1"]
    wl2, bl2 = params["lin2"]
    hidden, num_classes = wl1.shape[1], wl2.shape[1]
    pad = max(hidden, num_classes)
    lbias = jnp.concatenate(
        [jnp.pad(bl1, ((0, 0), (0, pad - hidden))),
         jnp.pad(bl2, ((0, 0), (0, pad - num_classes)))], axis=0)                    # [2, pad]
    packed["lin"] = (wl1, wl2, lbias)
    return packed


# ----------------------------------------------------------------------------
# Forward pass: ONE pallas_call for the whole network
# ----------------------------------------------------------------------------
@functools.partial(jax.jit, static_argnames=("num_graphs",))
def gine_forward(packed, x, src, dst, edge_attr, batch, num_graphs):
    num_layers = packed["one_plus_eps"].shape[0]
    wl1, wl2, lbias = packed["lin"]
    num_classes = wl2.shape[1]
    stack_ops = packed["stacks"] if num_layers > 1 else ()

    vmem = pl.BlockSpec(memory_space=pltpu.MemorySpace.VMEM)
    smem = pl.BlockSpec(memory_space=pltpu.MemorySpace.SMEM)
    in_specs = ([vmem] * 5                 # x, edge_attr, src, dst, batch
                + [smem]                   # one_plus_eps (per-layer scalars)
                + [vmem] * 6               # conv1
                + [vmem] * len(stack_ops)  # stacked layers 2..L
                + [vmem] * 3)              # lin1 W, lin2 W, packed biases

    return pl.pallas_call(
        _make_gine_kernel(num_layers),
        out_shape=jax.ShapeDtypeStruct((num_graphs, num_classes), jnp.float32),
        in_specs=in_specs,
        out_specs=pl.BlockSpec(memory_space=pltpu.MemorySpace.VMEM),
    )(x, edge_attr, src, dst, batch, packed["one_plus_eps"],
      *packed["conv1"], *stack_ops, wl1, wl2, lbias)


# ----------------------------------------------------------------------------
# Main
# ----------------------------------------------------------------------------
if __name__ == "__main__":
    key = jax.random.PRNGKey(0)
    k_param, k_x, k_e, k_src, k_dst = jax.random.split(key, 5)

    # synthetic "dataset" sizes
    num_features = 8        # dataset.num_features
    num_edge_features = 4   # dataset.num_edge_features
    num_classes = 3         # dataset.num_classes
    hidden = 32
    num_layers = 3

    # small graph batch: 2 graphs, 16 nodes, 40 directed edges
    N, E, num_graphs = 16, 40, 2
    x = jax.random.normal(k_x, (N, num_features), jnp.float32)
    edge_attr = jax.random.normal(k_e, (E, num_edge_features), jnp.float32)
    src = jax.random.randint(k_src, (1, E), 0, N, jnp.int32)   # edge_index[0] (x_j source)
    dst = jax.random.randint(k_dst, (1, E), 0, N, jnp.int32)   # edge_index[1] (aggregate target)
    batch = jnp.concatenate(
        [jnp.zeros((N // 2,), jnp.int32), jnp.ones((N - N // 2,), jnp.int32)]
    ).reshape(1, N)

    params = init_gine(k_param, num_edge_features, num_features,
                       num_classes, num_layers, hidden)
    packed = pack_gine_params(params)   # one-time operand packing (outside the hot path)

    out = gine_forward(packed, x, src, dst, edge_attr, batch, num_graphs)
    out = jax.block_until_ready(out)
    assert out.shape == (num_graphs, num_classes)
    assert bool(jnp.all(jnp.isfinite(out)))
    print("KERNEL_OK")
</pallas_src>

<mosaic_0001>
module attributes {stable_mosaic.version = 11 : i64} {
  func.func @kernel(%arg0: memref<16x8xf32, #tpu.memory_space<vmem>>, %arg1: memref<40x4xf32, #tpu.memory_space<vmem>>, %arg2: memref<1x40xi32, #tpu.memory_space<vmem>>, %arg3: memref<1x40xi32, #tpu.memory_space<vmem>>, %arg4: memref<1x16xi32, #tpu.memory_space<vmem>>, %arg5: memref<3xf32, #tpu.memory_space<smem>>, %arg6: memref<4x8xf32, #tpu.memory_space<vmem>>, %arg7: memref<8x8xf32, #tpu.memory_space<vmem>>, %arg8: memref<4x8xf32, #tpu.memory_space<vmem>>, %arg9: memref<8x32xf32, #tpu.memory_space<vmem>>, %arg10: memref<32x32xf32, #tpu.memory_space<vmem>>, %arg11: memref<4x32xf32, #tpu.memory_space<vmem>>, %arg12: memref<4x64xf32, #tpu.memory_space<vmem>>, %arg13: memref<1x64xf32, #tpu.memory_space<vmem>>, %arg14: memref<2x32x32xf32, #tpu.memory_space<vmem>>, %arg15: memref<2x3x32xf32, #tpu.memory_space<vmem>>, %arg16: memref<2x32x32xf32, #tpu.memory_space<vmem>>, %arg17: memref<2x32x32xf32, #tpu.memory_space<vmem>>, %arg18: memref<2x4x32xf32, #tpu.memory_space<vmem>>, %arg19: memref<32x32xf32, #tpu.memory_space<vmem>>, %arg20: memref<32x3xf32, #tpu.memory_space<vmem>>, %arg21: memref<2x32xf32, #tpu.memory_space<vmem>>, %arg22: memref<2x3xf32, #tpu.memory_space<vmem>>) attributes {dimension_semantics = [], scalar_prefetch = 0 : i64, scratch_operands = 0 : i64, tpu.core_type = #tpu.core_type<tc>} {
    %c0 = arith.constant 0 : index
    %c0_0 = arith.constant 0 : index
    %0 = vector.load %arg0[%c0, %c0_0] : memref<16x8xf32, #tpu.memory_space<vmem>>, vector<16x8xf32>
    %c0_1 = arith.constant 0 : index
    %c0_2 = arith.constant 0 : index
    %1 = vector.load %arg1[%c0_1, %c0_2] : memref<40x4xf32, #tpu.memory_space<vmem>>, vector<40x4xf32>
    %2 = tpu.iota {dimensions = array<i32: 0>} : vector<16x40xi32>
    %c0_3 = arith.constant 0 : index
    %c0_4 = arith.constant 0 : index
    %3 = vector.load %arg2[%c0_3, %c0_4] : memref<1x40xi32, #tpu.memory_space<vmem>>, vector<1x40xi32>
    %4 = vector.broadcast %3 : vector<1x40xi32> to vector<16x40xi32>
    %5 = arith.cmpi eq, %4, %2 : vector<16x40xi32>
    %6 = arith.extui %5 : vector<16x40xi1> to vector<16x40xi32>
    %7 = arith.sitofp %6 : vector<16x40xi32> to vector<16x40xf32>
    %c0_5 = arith.constant 0 : index
    %c0_6 = arith.constant 0 : index
    %8 = vector.load %arg3[%c0_5, %c0_6] : memref<1x40xi32, #tpu.memory_space<vmem>>, vector<1x40xi32>
    %9 = vector.broadcast %8 : vector<1x40xi32> to vector<16x40xi32>
    %10 = arith.cmpi eq, %9, %2 : vector<16x40xi32>
    %11 = arith.extui %10 : vector<16x40xi1> to vector<16x40xi32>
    %12 = arith.sitofp %11 : vector<16x40xi32> to vector<16x40xf32>
    %c0_7 = arith.constant 0 : index
    %c0_8 = arith.constant 0 : index
    %13 = vector.load %arg12[%c0_7, %c0_8] : memref<4x64xf32, #tpu.memory_space<vmem>>, vector<4x64xf32>
    %cst = arith.constant dense<0.000000e+00> : vector<40x64xf32>
    %14 = tpu.matmul %1, %13, %cst {dimension_numbers = #tpu.dot_dimension_numbers<[1], [0], [0], [1], [0, 0, 1, 1], [], []>} : vector<40x4xf32>, vector<4x64xf32>, vector<40x64xf32> -> vector<40x64xf32>
    %c0_9 = arith.constant 0 : index
    %c0_10 = arith.constant 0 : index
    %15 = vector.load %arg13[%c0_9, %c0_10] : memref<1x64xf32, #tpu.memory_space<vmem>>, vector<1x64xf32>
    %16 = vector.broadcast %15 : vector<1x64xf32> to vector<40x64xf32>
    %17 = arith.addf %14, %16 : vector<40x64xf32>
    %cst_11 = arith.constant 0.000000e+00 : f32
    %18 = vector.broadcast %cst_11 : f32 to vector<40x64xf32>
    %19 = arith.maximumf %17, %18 : vector<40x64xf32>
    %c0_12 = arith.constant 0 : index
    %c0_13 = arith.constant 0 : index
    %20 = vector.load %arg6[%c0_12, %c0_13] : memref<4x8xf32, #tpu.memory_space<vmem>>, vector<4x8xf32>
    %c0_14 = arith.constant 0 : index
    %c0_15 = arith.constant 0 : index
    %21 = vector.load %arg7[%c0_14, %c0_15] : memref<8x8xf32, #tpu.memory_space<vmem>>, vector<8x8xf32>
    %c0_16 = arith.constant 0 : index
    %c0_17 = arith.constant 0 : index
    %22 = vector.load %arg8[%c0_16, %c0_17] : memref<4x8xf32, #tpu.memory_space<vmem>>, vector<4x8xf32>
    %cst_18 = arith.constant dense<0.000000e+00> : vector<40x8xf32>
    %23 = tpu.matmul %1, %20, %cst_18 {dimension_numbers = #tpu.dot_dimension_numbers<[1], [0], [0], [1], [0, 0, 1, 1], [], []>} : vector<40x4xf32>, vector<4x8xf32>, vector<40x8xf32> -> vector<40x8xf32>
    %24 = vector.extract_strided_slice %22 {offsets = [0, 0], sizes = [1, 8], strides = [1, 1]} : vector<4x8xf32> to vector<1x8xf32>
    %25 = vector.broadcast %24 : vector<1x8xf32> to vector<40x8xf32>
    %26 = arith.addf %23, %25 : vector<40x8xf32>
    %cst_19 = arith.constant 0.000000e+00 : f32
    %27 = vector.broadcast %cst_19 : f32 to vector<40x8xf32>
    %28 = arith.maximumf %26, %27 : vector<40x8xf32>
    %cst_20 = arith.constant dense<0.000000e+00> : vector<40x8xf32>
    %29 = tpu.matmul %28, %21, %cst_20 {dimension_numbers = #tpu.dot_dimension_numbers<[1], [0], [0], [1], [0, 0, 1, 1], [], []>} : vector<40x8xf32>, vector<8x8xf32>, vector<40x8xf32> -> vector<40x8xf32>
    %30 = vector.extract_strided_slice %22 {offsets = [1, 0], sizes = [1, 8], strides = [1, 1]} : vector<4x8xf32> to vector<1x8xf32>
    %31 = vector.broadcast %30 : vector<1x8xf32> to vector<40x8xf32>
    %32 = arith.addf %29, %31 : vector<40x8xf32>
    %cst_21 = arith.constant 0.000000e+00 : f32
    %33 = vector.broadcast %cst_21 : f32 to vector<40x8xf32>
    %34 = arith.maximumf %32, %33 : vector<40x8xf32>
    %35 = vector.extract_strided_slice %22 {offsets = [2, 0], sizes = [1, 8], strides = [1, 1]} : vector<4x8xf32> to vector<1x8xf32>
    %36 = vector.broadcast %35 : vector<1x8xf32> to vector<40x8xf32>
    %37 = arith.mulf %34, %36 : vector<40x8xf32>
    %38 = vector.extract_strided_slice %22 {offsets = [3, 0], sizes = [1, 8], strides = [1, 1]} : vector<4x8xf32> to vector<1x8xf32>
    %39 = vector.broadcast %38 : vector<1x8xf32> to vector<40x8xf32>
    %40 = arith.addf %37, %39 : vector<40x8xf32>
    %cst_22 = arith.constant dense<0.000000e+00> : vector<40x8xf32>
    %41 = tpu.matmul %7, %0, %cst_22 {dimension_numbers = #tpu.dot_dimension_numbers<[0], [0], [1], [1], [0, 1, 1, 1], [], []>, precision = #tpu.contract_precision<fp32>} : vector<16x40xf32>, vector<16x8xf32>, vector<40x8xf32> -> vector<40x8xf32>
    %42 = arith.addf %41, %40 : vector<40x8xf32>
    %cst_23 = arith.constant 0.000000e+00 : f32
    %43 = vector.broadcast %cst_23 : f32 to vector<40x8xf32>
    %44 = arith.maximumf %42, %43 : vector<40x8xf32>
    %cst_24 = arith.constant dense<0.000000e+00> : vector<16x8xf32>
    %45 = tpu.matmul %12, %44, %cst_24 {dimension_numbers = #tpu.dot_dimension_numbers<[1], [0], [0], [1], [0, 0, 1, 1], [], []>, precision = #tpu.contract_precision<fp32>} : vector<16x40xf32>, vector<40x8xf32>, vector<16x8xf32> -> vector<16x8xf32>
    %c0_25 = arith.constant 0 : index
    %46 = memref.load %arg5[%c0_25] : memref<3xf32, #tpu.memory_space<smem>>
    %47 = vector.broadcast %46 : f32 to vector<16x8xf32>
    %48 = arith.mulf %47, %0 : vector<16x8xf32>
    %49 = arith.addf %48, %45 : vector<16x8xf32>
    %c0_26 = arith.constant 0 : index
    %c0_27 = arith.constant 0 : index
    %50 = vector.load %arg9[%c0_26, %c0_27] : memref<8x32xf32, #tpu.memory_space<vmem>>, vector<8x32xf32>
    %c0_28 = arith.constant 0 : index
    %c0_29 = arith.constant 0 : index
    %51 = vector.load %arg10[%c0_28, %c0_29] : memref<32x32xf32, #tpu.memory_space<vmem>>, vector<32x32xf32>
    %c0_30 = arith.constant 0 : index
    %c0_31 = arith.constant 0 : index
    %52 = vector.load %arg11[%c0_30, %c0_31] : memref<4x32xf32, #tpu.memory_space<vmem>>, vector<4x32xf32>
    %cst_32 = arith.constant dense<0.000000e+00> : vector<16x32xf32>
    %53 = tpu.matmul %49, %50, %cst_32 {dimension_numbers = #tpu.dot_dimension_numbers<[1], [0], [0], [1], [0, 0, 1, 1], [], []>} : vector<16x8xf32>, vector<8x32xf32>, vector<16x32xf32> -> vector<16x32xf32>
    %54 = vector.extract_strided_slice %52 {offsets = [0, 0], sizes = [1, 32], strides = [1, 1]} : vector<4x32xf32> to vector<1x32xf32>
    %55 = vector.broadcast %54 : vector<1x32xf32> to vector<16x32xf32>
    %56 = arith.addf %53, %55 : vector<16x32xf32>
    %cst_33 = arith.constant 0.000000e+00 : f32
    %57 = vector.broadcast %cst_33 : f32 to vector<16x32xf32>
    %58 = arith.maximumf %56, %57 : vector<16x32xf32>
    %cst_34 = arith.constant dense<0.000000e+00> : vector<16x32xf32>
    %59 = tpu.matmul %58, %51, %cst_34 {dimension_numbers = #tpu.dot_dimension_numbers<[1], [0], [0], [1], [0, 0, 1, 1], [], []>} : vector<16x32xf32>, vector<32x32xf32>, vector<16x32xf32> -> vector<16x32xf32>
    %60 = vector.extract_strided_slice %52 {offsets = [1, 0], sizes = [1, 32], strides = [1, 1]} : vector<4x32xf32> to vector<1x32xf32>
    %61 = vector.broadcast %60 : vector<1x32xf32> to vector<16x32xf32>
    %62 = arith.addf %59, %61 : vector<16x32xf32>
    %cst_35 = arith.constant 0.000000e+00 : f32
    %63 = vector.broadcast %cst_35 : f32 to vector<16x32xf32>
    %64 = arith.maximumf %62, %63 : vector<16x32xf32>
    %65 = vector.extract_strided_slice %52 {offsets = [2, 0], sizes = [1, 32], strides = [1, 1]} : vector<4x32xf32> to vector<1x32xf32>
    %66 = vector.broadcast %65 : vector<1x32xf32> to vector<16x32xf32>
    %67 = arith.mulf %64, %66 : vector<16x32xf32>
    %68 = vector.extract_strided_slice %52 {offsets = [3, 0], sizes = [1, 32], strides = [1, 1]} : vector<4x32xf32> to vector<1x32xf32>
    %69 = vector.broadcast %68 : vector<1x32xf32> to vector<16x32xf32>
    %70 = arith.addf %67, %69 : vector<16x32xf32>
    %71 = vector.extract_strided_slice %19 {offsets = [0, 0], sizes = [40, 32], strides = [1, 1]} : vector<40x64xf32> to vector<40x32xf32>
    %c0_36 = arith.constant 0 : index
    %c0_37 = arith.constant 0 : index
    %c0_38 = arith.constant 0 : index
    %72 = vector.load %arg15[%c0_36, %c0_37, %c0_38] : memref<2x3x32xf32, #tpu.memory_space<vmem>>, vector<1x3x32xf32>
    %73 = vector.shape_cast %72 : vector<1x3x32xf32> to vector<3x32xf32>
    %c0_39 = arith.constant 0 : index
    %c0_40 = arith.constant 0 : index
    %c0_41 = arith.constant 0 : index
    %74 = vector.load %arg14[%c0_39, %c0_40, %c0_41] : memref<2x32x32xf32, #tpu.memory_space<vmem>>, vector<1x32x32xf32>
    %75 = vector.shape_cast %74 : vector<1x32x32xf32> to vector<32x32xf32>
    %cst_42 = arith.constant dense<0.000000e+00> : vector<40x32xf32>
    %76 = tpu.matmul %71, %75, %cst_42 {dimension_numbers = #tpu.dot_dimension_numbers<[1], [0], [0], [1], [0, 0, 1, 1], [], []>} : vector<40x32xf32>, vector<32x32xf32>, vector<40x32xf32> -> vector<40x32xf32>
    %77 = vector.extract_strided_slice %73 {offsets = [0, 0], sizes = [1, 32], strides = [1, 1]} : vector<3x32xf32> to vector<1x32xf32>
    %78 = vector.broadcast %77 : vector<1x32xf32> to vector<40x32xf32>
    %79 = arith.addf %76, %78 : vector<40x32xf32>
    %cst_43 = arith.constant 0.000000e+00 : f32
    %80 = vector.broadcast %cst_43 : f32 to vector<40x32xf32>
    %81 = arith.maximumf %79, %80 : vector<40x32xf32>
    %82 = vector.extract_strided_slice %73 {offsets = [1, 0], sizes = [1, 32], strides = [1, 1]} : vector<3x32xf32> to vector<1x32xf32>
    %83 = vector.broadcast %82 : vector<1x32xf32> to vector<40x32xf32>
    %84 = arith.mulf %81, %83 : vector<40x32xf32>
    %85 = vector.extract_strided_slice %73 {offsets = [2, 0], sizes = [1, 32], strides = [1, 1]} : vector<3x32xf32> to vector<1x32xf32>
    %86 = vector.broadcast %85 : vector<1x32xf32> to vector<40x32xf32>
    %87 = arith.addf %84, %86 : vector<40x32xf32>
    %cst_44 = arith.constant dense<0.000000e+00> : vector<40x32xf32>
    %88 = tpu.matmul %7, %70, %cst_44 {dimension_numbers = #tpu.dot_dimension_numbers<[0], [0], [1], [1], [0, 1, 1, 1], [], []>, precision = #tpu.contract_precision<fp32>} : vector<16x40xf32>, vector<16x32xf32>, vector<40x32xf32> -> vector<40x32xf32>
    %89 = arith.addf %88, %87 : vector<40x32xf32>
    %cst_45 = arith.constant 0.000000e+00 : f32
    %90 = vector.broadcast %cst_45 : f32 to vector<40x32xf32>
    %91 = arith.maximumf %89, %90 : vector<40x32xf32>
    %cst_46 = arith.constant dense<0.000000e+00> : vector<16x32xf32>
    %92 = tpu.matmul %12, %91, %cst_46 {dimension_numbers = #tpu.dot_dimension_numbers<[1], [0], [0], [1], [0, 0, 1, 1], [], []>, precision = #tpu.contract_precision<fp32>} : vector<16x40xf32>, vector<40x32xf32>, vector<16x32xf32> -> vector<16x32xf32>
    %c1 = arith.constant 1 : index
    %93 = memref.load %arg5[%c1] : memref<3xf32, #tpu.memory_space<smem>>
    %94 = vector.broadcast %93 : f32 to vector<16x32xf32>
    %95 = arith.mulf %94, %70 : vector<16x32xf32>
    %96 = arith.addf %95, %92 : vector<16x32xf32>
    %c0_47 = arith.constant 0 : index
    %c0_48 = arith.constant 0 : index
    %c0_49 = arith.constant 0 : index
    %97 = vector.load %arg16[%c0_47, %c0_48, %c0_49] : memref<2x32x32xf32, #tpu.memory_space<vmem>>, vector<1x32x32xf32>
    %98 = vector.shape_cast %97 : vector<1x32x32xf32> to vector<32x32xf32>
    %c0_50 = arith.constant 0 : index
    %c0_51 = arith.constant 0 : index
    %c0_52 = arith.constant 0 : index
    %99 = vector.load %arg17[%c0_50, %c0_51, %c0_52] : memref<2x32x32xf32, #tpu.memory_space<vmem>>, vector<1x32x32xf32>
    %100 = vector.shape_cast %99 : vector<1x32x32xf32> to vector<32x32xf32>
    %c0_53 = arith.constant 0 : index
    %c0_54 = arith.constant 0 : index
    %c0_55 = arith.constant 0 : index
    %101 = vector.load %arg18[%c0_53, %c0_54, %c0_55] : memref<2x4x32xf32, #tpu.memory_space<vmem>>, vector<1x4x32xf32>
    %102 = vector.shape_cast %101 : vector<1x4x32xf32> to vector<4x32xf32>
    %cst_56 = arith.constant dense<0.000000e+00> : vector<16x32xf32>
    %103 = tpu.matmul %96, %98, %cst_56 {dimension_numbers = #tpu.dot_dimension_numbers<[1], [0], [0], [1], [0, 0, 1, 1], [], []>} : vector<16x32xf32>, vector<32x32xf32>, vector<16x32xf32> -> vector<16x32xf32>
    %104 = vector.extract_strided_slice %102 {offsets = [0, 0], sizes = [1, 32], strides = [1, 1]} : vector<4x32xf32> to vector<1x32xf32>
    %105 = vector.broadcast %104 : vector<1x32xf32> to vector<16x32xf32>
    %106 = arith.addf %103, %105 : vector<16x32xf32>
    %cst_57 = arith.constant 0.000000e+00 : f32
    %107 = vector.broadcast %cst_57 : f32 to vector<16x32xf32>
    %108 = arith.maximumf %106, %107 : vector<16x32xf32>
    %cst_58 = arith.constant dense<0.000000e+00> : vector<16x32xf32>
    %109 = tpu.matmul %108, %100, %cst_58 {dimension_numbers = #tpu.dot_dimension_numbers<[1], [0], [0], [1], [0, 0, 1, 1], [], []>} : vector<16x32xf32>, vector<32x32xf32>, vector<16x32xf32> -> vector<16x32xf32>
    %110 = vector.extract_strided_slice %102 {offsets = [1, 0], sizes = [1, 32], strides = [1, 1]} : vector<4x32xf32> to vector<1x32xf32>
    %111 = vector.broadcast %110 : vector<1x32xf32> to vector<16x32xf32>
    %112 = arith.addf %109, %111 : vector<16x32xf32>
    %cst_59 = arith.constant 0.000000e+00 : f32
    %113 = vector.broadcast %cst_59 : f32 to vector<16x32xf32>
    %114 = arith.maximumf %112, %113 : vector<16x32xf32>
    %115 = vector.extract_strided_slice %102 {offsets = [2, 0], sizes = [1, 32], strides = [1, 1]} : vector<4x32xf32> to vector<1x32xf32>
    %116 = vector.broadcast %115 : vector<1x32xf32> to vector<16x32xf32>
    %117 = arith.mulf %114, %116 : vector<16x32xf32>
    %118 = vector.extract_strided_slice %102 {offsets = [3, 0], sizes = [1, 32], strides = [1, 1]} : vector<4x32xf32> to vector<1x32xf32>
    %119 = vector.broadcast %118 : vector<1x32xf32> to vector<16x32xf32>
    %120 = arith.addf %117, %119 : vector<16x32xf32>
    %121 = vector.extract_strided_slice %19 {offsets = [0, 32], sizes = [40, 32], strides = [1, 1]} : vector<40x64xf32> to vector<40x32xf32>
    %c1_60 = arith.constant 1 : index
    %c0_61 = arith.constant 0 : index
    %c0_62 = arith.constant 0 : index
    %122 = vector.load %arg15[%c1_60, %c0_61, %c0_62] : memref<2x3x32xf32, #tpu.memory_space<vmem>>, vector<1x3x32xf32>
    %123 = vector.shape_cast %122 : vector<1x3x32xf32> to vector<3x32xf32>
    %c1_63 = arith.constant 1 : index
    %c0_64 = arith.constant 0 : index
    %c0_65 = arith.constant 0 : index
    %124 = vector.load %arg14[%c1_63, %c0_64, %c0_65] : memref<2x32x32xf32, #tpu.memory_space<vmem>>, vector<1x32x32xf32>
    %125 = vector.shape_cast %124 : vector<1x32x32xf32> to vector<32x32xf32>
    %cst_66 = arith.constant dense<0.000000e+00> : vector<40x32xf32>
    %126 = tpu.matmul %121, %125, %cst_66 {dimension_numbers = #tpu.dot_dimension_numbers<[1], [0], [0], [1], [0, 0, 1, 1], [], []>} : vector<40x32xf32>, vector<32x32xf32>, vector<40x32xf32> -> vector<40x32xf32>
    %127 = vector.extract_strided_slice %123 {offsets = [0, 0], sizes = [1, 32], strides = [1, 1]} : vector<3x32xf32> to vector<1x32xf32>
    %128 = vector.broadcast %127 : vector<1x32xf32> to vector<40x32xf32>
    %129 = arith.addf %126, %128 : vector<40x32xf32>
    %cst_67 = arith.constant 0.000000e+00 : f32
    %130 = vector.broadcast %cst_67 : f32 to vector<40x32xf32>
    %131 = arith.maximumf %129, %130 : vector<40x32xf32>
    %132 = vector.extract_strided_slice %123 {offsets = [1, 0], sizes = [1, 32], strides = [1, 1]} : vector<3x32xf32> to vector<1x32xf32>
    %133 = vector.broadcast %132 : vector<1x32xf32> to vector<40x32xf32>
    %134 = arith.mulf %131, %133 : vector<40x32xf32>
    %135 = vector.extract_strided_slice %123 {offsets = [2, 0], sizes = [1, 32], strides = [1, 1]} : vector<3x32xf32> to vector<1x32xf32>
    %136 = vector.broadcast %135 : vector<1x32xf32> to vector<40x32xf32>
    %137 = arith.addf %134, %136 : vector<40x32xf32>
    %cst_68 = arith.constant dense<0.000000e+00> : vector<40x32xf32>
    %138 = tpu.matmul %7, %120, %cst_68 {dimension_numbers = #tpu.dot_dimension_numbers<[0], [0], [1], [1], [0, 1, 1, 1], [], []>, precision = #tpu.contract_precision<fp32>} : vector<16x40xf32>, vector<16x32xf32>, vector<40x32xf32> -> vector<40x32xf32>
    %139 = arith.addf %138, %137 : vector<40x32xf32>
    %cst_69 = arith.constant 0.000000e+00 : f32
    %140 = vector.broadcast %cst_69 : f32 to vector<40x32xf32>
    %141 = arith.maximumf %139, %140 : vector<40x32xf32>
    %cst_70 = arith.constant dense<0.000000e+00> : vector<16x32xf32>
    %142 = tpu.matmul %12, %141, %cst_70 {dimension_numbers = #tpu.dot_dimension_numbers<[1], [0], [0], [1], [0, 0, 1, 1], [], []>, precision = #tpu.contract_precision<fp32>} : vector<16x40xf32>, vector<40x32xf32>, vector<16x32xf32> -> vector<16x32xf32>
    %c2 = arith.constant 2 : index
    %143 = memref.load %arg5[%c2] : memref<3xf32, #tpu.memory_space<smem>>
    %144 = vector.broadcast %143 : f32 to vector<16x32xf32>
    %145 = arith.mulf %144, %120 : vector<16x32xf32>
    %146 = arith.addf %145, %142 : vector<16x32xf32>
    %c1_71 = arith.constant 1 : index
    %c0_72 = arith.constant 0 : index
    %c0_73 = arith.constant 0 : index
    %147 = vector.load %arg16[%c1_71, %c0_72, %c0_73] : memref<2x32x32xf32, #tpu.memory_space<vmem>>, vector<1x32x32xf32>
    %148 = vector.shape_cast %147 : vector<1x32x32xf32> to vector<32x32xf32>
    %c1_74 = arith.constant 1 : index
    %c0_75 = arith.constant 0 : index
    %c0_76 = arith.constant 0 : index
    %149 = vector.load %arg17[%c1_74, %c0_75, %c0_76] : memref<2x32x32xf32, #tpu.memory_space<vmem>>, vector<1x32x32xf32>
    %150 = vector.shape_cast %149 : vector<1x32x32xf32> to vector<32x32xf32>
    %c1_77 = arith.constant 1 : index
    %c0_78 = arith.constant 0 : index
    %c0_79 = arith.constant 0 : index
    %151 = vector.load %arg18[%c1_77, %c0_78, %c0_79] : memref<2x4x32xf32, #tpu.memory_space<vmem>>, vector<1x4x32xf32>
    %152 = vector.shape_cast %151 : vector<1x4x32xf32> to vector<4x32xf32>
    %cst_80 = arith.constant dense<0.000000e+00> : vector<16x32xf32>
    %153 = tpu.matmul %146, %148, %cst_80 {dimension_numbers = #tpu.dot_dimension_numbers<[1], [0], [0], [1], [0, 0, 1, 1], [], []>} : vector<16x32xf32>, vector<32x32xf32>, vector<16x32xf32> -> vector<16x32xf32>
    %154 = vector.extract_strided_slice %152 {offsets = [0, 0], sizes = [1, 32], strides = [1, 1]} : vector<4x32xf32> to vector<1x32xf32>
    %155 = vector.broadcast %154 : vector<1x32xf32> to vector<16x32xf32>
    %156 = arith.addf %153, %155 : vector<16x32xf32>
    %cst_81 = arith.constant 0.000000e+00 : f32
    %157 = vector.broadcast %cst_81 : f32 to vector<16x32xf32>
    %158 = arith.maximumf %156, %157 : vector<16x32xf32>
    %cst_82 = arith.constant dense<0.000000e+00> : vector<16x32xf32>
    %159 = tpu.matmul %158, %150, %cst_82 {dimension_numbers = #tpu.dot_dimension_numbers<[1], [0], [0], [1], [0, 0, 1, 1], [], []>} : vector<16x32xf32>, vector<32x32xf32>, vector<16x32xf32> -> vector<16x32xf32>
    %160 = vector.extract_strided_slice %152 {offsets = [1, 0], sizes = [1, 32], strides = [1, 1]} : vector<4x32xf32> to vector<1x32xf32>
    %161 = vector.broadcast %160 : vector<1x32xf32> to vector<16x32xf32>
    %162 = arith.addf %159, %161 : vector<16x32xf32>
    %cst_83 = arith.constant 0.000000e+00 : f32
    %163 = vector.broadcast %cst_83 : f32 to vector<16x32xf32>
    %164 = arith.maximumf %162, %163 : vector<16x32xf32>
    %165 = vector.extract_strided_slice %152 {offsets = [2, 0], sizes = [1, 32], strides = [1, 1]} : vector<4x32xf32> to vector<1x32xf32>
    %166 = vector.broadcast %165 : vector<1x32xf32> to vector<16x32xf32>
    %167 = arith.mulf %164, %166 : vector<16x32xf32>
    %168 = vector.extract_strided_slice %152 {offsets = [3, 0], sizes = [1, 32], strides = [1, 1]} : vector<4x32xf32> to vector<1x32xf32>
    %169 = vector.broadcast %168 : vector<1x32xf32> to vector<16x32xf32>
    %170 = arith.addf %167, %169 : vector<16x32xf32>
    %171 = tpu.iota {dimensions = array<i32: 0>} : vector<2x16xi32>
    %c0_84 = arith.constant 0 : index
    %c0_85 = arith.constant 0 : index
    %172 = vector.load %arg4[%c0_84, %c0_85] : memref<1x16xi32, #tpu.memory_space<vmem>>, vector<1x16xi32>
    %173 = vector.broadcast %172 : vector<1x16xi32> to vector<2x16xi32>
    %174 = arith.cmpi eq, %171, %173 : vector<2x16xi32>
    %175 = arith.extui %174 : vector<2x16xi1> to vector<2x16xi32>
    %176 = arith.sitofp %175 : vector<2x16xi32> to vector<2x16xf32>
    %cst_86 = arith.constant dense<0.000000e+00> : vector<2xf32>
    %177 = vector.multi_reduction <add>, %176, %cst_86 [1] : vector<2x16xf32> to vector<2xf32>
    %178 = vector.shape_cast %177 : vector<2xf32> to vector<2x1xf32>
    %cst_87 = arith.constant 1.000000e+00 : f32
    %179 = vector.broadcast %cst_87 : f32 to vector<2x1xf32>
    %180 = arith.maximumf %178, %179 : vector<2x1xf32>
    %cst_88 = arith.constant dense<0.000000e+00> : vector<2x32xf32>
    %181 = tpu.matmul %176, %170, %cst_88 {dimension_numbers = #tpu.dot_dimension_numbers<[1], [0], [0], [1], [0, 0, 1, 1], [], []>, precision = #tpu.contract_precision<fp32>} : vector<2x16xf32>, vector<16x32xf32>, vector<2x32xf32> -> vector<2x32xf32>
    %182 = tpu.reciprocal %180 {approx = true} : vector<2x1xf32> -> vector<2x1xf32>
    %183 = vector.broadcast %182 : vector<2x1xf32> to vector<2x32xf32>
    %184 = arith.mulf %181, %183 : vector<2x32xf32>
    %c0_89 = arith.constant 0 : index
    %c0_90 = arith.constant 0 : index
    %185 = vector.load %arg21[%c0_89, %c0_90] : memref<2x32xf32, #tpu.memory_space<vmem>>, vector<2x32xf32>
    %c0_91 = arith.constant 0 : index
    %c0_92 = arith.constant 0 : index
    %186 = vector.load %arg19[%c0_91, %c0_92] : memref<32x32xf32, #tpu.memory_space<vmem>>, vector<32x32xf32>
    %cst_93 = arith.constant dense<0.000000e+00> : vector<2x32xf32>
    %187 = tpu.matmul %184, %186, %cst_93 {dimension_numbers = #tpu.dot_dimension_numbers<[1], [0], [0], [1], [0, 0, 1, 1], [], []>} : vector<2x32xf32>, vector<32x32xf32>, vector<2x32xf32> -> vector<2x32xf32>
    %188 = vector.extract_strided_slice %185 {offsets = [0, 0], sizes = [1, 32], strides = [1, 1]} : vector<2x32xf32> to vector<1x32xf32>
    %189 = vector.broadcast %188 : vector<1x32xf32> to vector<2x32xf32>
    %190 = arith.addf %187, %189 : vector<2x32xf32>
    %cst_94 = arith.constant 0.000000e+00 : f32
    %191 = vector.broadcast %cst_94 : f32 to vector<2x32xf32>
    %192 = arith.maximumf %190, %191 : vector<2x32xf32>
    %c0_95 = arith.constant 0 : index
    %c0_96 = arith.constant 0 : index
    %193 = vector.load %arg20[%c0_95, %c0_96] : memref<32x3xf32, #tpu.memory_space<vmem>>, vector<32x3xf32>
    %cst_97 = arith.constant dense<0.000000e+00> : vector<2x3xf32>
    %194 = tpu.matmul %192, %193, %cst_97 {dimension_numbers = #tpu.dot_dimension_numbers<[1], [0], [0], [1], [0, 0, 1, 1], [], []>} : vector<2x32xf32>, vector<32x3xf32>, vector<2x3xf32> -> vector<2x3xf32>
    %195 = vector.extract_strided_slice %185 {offsets = [1, 0], sizes = [1, 3], strides = [1, 1]} : vector<2x32xf32> to vector<1x3xf32>
    %196 = vector.broadcast %195 : vector<1x3xf32> to vector<2x3xf32>
    %197 = arith.addf %194, %196 : vector<2x3xf32>
    %cst_98 = arith.constant dense<0xFF800000> : vector<2xf32>
    %198 = vector.multi_reduction <maximumf>, %197, %cst_98 [1] : vector<2x3xf32> to vector<2xf32>
    %199 = vector.shape_cast %198 : vector<2xf32> to vector<2x1xf32>
    %200 = vector.broadcast %199 : vector<2x1xf32> to vector<2x3xf32>
    %201 = arith.subf %197, %200 : vector<2x3xf32>
    %202 = math.exp %201 : vector<2x3xf32>
    %cst_99 = arith.constant dense<0.000000e+00> : vector<2xf32>
    %203 = vector.multi_reduction <add>, %202, %cst_99 [1] : vector<2x3xf32> to vector<2xf32>
    %204 = vector.shape_cast %203 : vector<2xf32> to vector<2x1xf32>
    %205 = math.log %204 : vector<2x1xf32>
    %206 = vector.broadcast %205 : vector<2x1xf32> to vector<2x3xf32>
    %207 = arith.subf %201, %206 : vector<2x3xf32>
    %c0_100 = arith.constant 0 : index
    %c0_101 = arith.constant 0 : index
    %208 = vector.load %arg22[%c0_100, %c0_101] : memref<2x3xf32, #tpu.memory_space<vmem>>, vector<2x3xf32>
    tpu.vector_store %arg22[%c0_100, %c0_101], %207 {strides = array<i32>} : memref<2x3xf32, #tpu.memory_space<vmem>>, vector<2x3xf32>,
    return
  }
}

</mosaic_0001>

<llo_original>
// kernel: gine_forward.1
$region0: #{gine_forward.1}
  #allocation0 [shape = 'u32[]', space=smem, size = 0x4, offset = 0x4, fixed_abs, tag = 'smem constant byte address 0x4 - core index']
  #allocation1 [shape = 'u32[144,128]{1,0:T(1,128)}', space=vmem, size = 0x12000, scoped, tag = 'internal scratch']
  %s0 = inlined_call_operand.vmem [shape: f32[16,8], index: 0, kind: input, shape index: {}]
  %s1 = inlined_call_operand.vmem [shape: f32[40,4], index: 1, kind: input, shape index: {}]
  %s2 = inlined_call_operand.vmem [shape: s32[1,40], index: 2, kind: input, shape index: {}]
  %s3 = inlined_call_operand.vmem [shape: s32[1,40], index: 3, kind: input, shape index: {}]
  %s4 = inlined_call_operand.vmem [shape: s32[1,16], index: 4, kind: input, shape index: {}]
  %s5 = inlined_call_operand.hbm [shape: f32[3], index: 5, kind: input, shape index: {}]
  %s6 = inlined_call_operand.hbm [shape: f32[4,8], index: 6, kind: input, shape index: {}]
  %s7 = inlined_call_operand.hbm [shape: f32[8,8], index: 7, kind: input, shape index: {}]
  %s8 = inlined_call_operand.hbm [shape: f32[4,8], index: 8, kind: input, shape index: {}]
  %s9 = inlined_call_operand.hbm [shape: f32[8,32], index: 9, kind: input, shape index: {}]
  %s10 = inlined_call_operand.hbm [shape: f32[32,32], index: 10, kind: input, shape index: {}]
  %s11 = inlined_call_operand.hbm [shape: f32[4,32], index: 11, kind: input, shape index: {}]
  %s12 = inlined_call_operand.vmem [shape: f32[4,64], index: 12, kind: input, shape index: {}]
  %s13 = inlined_call_operand.hbm [shape: f32[1,64], index: 13, kind: input, shape index: {}]
  %s14 = inlined_call_operand.vmem [shape: f32[2,32,32], index: 14, kind: input, shape index: {}]
  %s15 = inlined_call_operand.vmem [shape: f32[2,3,32], index: 15, kind: input, shape index: {}]
  %s16 = inlined_call_operand.vmem [shape: f32[2,32,32], index: 16, kind: input, shape index: {}]
  %s17 = inlined_call_operand.hbm [shape: f32[2,32,32], index: 17, kind: input, shape index: {}]
  %s18 = inlined_call_operand.vmem [shape: f32[2,4,32], index: 18, kind: input, shape index: {}]
  %s19 = inlined_call_operand.hbm [shape: f32[32,32], index: 19, kind: input, shape index: {}]
  %s20 = inlined_call_operand.vmem [shape: f32[32,3], index: 20, kind: input, shape index: {}]
  %s21 = inlined_call_operand.hbm [shape: f32[2,32], index: 21, kind: input, shape index: {}]
  %s22 = inlined_call_operand.hbm [shape: f32[2,3], index: 22, kind: output, shape index: {}]
  %s23 = sld [smem:[#allocation0]]
  $region142: #{gine_forward.1} parent=0
    _
  %s25 = ssub.s32 1, %s23
  %s26 = scalar_select 0, %s25, %s23
  $region1: #{gine_forward.1} parent=0
    #allocation2 [shape = 'u8[512]{0}', space=smem, size = 0x200, scoped, tag = 'input window, operand 5, single buffered']
    #allocation3 [shape = 's32[1]{0}', space=sflag, size = 0x4, scoped, tag = 'scoped memory for gine_forward.1']
    #allocation4 [shape = 's32[1]{0}', space=sflag, size = 0x4, scoped, tag = 'scoped memory for gine_forward.1']
    #allocation5 [shape = 's32[1]{0}', space=sflag, size = 0x4, scoped, tag = 'scoped memory for gine_forward.1']
    #allocation6 [shape = 'u8[2048]{0}', space=vmem, size = 0x800, scoped, tag = 'input window, operand 6, single buffered']
    #allocation7 [shape = 'u8[4096]{0}', space=vmem, size = 0x1000, scoped, tag = 'input window, operand 7, single buffered']
    #allocation8 [shape = 's32[1]{0}', space=sflag, size = 0x4, scoped, tag = 'scoped memory for gine_forward.1']
    #allocation9 [shape = 'u8[2048]{0}', space=vmem, size = 0x800, scoped, tag = 'input window, operand 8, single buffered']
    #allocation10 [shape = 'u8[4096]{0}', space=vmem, size = 0x1000, scoped, tag = 'input window, operand 9, single buffered']
    #allocation11 [shape = 's32[1]{0}', space=sflag, size = 0x4, scoped, tag = 'scoped memory for gine_forward.1']
    #allocation12 [shape = 'u8[16384]{0}', space=vmem, size = 0x4000, scoped, tag = 'input window, operand 10, single buffered']
    #allocation13 [shape = 'u8[2048]{0}', space=vmem, size = 0x800, scoped, tag = 'input window, operand 11, single buffered']
    #allocation14 [shape = 's32[1]{0}', space=sflag, size = 0x4, scoped, tag = 'scoped memory for gine_forward.1']
    #allocation15 [shape = 'u8[512]{0}', space=vmem, size = 0x400, scoped, tag = 'input window, operand 13, single buffered']
    #allocation16 [shape = 'u8[32768]{0}', space=vmem, size = 0x8000, scoped, tag = 'input window, operand 17, single buffered']
    #allocation17 [shape = 's32[1]{0}', space=sflag, size = 0x4, scoped, tag = 'scoped memory for gine_forward.1']
    #allocation18 [shape = 'u8[16384]{0}', space=vmem, size = 0x4000, scoped, tag = 'input window, operand 19, single buffered']
    #allocation19 [shape = 'u8[1024]{0}', space=vmem, size = 0x400, scoped, tag = 'input window, operand 21, single buffered']
    #allocation20 [shape = 's32[1]{0}', space=sflag, size = 0x4, scoped, tag = 'scoped memory for gine_forward.1']
    #allocation21 [shape = 'u8[1024]{0}', space=vmem, size = 0x400, scoped, tag = 'output window, operand 0, single buffered']
    %27 = vsyncpa [#allocation5], 0
    %28 = vsyncpa [#allocation3], 0
    %29 = vsyncpa [#allocation8], 0
    %30 = vsyncpa [#allocation11], 0
    %31 = vsyncpa [#allocation14], 0
    %32 = vsyncpa [#allocation17], 0
    %33 = vsyncpa [#allocation20], 0
    %34 = vsyncpa [#allocation4], 0
    // Predicated region
    $region2: #{gine_forward.1} parent=1 // pred_check
      _
    $region3: #{gine_forward.1} parent=1 // pred_check_branch
      %36 = sbr.rel (0) target = $region5
    $region4: #{gine_forward.1} parent=1 // pred_region
      _
    $region5: #{gine_forward.1} parent=1 // pred_fallthru
      _
    // Predicated region
    $region6: #{gine_forward.1} parent=1 // pred_check
      _
    $region7: #{gine_forward.1} parent=1 // pred_check_branch
      %38 = sbr.rel (0) target = $region9
    $region8: #{gine_forward.1} parent=1 // pred_region
      _
    $region9: #{gine_forward.1} parent=1 // pred_fallthru
      _
    // Predicated region
    $region10: #{gine_forward.1} parent=1 // pred_check
      _
    $region11: #{gine_forward.1} parent=1 // pred_check_branch
      %40 = sbr.rel (0) target = $region13
    $region12: #{gine_forward.1} parent=1 // pred_region
      _
    $region13: #{gine_forward.1} parent=1 // pred_fallthru
      _
    // Predicated region
    $region14: #{gine_forward.1} parent=1 // pred_check
      _
    $region15: #{gine_forward.1} parent=1 // pred_check_branch
      %42 = sbr.rel (0) target = $region17
    $region16: #{gine_forward.1} parent=1 // pred_region
      _
    $region17: #{gine_forward.1} parent=1 // pred_fallthru
      _
    // Predicated region
    $region18: #{gine_forward.1} parent=1 // pred_check
      _
    $region19: #{gine_forward.1} parent=1 // pred_check_branch
      %44 = sbr.rel (0) target = $region21
    $region20: #{gine_forward.1} parent=1 // pred_region
      _
    $region21: #{gine_forward.1} parent=1 // pred_fallthru
      _
    // Predicated region
    $region22: #{gine_forward.1} parent=1 // pred_check
      _
    $region23: #{gine_forward.1} parent=1 // pred_check_branch
      %46 = sbr.rel (0) target = $region25
    $region24: #{gine_forward.1} parent=1 // pred_region
      %s48 = ssub.s32 16, 16
      %49 = vsyncadd [#allocation5], %s48
      %52 = dma.hbm_to_smem %s5, 16, [#allocation2], [#allocation5]
    $region25: #{gine_forward.1} parent=1 // pred_fallthru
      _
    // Predicated region
    $region26: #{gine_forward.1} parent=1 // pred_check
      _
    $region27: #{gine_forward.1} parent=1 // pred_check_branch
      %54 = sbr.rel (0) target = $region29
    $region28: #{gine_forward.1} parent=1 // pred_region
      %s56 = ssub.s32 64, 64
      %57 = vsyncadd [#allocation3], %s56
      %s59 = sshll.u32 [#allocation6], 4
      %s60 = int_to_ptr.vmem [resolvable:$true] %s59
      %62 = dma.hbm_to_vmem [thread:$0]  %s6, 64, %s60, [#allocation3]
    $region29: #{gine_forward.1} parent=1 // pred_fallthru
      _
    // Predicated region
    $region30: #{gine_forward.1} parent=1 // pred_check
      _
    $region31: #{gine_forward.1} parent=1 // pred_check_branch
      %64 = sbr.rel (0) target = $region33
    $region32: #{gine_forward.1} parent=1 // pred_region
      %s66 = ssub.s32 128, 128
      %67 = vsyncadd [#allocation8], %s66
      %s69 = sshll.u32 [#allocation7], 4
      %s70 = int_to_ptr.vmem [resolvable:$true] %s69
      %72 = dma.hbm_to_vmem [thread:$0]  %s7, 128, %s70, [#allocation8]
    $region33: #{gine_forward.1} parent=1 // pred_fallthru
      _
    // Predicated region
    $region34: #{gine_forward.1} parent=1 // pred_check
      _
    $region35: #{gine_forward.1} parent=1 // pred_check_branch
      %74 = sbr.rel (0) target = $region37
    $region36: #{gine_forward.1} parent=1 // pred_region
      %s76 = ssub.s32 64, 64
      %77 = vsyncadd [#allocation8], %s76
      %s79 = sshll.u32 [#allocation9], 4
      %s80 = int_to_ptr.vmem [resolvable:$true] %s79
      %82 = dma.hbm_to_vmem [thread:$0]  %s8, 64, %s80, [#allocation8]
    $region37: #{gine_forward.1} parent=1 // pred_fallthru
      _
    // Predicated region
    $region38: #{gine_forward.1} parent=1 // pred_check
      _
    $region39: #{gine_forward.1} parent=1 // pred_check_branch
      %84 = sbr.rel (0) target = $region41
    $region40: #{gine_forward.1} parent=1 // pred_region
      %s86 = ssub.s32 128, 128
      %87 = vsyncadd [#allocation11], %s86
      %s89 = sshll.u32 [#allocation10], 4
      %s90 = int_to_ptr.vmem [resolvable:$true] %s89
      %92 = dma.hbm_to_vmem [thread:$0]  %s9, 128, %s90, [#allocation11]
    $region41: #{gine_forward.1} parent=1 // pred_fallthru
      _
    // Predicated region
    $region42: #{gine_forward.1} parent=1 // pred_check
      _
    $region43: #{gine_forward.1} parent=1 // pred_check_branch
      %94 = sbr.rel (0) target = $region45
    $region44: #{gine_forward.1} parent=1 // pred_region
      %s96 = ssub.s32 512, 512
      %97 = vsyncadd [#allocation11], %s96
      %s98 = sshll.u32 [#allocation12], 4
      %s99 = int_to_ptr.vmem [resolvable:$true] %s98
      %104 = dma.hbm_to_vmem [thread:$0]  %s10, 512, %s99, [#allocation11], 128, 128, 8
    $region45: #{gine_forward.1} parent=1 // pred_fallthru
      _
    // Predicated region
    $region46: #{gine_forward.1} parent=1 // pred_check
      _
    $region47: #{gine_forward.1} parent=1 // pred_check_branch
      %106 = sbr.rel (0) target = $region49
    $region48: #{gine_forward.1} parent=1 // pred_region
      %s108 = ssub.s32 64, 64
      %109 = vsyncadd [#allocation14], %s108
      %s111 = sshll.u32 [#allocation13], 4
      %s112 = int_to_ptr.vmem [resolvable:$true] %s111
      %114 = dma.hbm_to_vmem [thread:$0]  %s11, 64, %s112, [#allocation14]
    $region49: #{gine_forward.1} parent=1 // pred_fallthru
      _
    // Predicated region
    $region50: #{gine_forward.1} parent=1 // pred_check
      _
    $region51: #{gine_forward.1} parent=1 // pred_check_branch
      %116 = sbr.rel (0) target = $region53
    $region52: #{gine_forward.1} parent=1 // pred_region
      _
    $region53: #{gine_forward.1} parent=1 // pred_fallthru
      _
    // Predicated region
    $region54: #{gine_forward.1} parent=1 // pred_check
      _
    $region55: #{gine_forward.1} parent=1 // pred_check_branch
      %118 = sbr.rel (0) target = $region57
    $region56: #{gine_forward.1} parent=1 // pred_region
      %s120 = ssub.s32 16, 16
      %121 = vsyncadd [#allocation14], %s120
      %s123 = sshll.u32 [#allocation15], 4
      %s124 = int_to_ptr.vmem [resolvable:$true] %s123
      %126 = dma.hbm_to_vmem [thread:$0]  %s13, 16, %s124, [#allocation14]
    $region57: #{gine_forward.1} parent=1 // pred_fallthru
      _
    // Predicated region
    $region58: #{gine_forward.1} parent=1 // pred_check
      _
    $region59: #{gine_forward.1} parent=1 // pred_check_branch
      %128 = sbr.rel (0) target = $region61
    $region60: #{gine_forward.1} parent=1 // pred_region
      _
    $region61: #{gine_forward.1} parent=1 // pred_fallthru
      _
    // Predicated region
    $region62: #{gine_forward.1} parent=1 // pred_check
      _
    $region63: #{gine_forward.1} parent=1 // pred_check_branch
      %130 = sbr.rel (0) target = $region65
    $region64: #{gine_forward.1} parent=1 // pred_region
      _
    $region65: #{gine_forward.1} parent=1 // pred_fallthru
      _
    // Predicated region
    $region66: #{gine_forward.1} parent=1 // pred_check
      _
    $region67: #{gine_forward.1} parent=1 // pred_check_branch
      %132 = sbr.rel (0) target = $region69
    $region68: #{gine_forward.1} parent=1 // pred_region
      _
    $region69: #{gine_forward.1} parent=1 // pred_fallthru
      _
    // Predicated region
    $region70: #{gine_forward.1} parent=1 // pred_check
      _
    $region71: #{gine_forward.1} parent=1 // pred_check_branch
      %134 = sbr.rel (0) target = $region73
    $region72: #{gine_forward.1} parent=1 // pred_region
      %s136 = ssub.s32 1024, 1024
      %137 = vsyncadd [#allocation17], %s136
      %s138 = sshll.u32 [#allocation16], 4
      %s139 = int_to_ptr.vmem [resolvable:$true] %s138
      %144 = dma.hbm_to_vmem [thread:$0]  %s17, 1024, %s139, [#allocation17], 128, 128, 8
    $region73: #{gine_forward.1} parent=1 // pred_fallthru
      _
    // Predicated region
    $region74: #{gine_forward.1} parent=1 // pred_check
      _
    $region75: #{gine_forward.1} parent=1 // pred_check_branch
      %146 = sbr.rel (0) target = $region77
    $region76: #{gine_forward.1} parent=1 // pred_region
      _
    $region77: #{gine_forward.1} parent=1 // pred_fallthru
      _
    // Predicated region
    $region78: #{gine_forward.1} parent=1 // pred_check
      _
    $region79: #{gine_forward.1} parent=1 // pred_check_branch
      %148 = sbr.rel (0) target = $region81
    $region80: #{gine_forward.1} parent=1 // pred_region
      %s150 = ssub.s32 512, 512
      %151 = vsyncadd [#allocation17], %s150
      %s152 = sshll.u32 [#allocation18], 4
      %s153 = int_to_ptr.vmem [resolvable:$true] %s152
      %158 = dma.hbm_to_vmem [thread:$0]  %s19, 512, %s153, [#allocation17], 128, 128, 8
    $region81: #{gine_forward.1} parent=1 // pred_fallthru
      _
    // Predicated region
    $region82: #{gine_forward.1} parent=1 // pred_check
      _
    $region83: #{gine_forward.1} parent=1 // pred_check_branch
      %160 = sbr.rel (0) target = $region85
    $region84: #{gine_forward.1} parent=1 // pred_region
      _
    $region85: #{gine_forward.1} parent=1 // pred_fallthru
      _
    // Predicated region
    $region86: #{gine_forward.1} parent=1 // pred_check
      _
    $region87: #{gine_forward.1} parent=1 // pred_check_branch
      %162 = sbr.rel (0) target = $region89
    $region88: #{gine_forward.1} parent=1 // pred_region
      %s164 = ssub.s32 32, 32
      %165 = vsyncadd [#allocation20], %s164
      %s167 = sshll.u32 [#allocation19], 4
      %s168 = int_to_ptr.vmem [resolvable:$true] %s167
      %170 = dma.hbm_to_vmem [thread:$0]  %s21, 32, %s168, [#allocation20]
    $region89: #{gine_forward.1} parent=1 // pred_fallthru
      _
    // Predicated region
    $region90: #{gine_forward.1} parent=1 // pred_check
      _
    $region91: #{gine_forward.1} parent=1 // pred_check_branch
      %172 = sbr.rel (0) target = $region93
    $region92: #{gine_forward.1} parent=1 // pred_region
      %173 = dma.done [#allocation5], 16
    $region93: #{gine_forward.1} parent=1 // pred_fallthru
      _
    // Predicated region
    $region94: #{gine_forward.1} parent=1 // pred_check
      _
    $region95: #{gine_forward.1} parent=1 // pred_check_branch
      %175 = sbr.rel (0) target = $region97
    $region96: #{gine_forward.1} parent=1 // pred_region
      %176 = dma.done [#allocation3], 64
    $region97: #{gine_forward.1} parent=1 // pred_fallthru
      _
    // Predicated region
    $region98: #{gine_forward.1} parent=1 // pred_check
      _
    $region99: #{gine_forward.1} parent=1 // pred_check_branch
      %178 = sbr.rel (0) target = $region101
    $region100: #{gine_forward.1} parent=1 // pred_region
      %179 = dma.done [#allocation8], 128
    $region101: #{gine_forward.1} parent=1 // pred_fallthru
      _
    // Predicated region
    $region102: #{gine_forward.1} parent=1 // pred_check
      _
    $region103: #{gine_forward.1} parent=1 // pred_check_branch
      %181 = sbr.rel (0) target = $region105
    $region104: #{gine_forward.1} parent=1 // pred_region
      %182 = dma.done [#allocation8], 64
    $region105: #{gine_forward.1} parent=1 // pred_fallthru
      _
    // Predicated region
    $region106: #{gine_forward.1} parent=1 // pred_check
      _
    $region107: #{gine_forward.1} parent=1 // pred_check_branch
      %184 = sbr.rel (0) target = $region109
    $region108: #{gine_forward.1} parent=1 // pred_region
      %185 = dma.done [#allocation11], 128
    $region109: #{gine_forward.1} parent=1 // pred_fallthru
      _
    // Predicated region
    $region110: #{gine_forward.1} parent=1 // pred_check
      _
    $region111: #{gine_forward.1} parent=1 // pred_check_branch
      %187 = sbr.rel (0) target = $region113
    $region112: #{gine_forward.1} parent=1 // pred_region
      %188 = dma.done [#allocation11], 512
    $region113: #{gine_forward.1} parent=1 // pred_fallthru
      _
    // Predicated region
    $region114: #{gine_forward.1} parent=1 // pred_check
      _
    $region115: #{gine_forward.1} parent=1 // pred_check_branch
      %190 = sbr.rel (0) target = $region117
    $region116: #{gine_forward.1} parent=1 // pred_region
      %191 = dma.done [#allocation14], 64
    $region117: #{gine_forward.1} parent=1 // pred_fallthru
      _
    // Predicated region
    $region118: #{gine_forward.1} parent=1 // pred_check
      _
    $region119: #{gine_forward.1} parent=1 // pred_check_branch
      %193 = sbr.rel (0) target = $region121
    $region120: #{gine_forward.1} parent=1 // pred_region
      %194 = dma.done [#allocation14], 16
    $region121: #{gine_forward.1} parent=1 // pred_fallthru
      _
    // Predicated region
    $region122: #{gine_forward.1} parent=1 // pred_check
      _
    $region123: #{gine_forward.1} parent=1 // pred_check_branch
      %196 = sbr.rel (0) target = $region125
    $region124: #{gine_forward.1} parent=1 // pred_region
      %197 = dma.done [#allocation17], 1024
    $region125: #{gine_forward.1} parent=1 // pred_fallthru
      _
    // Predicated region
    $region126: #{gine_forward.1} parent=1 // pred_check
      _
    $region127: #{gine_forward.1} parent=1 // pred_check_branch
      %199 = sbr.rel (0) target = $region129
    $region128: #{gine_forward.1} parent=1 // pred_region
      %200 = dma.done [#allocation17], 512
    $region129: #{gine_forward.1} parent=1 // pred_fallthru
      _
    // Predicated region
    $region130: #{gine_forward.1} parent=1 // pred_check
      _
    $region131: #{gine_forward.1} parent=1 // pred_check_branch
      %202 = sbr.rel (0) target = $region133
    $region132: #{gine_forward.1} parent=1 // pred_region
      %203 = dma.done [#allocation20], 32
    $region133: #{gine_forward.1} parent=1 // pred_fallthru
      _
    %204 = sfence
    %v205 = vld [vmem:[%s0] sm:$0xff]
    %v206 = vld [vmem:[%s0 + $0x8] sm:$0xff]
    %v207 = vld [vmem:[%s1] sm:$0xff]
    %v208 = vld [vmem:[%s1 + $0x8] sm:$0xff]
    %v209 = vld [vmem:[%s1 + $0x10] sm:$0xff]
    %v210 = vld [vmem:[%s1 + $0x18] sm:$0xff]
    %v211 = vld [vmem:[%s1 + $0x20] sm:$0xff]
    %v212 = vlaneseq
    %v213 = vshrl.u32 %v212, 7
    %v214 = vadd.s32 %v213, 8
    %v215 = vld [vmem:[%s2] sm:$0x1]
    %v216 = vlaneseq
    %v217 = vshrl.u32 %v216, 7
    %v218 = vsub.s32 0, %v217
    %v219 = vrot.slane %v215, %v218
    %vm220 = vcmp.eq.s32.totalorder %v219, %v213
    %vm221 = vcmp.eq.s32.totalorder %v219, %v214
    %v222 = vsel %vm220, 1, 0
    %v223 = vsel %vm221, 1, 0
    %v224 = vcvt.s32.f32 %v222
    %v225 = vcvt.s32.f32 %v223
    %v226 = vld [vmem:[%s3] sm:$0x1]
    %v227 = vlaneseq
    %v228 = vshrl.u32 %v227, 7
    %v229 = vsub.s32 0, %v228
    %v230 = vrot.slane %v226, %v229
    %vm231 = vcmp.eq.s32.totalorder %v230, %v213
    %vm232 = vcmp.eq.s32.totalorder %v230, %v214
    %v233 = vsel %vm231, 1, 0
    %v234 = vsel %vm232, 1, 0
    %v235 = vcvt.s32.f32 %v233
    %v236 = vcvt.s32.f32 %v234
    %v237 = vld [vmem:[%s12] sm:$0xf]
    %v238 = vld [vmem:[#allocation15] sm:$0x1]
    %v240 = vlaneseq
    %v241 = vshrl.u32 %v240, 7
    %v242 = vsub.s32 0, %v241
    %v243 = vrot.slane %v238, %v242
    %vm245 = vcmask 31744
    %v247 = vsel %vm245, %v207, 0
    %v250 = vsel %vm245, %v208, 0
    %v253 = vsel %vm245, %v209, 0
    %v256 = vsel %vm245, %v210, 0
    %v259 = vsel %vm245, %v211, 0
    %vm261 = vcmask 1043456
    %v263 = vsel %vm261, %v237, 0
    %265 = vmatprep.subr.mxu0 0.0
    %266 = vmatpush1.msra.mxu0 %v263
    %267 = vmatprep.subr.mxu0 0.0
    %268 = vmatpush1.msra.mxu0 0.0
    %269 = vmatprep.subr.mxu0 0.0
    %270 = vmatpush1.msra.mxu0 0.0
    %271 = vmatprep.subr.mxu0 0.0
    %272 = vmatpush1.msra.mxu0 0.0
    %273 = vmatprep.subr.mxu0 0.0
    %274 = vmatpush1.msra.mxu0 0.0
    %275 = vmatprep.subr.mxu0 0.0
    %276 = vmatpush1.msra.mxu0 0.0
    %277 = vmatprep.subr.mxu0 0.0
    %278 = vmatpush1.msra.mxu0 0.0
    %279 = vmatprep.subr.mxu0 0.0
    %280 = vmatpush1.msra.mxu0 0.0
    %281 = vmatprep.subr.mxu0 0.0
    %282 = vmatpush1.msra.mxu0 0.0
    %283 = vmatprep.subr.mxu0 0.0
    %284 = vmatpush1.msra.mxu0 0.0
    %285 = vmatprep.subr.mxu0 0.0
    %286 = vmatpush1.msra.mxu0 0.0
    %287 = vmatprep.subr.mxu0 0.0
    %288 = vmatpush1.msra.mxu0 0.0
    %289 = vmatprep.subr.mxu0 0.0
    %290 = vmatpush1.msra.mxu0 0.0
    %291 = vmatprep.subr.mxu0 0.0
    %292 = vmatpush1.msra.mxu0 0.0
    %293 = vmatprep.subr.mxu0 0.0
    %294 = vmatpush1.msra.mxu0 0.0
    %295 = vmatprep.subr.mxu0 0.0
    %296 = vmatpush1.msra.mxu0 0.0
    %297 = vmatprep.subr.mxu0 0.0
    %298 = vmatpush1.msra.mxu0 0.0
    %299 = vmatprep.subr.mxu0 0.0
    %300 = vmatpush1.msra.mxu0 0.0
    %301 = vmatprep.subr.mxu0 0.0
    %302 = vmatpush1.msra.mxu0 0.0
    %303 = vmatprep.subr.mxu0 0.0
    %304 = vmatpush1.msra.mxu0 0.0
    %305 = vmatprep.subr.mxu0 0.0
    %306 = vmatpush1.msra.mxu0 0.0
    %307 = vmatprep.subr.mxu0 0.0
    %308 = vmatpush1.msra.mxu0 0.0
    %309 = vmatprep.subr.mxu0 0.0
    %310 = vmatpush1.msra.mxu0 0.0
    %311 = vmatprep.subr.mxu0 0.0
    %312 = vmatpush1.msra.mxu0 0.0
    %313 = vmatprep.subr.mxu0 0.0
    %314 = vmatpush1.msra.mxu0 0.0
    %315 = vmatprep.subr.mxu0 0.0
    %316 = vmatpush1.msra.mxu0 0.0
    %317 = vmatprep.subr.mxu0 0.0
    %318 = vmatpush1.msra.mxu0 0.0
    %319 = vmatprep.subr.mxu0 0.0
    %320 = vmatpush1.msra.mxu0 0.0
    %321 = vmatprep.subr.mxu0 0.0
    %322 = vmatpush1.msra.mxu0 0.0
    %323 = vmatprep.subr.mxu0 0.0
    %324 = vmatpush1.msra.mxu0 0.0
    %325 = vmatprep.subr.mxu0 0.0
    %326 = vmatpush1.msra.mxu0 0.0
    %327 = vmatprep.subr.mxu0 0.0
    %328 = vmatpush1.msra.mxu0 0.0
    %329 = vmatprep.mubr.f32.mxu0 0.0
    %330 = vmatmul.mubr.f32.gmra.mrb[0].mxu0 %v247
    %v331 = vpop.f32.mrb[0].mxu0
    %v332 = vadd.f32 %v243, %v331
    %v333 = vpop.f32.mrb[0].mxu0
    %334 = vmatprep.mubr.f32.mxu0 0.0
    %335 = vmatmul.mubr.f32.gmra.mrb[0].mxu0 %v250
    %v336 = vpop.f32.mrb[0].mxu0
    %v337 = vadd.f32 %v243, %v336
    %v338 = vpop.f32.mrb[0].mxu0
    %339 = vmatprep.mubr.f32.mxu0 0.0
    %340 = vmatmul.mubr.f32.gmra.mrb[0].mxu0 %v253
    %v341 = vpop.f32.mrb[0].mxu0
    %v342 = vadd.f32 %v243, %v341
    %v343 = vpop.f32.mrb[0].mxu0
    %344 = vmatprep.mubr.f32.mxu0 0.0
    %345 = vmatmul.mubr.f32.gmra.mrb[0].mxu0 %v256
    %v346 = vpop.f32.mrb[0].mxu0
    %v347 = vadd.f32 %v243, %v346
    %v348 = vpop.f32.mrb[0].mxu0
    %349 = vmatprep.mubr.f32.mxu0 0.0
    %350 = vmatmul.mubr.f32.gmra.mrb[0].mxu0 %v259
    %v351 = vpop.f32.mrb[0].mxu0
    %v352 = vadd.f32 %v243, %v351
    %v353 = vpop.f32.mrb[0].mxu0
    %354 = vdwg.mxu0
    %v355 = vmax.f32 %v332, 0.0
    %v356 = vmax.f32 %v337, 0.0
    %v357 = vmax.f32 %v342, 0.0
    %v358 = vmax.f32 %v347, 0.0
    %v359 = vmax.f32 %v352, 0.0
    %v360 = vld [vmem:[#allocation6] sm:$0xf]
    %v361 = vld [vmem:[#allocation7] sm:$0xff]
    %v362 = vld [vmem:[#allocation9] sm:$0xf]
    %v363 = vlaneseq
    %v364 = vshrl.u32 %v363, 7
    %v365 = vsub.s32 0, %v364
    %v366 = vrot.slane %v362, %v365
    %v368 = vsel %vm261, %v360, 0
    %370 = vmatprep.subr.mxu0 0.0
    %371 = vmatpush1.msra.mxu0 %v368
    %372 = vmatprep.subr.mxu0 0.0
    %373 = vmatpush1.msra.mxu0 0.0
    %374 = vmatprep.subr.mxu0 0.0
    %375 = vmatpush1.msra.mxu0 0.0
    %376 = vmatprep.subr.mxu0 0.0
    %377 = vmatpush1.msra.mxu0 0.0
    %378 = vmatprep.subr.mxu0 0.0
    %379 = vmatpush1.msra.mxu0 0.0
    %380 = vmatprep.subr.mxu0 0.0
    %381 = vmatpush1.msra.mxu0 0.0
    %382 = vmatprep.subr.mxu0 0.0
    %383 = vmatpush1.msra.mxu0 0.0
    %384 = vmatprep.subr.mxu0 0.0
    %385 = vmatpush1.msra.mxu0 0.0
    %386 = vmatprep.subr.mxu0 0.0
    %387 = vmatpush1.msra.mxu0 0.0
    %388 = vmatprep.subr.mxu0 0.0
    %389 = vmatpush1.msra.mxu0 0.0
    %390 = vmatprep.subr.mxu0 0.0
    %391 = vmatpush1.msra.mxu0 0.0
    %392 = vmatprep.subr.mxu0 0.0
    %393 = vmatpush1.msra.mxu0 0.0
    %394 = vmatprep.subr.mxu0 0.0
    %395 = vmatpush1.msra.mxu0 0.0
    %396 = vmatprep.subr.mxu0 0.0
    %397 = vmatpush1.msra.mxu0 0.0
    %398 = vmatprep.subr.mxu0 0.0
    %399 = vmatpush1.msra.mxu0 0.0
    %400 = vmatprep.subr.mxu0 0.0
    %401 = vmatpush1.msra.mxu0 0.0
    %402 = vmatprep.subr.mxu0 0.0
    %403 = vmatpush1.msra.mxu0 0.0
    %404 = vmatprep.subr.mxu0 0.0
    %405 = vmatpush1.msra.mxu0 0.0
    %406 = vmatprep.subr.mxu0 0.0
    %407 = vmatpush1.msra.mxu0 0.0
    %408 = vmatprep.subr.mxu0 0.0
    %409 = vmatpush1.msra.mxu0 0.0
    %410 = vmatprep.subr.mxu0 0.0
    %411 = vmatpush1.msra.mxu0 0.0
    %412 = vmatprep.subr.mxu0 0.0
    %413 = vmatpush1.msra.mxu0 0.0
    %414 = vmatprep.subr.mxu0 0.0
    %415 = vmatpush1.msra.mxu0 0.0
    %416 = vmatprep.subr.mxu0 0.0
    %417 = vmatpush1.msra.mxu0 0.0
    %418 = vmatprep.subr.mxu0 0.0
    %419 = vmatpush1.msra.mxu0 0.0
    %420 = vmatprep.subr.mxu0 0.0
    %421 = vmatpush1.msra.mxu0 0.0
    %422 = vmatprep.subr.mxu0 0.0
    %423 = vmatpush1.msra.mxu0 0.0
    %424 = vmatprep.subr.mxu0 0.0
    %425 = vmatpush1.msra.mxu0 0.0
    %426 = vmatprep.subr.mxu0 0.0
    %427 = vmatpush1.msra.mxu0 0.0
    %428 = vmatprep.subr.mxu0 0.0
    %429 = vmatpush1.msra.mxu0 0.0
    %430 = vmatprep.subr.mxu0 0.0
    %431 = vmatpush1.msra.mxu0 0.0
    %432 = vmatprep.subr.mxu0 0.0
    %433 = vmatpush1.msra.mxu0 0.0
    %434 = vmatprep.mubr.f32.mxu0 0.0
    %435 = vmatmul.mubr.f32.gmra.mrb[0].mxu0 %v247
    %v436 = vpop.f32.mrb[0].mxu0
    %v437 = vadd.f32 %v366, %v436
    %v438 = vpop.f32.mrb[0].mxu0
    %439 = vmatprep.mubr.f32.mxu0 0.0
    %440 = vmatmul.mubr.f32.gmra.mrb[0].mxu0 %v250
    %v441 = vpop.f32.mrb[0].mxu0
    %v442 = vadd.f32 %v366, %v441
    %v443 = vpop.f32.mrb[0].mxu0
    %444 = vmatprep.mubr.f32.mxu0 0.0
    %445 = vmatmul.mubr.f32.gmra.mrb[0].mxu0 %v253
    %v446 = vpop.f32.mrb[0].mxu0
    %v447 = vadd.f32 %v366, %v446
    %v448 = vpop.f32.mrb[0].mxu0
    %449 = vmatprep.mubr.f32.mxu0 0.0
    %450 = vmatmul.mubr.f32.gmra.mrb[0].mxu0 %v256
    %v451 = vpop.f32.mrb[0].mxu0
    %v452 = vadd.f32 %v366, %v451
    %v453 = vpop.f32.mrb[0].mxu0
    %454 = vmatprep.mubr.f32.mxu0 0.0
    %455 = vmatmul.mubr.f32.gmra.mrb[0].mxu0 %v259
    %v456 = vpop.f32.mrb[0].mxu0
    %v457 = vadd.f32 %v366, %v456
    %v458 = vpop.f32.mrb[0].mxu0
    %459 = vdwg.mxu0
    %v460 = vmax.f32 %v437, 0.0
    %v461 = vmax.f32 %v442, 0.0
    %v462 = vmax.f32 %v447, 0.0
    %v463 = vmax.f32 %v452, 0.0
    %v464 = vmax.f32 %v457, 0.0
    %v465 = vlaneseq
    %v466 = vshrl.u32 %v465, 7
    %v467 = vsub.s32 1, %v466
    %v468 = vrot.slane %v362, %v467
    %vm469 = vcmask 64512
    %v471 = vsel %vm469, %v460, 0
    %v474 = vsel %vm469, %v461, 0
    %v477 = vsel %vm469, %v462, 0
    %v480 = vsel %vm469, %v463, 0
    %v483 = vsel %vm469, %v464, 0
    %485 = vmatprep.subr.mxu0 0.0
    %486 = vmatpush1.msra.mxu0 %v361
    %487 = vmatprep.subr.mxu0 0.0
    %488 = vmatpush1.msra.mxu0 0.0
    %489 = vmatprep.subr.mxu0 0.0
    %490 = vmatpush1.msra.mxu0 0.0
    %491 = vmatprep.subr.mxu0 0.0
    %492 = vmatpush1.msra.mxu0 0.0
    %493 = vmatprep.subr.mxu0 0.0
    %494 = vmatpush1.msra.mxu0 0.0
    %495 = vmatprep.subr.mxu0 0.0
    %496 = vmatpush1.msra.mxu0 0.0
    %497 = vmatprep.subr.mxu0 0.0
    %498 = vmatpush1.msra.mxu0 0.0
    %499 = vmatprep.subr.mxu0 0.0
    %500 = vmatpush1.msra.mxu0 0.0
    %501 = vmatprep.subr.mxu0 0.0
    %502 = vmatpush1.msra.mxu0 0.0
    %503 = vmatprep.subr.mxu0 0.0
    %504 = vmatpush1.msra.mxu0 0.0
    %505 = vmatprep.subr.mxu0 0.0
    %506 = vmatpush1.msra.mxu0 0.0
    %507 = vmatprep.subr.mxu0 0.0
    %508 = vmatpush1.msra.mxu0 0.0
    %509 = vmatprep.subr.mxu0 0.0
    %510 = vmatpush1.msra.mxu0 0.0
    %511 = vmatprep.subr.mxu0 0.0
    %512 = vmatpush1.msra.mxu0 0.0
    %513 = vmatprep.subr.mxu0 0.0
    %514 = vmatpush1.msra.mxu0 0.0
    %515 = vmatprep.subr.mxu0 0.0
    %516 = vmatpush1.msra.mxu0 0.0
    %517 = vmatprep.subr.mxu0 0.0
    %518 = vmatpush1.msra.mxu0 0.0
    %519 = vmatprep.subr.mxu0 0.0
    %520 = vmatpush1.msra.mxu0 0.0
    %521 = vmatprep.subr.mxu0 0.0
    %522 = vmatpush1.msra.mxu0 0.0
    %523 = vmatprep.subr.mxu0 0.0
    %524 = vmatpush1.msra.mxu0 0.0
    %525 = vmatprep.subr.mxu0 0.0
    %526 = vmatpush1.msra.mxu0 0.0
    %527 = vmatprep.subr.mxu0 0.0
    %528 = vmatpush1.msra.mxu0 0.0
    %529 = vmatprep.subr.mxu0 0.0
    %530 = vmatpush1.msra.mxu0 0.0
    %531 = vmatprep.subr.mxu0 0.0
    %532 = vmatpush1.msra.mxu0 0.0
    %533 = vmatprep.subr.mxu0 0.0
    %534 = vmatpush1.msra.mxu0 0.0
    %535 = vmatprep.subr.mxu0 0.0
    %536 = vmatpush1.msra.mxu0 0.0
    %537 = vmatprep.subr.mxu0 0.0
    %538 = vmatpush1.msra.mxu0 0.0
    %539 = vmatprep.subr.mxu0 0.0
    %540 = vmatpush1.msra.mxu0 0.0
    %541 = vmatprep.subr.mxu0 0.0
    %542 = vmatpush1.msra.mxu0 0.0
    %543 = vmatprep.subr.mxu0 0.0
    %544 = vmatpush1.msra.mxu0 0.0
    %545 = vmatprep.subr.mxu0 0.0
    %546 = vmatpush1.msra.mxu0 0.0
    %547 = vmatprep.subr.mxu0 0.0
    %548 = vmatpush1.msra.mxu0 0.0
    %549 = vmatprep.mubr.f32.mxu0 0.0
    %550 = vmatmul.mubr.f32.gmra.mrb[0].mxu0 %v471
    %v551 = vpop.f32.mrb[0].mxu0
    %v552 = vadd.f32 %v468, %v551
    %v553 = vpop.f32.mrb[0].mxu0
    %554 = vmatprep.mubr.f32.mxu0 0.0
    %555 = vmatmul.mubr.f32.gmra.mrb[0].mxu0 %v474
    %v556 = vpop.f32.mrb[0].mxu0
    %v557 = vadd.f32 %v468, %v556
    %v558 = vpop.f32.mrb[0].mxu0
    %559 = vmatprep.mubr.f32.mxu0 0.0
    %560 = vmatmul.mubr.f32.gmra.mrb[0].mxu0 %v477
    %v561 = vpop.f32.mrb[0].mxu0
    %v562 = vadd.f32 %v468, %v561
    %v563 = vpop.f32.mrb[0].mxu0
    %564 = vmatprep.mubr.f32.mxu0 0.0
    %565 = vmatmul.mubr.f32.gmra.mrb[0].mxu0 %v480
    %v566 = vpop.f32.mrb[0].mxu0
    %v567 = vadd.f32 %v468, %v566
    %v568 = vpop.f32.mrb[0].mxu0
    %569 = vmatprep.mubr.f32.mxu0 0.0
    %570 = vmatmul.mubr.f32.gmra.mrb[0].mxu0 %v483
    %v571 = vpop.f32.mrb[0].mxu0
    %v572 = vadd.f32 %v468, %v571
    %v573 = vpop.f32.mrb[0].mxu0
    %574 = vdwg.mxu0
    %v575 = vmax.f32 %v552, 0.0
    %v576 = vmax.f32 %v557, 0.0
    %v577 = vmax.f32 %v562, 0.0
    %v578 = vmax.f32 %v567, 0.0
    %v579 = vmax.f32 %v572, 0.0
    %v580 = vlaneseq
    %v581 = vshrl.u32 %v580, 7
    %v582 = vsub.s32 2, %v581
    %v583 = vrot.slane %v362, %v582
    %v584 = vmul.f32 %v575, %v583
    %v585 = vmul.f32 %v576, %v583
    %v586 = vmul.f32 %v577, %v583
    %v587 = vmul.f32 %v578, %v583
    %v588 = vmul.f32 %v579, %v583
    %v589 = vlaneseq
    %v590 = vshrl.u32 %v589, 7
    %v591 = vsub.s32 3, %v590
    %v592 = vrot.slane %v362, %v591
    %v593 = vadd.f32 %v584, %v592
    %v594 = vadd.f32 %v585, %v592
    %v595 = vadd.f32 %v586, %v592
    %v596 = vadd.f32 %v587, %v592
    %v597 = vadd.f32 %v588, %v592
    %598 = vxpose.xlu0.b32.start [1/16] %v224, 128
    %599 = vxpose.xlu0.b32.cont [2/16] %v225, 128
    %600 = vxpose.xlu0.b32.cont [3/16] 0.0, 128
    %601 = vxpose.xlu0.b32.cont [4/16] 0.0, 128
    %602 = vxpose.xlu0.b32.cont [5/16] 0.0, 128
    %603 = vxpose.xlu0.b32.cont [6/16] 0.0, 128
    %604 = vxpose.xlu0.b32.cont [7/16] 0.0, 128
    %605 = vxpose.xlu0.b32.cont [8/16] 0.0, 128
    %606 = vxpose.xlu0.b32.cont [9/16] 0.0, 128
    %607 = vxpose.xlu0.b32.cont [10/16] 0.0, 128
    %608 = vxpose.xlu0.b32.cont [11/16] 0.0, 128
    %609 = vxpose.xlu0.b32.cont [12/16] 0.0, 128
    %610 = vxpose.xlu0.b32.cont [13/16] 0.0, 128
    %611 = vxpose.xlu0.b32.cont [14/16] 0.0, 128
    %612 = vxpose.xlu0.b32.cont [15/16] 0.0, 128
    %613 = vxpose.xlu0.b32.end [16/16] 0.0, 128
    %v614 = vpop.trf.xlu0
    %v615 = vpop.trf.xlu0
    %v616 = vpop.trf.xlu0
    %v617 = vpop.trf.xlu0
    %v618 = vpop.trf.xlu0
    %v619 = vpop.trf.xlu0
    %v620 = vpop.trf.xlu0
    %v621 = vpop.trf.xlu0
    %v622 = vpop.trf.xlu0
    %v623 = vpop.trf.xlu0
    %v624 = vpop.trf.xlu0
    %v625 = vpop.trf.xlu0
    %v626 = vpop.trf.xlu0
    %v627 = vpop.trf.xlu0
    %v628 = vpop.trf.xlu0
    %v629 = vpop.trf.xlu0
    %vm630 = vcmask 130048
    %v632 = vsel %vm630, %v614, 0
    %v635 = vsel %vm630, %v615, 0
    %v638 = vsel %vm630, %v616, 0
    %v641 = vsel %vm630, %v617, 0
    %v644 = vsel %vm630, %v618, 0
    %646 = vmatprep.subr.mxu0 0.0
    %v647 = vand.u32 %v205, 4294901760
    %648 = vmatpush1.msra.mxu0 %v647
    %649 = vmatprep.subr.mxu0 0.0
    %v650 = vand.u32 %v206, 4294901760
    %651 = vmatpush1.msra.mxu0 %v650
    %652 = vmatprep.subr.mxu0 0.0
    %653 = vmatpush1.msra.mxu0 0.0
    %654 = vmatprep.subr.mxu0 0.0
    %655 = vmatpush1.msra.mxu0 0.0
    %656 = vmatprep.subr.mxu0 0.0
    %657 = vmatpush1.msra.mxu0 0.0
    %658 = vmatprep.subr.mxu0 0.0
    %659 = vmatpush1.msra.mxu0 0.0
    %660 = vmatprep.subr.mxu0 0.0
    %661 = vmatpush1.msra.mxu0 0.0
    %662 = vmatprep.subr.mxu0 0.0
    %663 = vmatpush1.msra.mxu0 0.0
    %664 = vmatprep.subr.mxu0 0.0
    %665 = vmatpush1.msra.mxu0 0.0
    %666 = vmatprep.subr.mxu0 0.0
    %667 = vmatpush1.msra.mxu0 0.0
    %668 = vmatprep.subr.mxu0 0.0
    %669 = vmatpush1.msra.mxu0 0.0
    %670 = vmatprep.subr.mxu0 0.0
    %671 = vmatpush1.msra.mxu0 0.0
    %672 = vmatprep.subr.mxu0 0.0
    %673 = vmatpush1.msra.mxu0 0.0
    %674 = vmatprep.subr.mxu0 0.0
    %675 = vmatpush1.msra.mxu0 0.0
    %676 = vmatprep.subr.mxu0 0.0
    %677 = vmatpush1.msra.mxu0 0.0
    %678 = vmatprep.subr.mxu0 0.0
    %679 = vmatpush1.msra.mxu0 0.0
    %680 = vmatprep.subr.mxu0 0.0
    %681 = vmatpush1.msra.mxu0 0.0
    %682 = vmatprep.subr.mxu0 0.0
    %683 = vmatpush1.msra.mxu0 0.0
    %684 = vmatprep.subr.mxu0 0.0
    %685 = vmatpush1.msra.mxu0 0.0
    %686 = vmatprep.subr.mxu0 0.0
    %687 = vmatpush1.msra.mxu0 0.0
    %688 = vmatprep.subr.mxu0 0.0
    %689 = vmatpush1.msra.mxu0 0.0
    %690 = vmatprep.subr.mxu0 0.0
    %691 = vmatpush1.msra.mxu0 0.0
    %692 = vmatprep.subr.mxu0 0.0
    %693 = vmatpush1.msra.mxu0 0.0
    %694 = vmatprep.subr.mxu0 0.0
    %695 = vmatpush1.msra.mxu0 0.0
    %696 = vmatprep.subr.mxu0 0.0
    %697 = vmatpush1.msra.mxu0 0.0
    %698 = vmatprep.subr.mxu0 0.0
    %699 = vmatpush1.msra.mxu0 0.0
    %700 = vmatprep.subr.mxu0 0.0
    %701 = vmatpush1.msra.mxu0 0.0
    %702 = vmatprep.subr.mxu0 0.0
    %703 = vmatpush1.msra.mxu0 0.0
    %704 = vmatprep.subr.mxu0 0.0
    %705 = vmatpush1.msra.mxu0 0.0
    %706 = vmatprep.subr.mxu0 0.0
    %707 = vmatpush1.msra.mxu0 0.0
    %708 = vmatprep.subr.mxu0 0.0
    %709 = vmatpush1.msra.mxu0 0.0
    %710 = vmatprep.subr.mxu0 0.0
    %711 = vmatpush1.msra.mxu0 0.0
    %712 = vmatprep.mubr.f32.mxu0 0.0
    %v713 = vand.u32 %v632, 4294901760
    %v714 = vsub.f32 %v632, %v713
    %v715 = vand.u32 %v714, 4294901760
    %v716 = vsub.f32 %v714, %v715
    %v717 = vand.u32 %v716, 4294901760
    %718 = vmatmul.mubr.f32.gmra.mrb[0].mxu0 %v717
    %v719 = vpop.f32.mrb[0].mxu0
    %v720 = vadd.f32 %v593, %v719
    %v721 = vpop.f32.mrb[0].mxu0
    %722 = vmatprep.mubr.f32.mxu0 0.0
    %v723 = vand.u32 %v635, 4294901760
    %v724 = vsub.f32 %v635, %v723
    %v725 = vand.u32 %v724, 4294901760
    %v726 = vsub.f32 %v724, %v725
    %v727 = vand.u32 %v726, 4294901760
    %728 = vmatmul.mubr.f32.gmra.mrb[0].mxu0 %v727
    %v729 = vpop.f32.mrb[0].mxu0
    %v730 = vadd.f32 %v594, %v729
    %v731 = vpop.f32.mrb[0].mxu0
    %732 = vmatprep.mubr.f32.mxu0 0.0
    %v733 = vand.u32 %v638, 4294901760
    %v734 = vsub.f32 %v638, %v733
    %v735 = vand.u32 %v734, 4294901760
    %v736 = vsub.f32 %v734, %v735
    %v737 = vand.u32 %v736, 4294901760
    %738 = vmatmul.mubr.f32.gmra.mrb[0].mxu0 %v737
    %v739 = vpop.f32.mrb[0].mxu0
    %v740 = vadd.f32 %v595, %v739
    %v741 = vpop.f32.mrb[0].mxu0
    %742 = vmatprep.mubr.f32.mxu0 0.0
    %v743 = vand.u32 %v641, 4294901760
    %v744 = vsub.f32 %v641, %v743
    %v745 = vand.u32 %v744, 4294901760
    %v746 = vsub.f32 %v744, %v745
    %v747 = vand.u32 %v746, 4294901760
    %748 = vmatmul.mubr.f32.gmra.mrb[0].mxu0 %v747
    %v749 = vpop.f32.mrb[0].mxu0
    %v750 = vadd.f32 %v596, %v749
    %v751 = vpop.f32.mrb[0].mxu0
    %752 = vmatprep.mubr.f32.mxu0 0.0
    %v753 = vand.u32 %v644, 4294901760
    %v754 = vsub.f32 %v644, %v753
    %v755 = vand.u32 %v754, 4294901760
    %v756 = vsub.f32 %v754, %v755
    %v757 = vand.u32 %v756, 4294901760
    %758 = vmatmul.mubr.f32.gmra.mrb[0].mxu0 %v757
    %v759 = vpop.f32.mrb[0].mxu0
    %v760 = vadd.f32 %v597, %v759
    %v761 = vpop.f32.mrb[0].mxu0
    %762 = vdwg.mxu0
    %763 = vmatprep.subr.mxu0 0.0
    %v764 = vand.u32 %v205, 4294901760
    %v765 = vsub.f32 %v205, %v764
    %v766 = vand.u32 %v765, 4294901760
    %v767 = vsub.f32 %v765, %v766
    %v768 = vand.u32 %v767, 4294901760
    %769 = vmatpush1.msra.mxu0 %v768
    %770 = vmatprep.subr.mxu0 0.0
    %v771 = vand.u32 %v206, 4294901760
    %v772 = vsub.f32 %v206, %v771
    %v773 = vand.u32 %v772, 4294901760
    %v774 = vsub.f32 %v772, %v773
    %v775 = vand.u32 %v774, 4294901760
    %776 = vmatpush1.msra.mxu0 %v775
    %777 = vmatprep.subr.mxu0 0.0
    %778 = vmatpush1.msra.mxu0 0.0
    %779 = vmatprep.subr.mxu0 0.0
    %780 = vmatpush1.msra.mxu0 0.0
    %781 = vmatprep.subr.mxu0 0.0
    %782 = vmatpush1.msra.mxu0 0.0
    %783 = vmatprep.subr.mxu0 0.0
    %784 = vmatpush1.msra.mxu0 0.0
    %785 = vmatprep.subr.mxu0 0.0
    %786 = vmatpush1.msra.mxu0 0.0
    %787 = vmatprep.subr.mxu0 0.0
    %788 = vmatpush1.msra.mxu0 0.0
    %789 = vmatprep.subr.mxu0 0.0
    %790 = vmatpush1.msra.mxu0 0.0
    %791 = vmatprep.subr.mxu0 0.0
    %792 = vmatpush1.msra.mxu0 0.0
    %793 = vmatprep.subr.mxu0 0.0
    %794 = vmatpush1.msra.mxu0 0.0
    %795 = vmatprep.subr.mxu0 0.0
    %796 = vmatpush1.msra.mxu0 0.0
    %797 = vmatprep.subr.mxu0 0.0
    %798 = vmatpush1.msra.mxu0 0.0
    %799 = vmatprep.subr.mxu0 0.0
    %800 = vmatpush1.msra.mxu0 0.0
    %801 = vmatprep.subr.mxu0 0.0
    %802 = vmatpush1.msra.mxu0 0.0
    %803 = vmatprep.subr.mxu0 0.0
    %804 = vmatpush1.msra.mxu0 0.0
    %805 = vmatprep.subr.mxu0 0.0
    %806 = vmatpush1.msra.mxu0 0.0
    %807 = vmatprep.subr.mxu0 0.0
    %808 = vmatpush1.msra.mxu0 0.0
    %809 = vmatprep.subr.mxu0 0.0
    %810 = vmatpush1.msra.mxu0 0.0
    %811 = vmatprep.subr.mxu0 0.0
    %812 = vmatpush1.msra.mxu0 0.0
    %813 = vmatprep.subr.mxu0 0.0
    %814 = vmatpush1.msra.mxu0 0.0
    %815 = vmatprep.subr.mxu0 0.0
    %816 = vmatpush1.msra.mxu0 0.0
    %817 = vmatprep.subr.mxu0 0.0
    %818 = vmatpush1.msra.mxu0 0.0
    %819 = vmatprep.subr.mxu0 0.0
    %820 = vmatpush1.msra.mxu0 0.0
    %821 = vmatprep.subr.mxu0 0.0
    %822 = vmatpush1.msra.mxu0 0.0
    %823 = vmatprep.subr.mxu0 0.0
    %824 = vmatpush1.msra.mxu0 0.0
    %825 = vmatprep.subr.mxu0 0.0
    %826 = vmatpush1.msra.mxu0 0.0
    %827 = vmatprep.subr.mxu0 0.0
    %828 = vmatpush1.msra.mxu0 0.0
    %829 = vmatprep.subr.mxu0 0.0
    %830 = vmatpush1.msra.mxu0 0.0
    %831 = vmatprep.subr.mxu0 0.0
    %832 = vmatpush1.msra.mxu0 0.0
    %833 = vmatprep.subr.mxu0 0.0
    %834 = vmatpush1.msra.mxu0 0.0
    %835 = vmatprep.subr.mxu0 0.0
    %836 = vmatpush1.msra.mxu0 0.0
    %837 = vmatprep.mubr.f32.mxu0 0.0
    %v838 = vand.u32 %v632, 4294901760
    %839 = vmatmul.mubr.f32.gmra.mrb[0].mxu0 %v838
    %v840 = vpop.f32.mrb[0].mxu0
    %v841 = vadd.f32 %v720, %v840
    %v842 = vpop.f32.mrb[0].mxu0
    %843 = vmatprep.mubr.f32.mxu0 0.0
    %v844 = vand.u32 %v635, 4294901760
    %845 = vmatmul.mubr.f32.gmra.mrb[0].mxu0 %v844
    %v846 = vpop.f32.mrb[0].mxu0
    %v847 = vadd.f32 %v730, %v846
    %v848 = vpop.f32.mrb[0].mxu0
    %849 = vmatprep.mubr.f32.mxu0 0.0
    %v850 = vand.u32 %v638, 4294901760
    %851 = vmatmul.mubr.f32.gmra.mrb[0].mxu0 %v850
    %v852 = vpop.f32.mrb[0].mxu0
    %v853 = vadd.f32 %v740, %v852
    %v854 = vpop.f32.mrb[0].mxu0
    %855 = vmatprep.mubr.f32.mxu0 0.0
    %v856 = vand.u32 %v641, 4294901760
    %857 = vmatmul.mubr.f32.gmra.mrb[0].mxu0 %v856
    %v858 = vpop.f32.mrb[0].mxu0
    %v859 = vadd.f32 %v750, %v858
    %v860 = vpop.f32.mrb[0].mxu0
    %861 = vmatprep.mubr.f32.mxu0 0.0
    %v862 = vand.u32 %v644, 4294901760
    %863 = vmatmul.mubr.f32.gmra.mrb[0].mxu0 %v862
    %v864 = vpop.f32.mrb[0].mxu0
    %v865 = vadd.f32 %v760, %v864
    %v866 = vpop.f32.mrb[0].mxu0
    %867 = vdwg.mxu0
    %868 = vmatprep.subr.mxu0 0.0
    %v869 = vand.u32 %v205, 4294901760
    %v870 = vsub.f32 %v205, %v869
    %871 = vmatpush1.msra.mxu0 %v870
    %872 = vmatprep.subr.mxu0 0.0
    %v873 = vand.u32 %v206, 4294901760
    %v874 = vsub.f32 %v206, %v873
    %875 = vmatpush1.msra.mxu0 %v874
    %876 = vmatprep.subr.mxu0 0.0
    %877 = vmatpush1.msra.mxu0 0.0
    %878 = vmatprep.subr.mxu0 0.0
    %879 = vmatpush1.msra.mxu0 0.0
    %880 = vmatprep.subr.mxu0 0.0
    %881 = vmatpush1.msra.mxu0 0.0
    %882 = vmatprep.subr.mxu0 0.0
    %883 = vmatpush1.msra.mxu0 0.0
    %884 = vmatprep.subr.mxu0 0.0
    %885 = vmatpush1.msra.mxu0 0.0
    %886 = vmatprep.subr.mxu0 0.0
    %887 = vmatpush1.msra.mxu0 0.0
    %888 = vmatprep.subr.mxu0 0.0
    %889 = vmatpush1.msra.mxu0 0.0
    %890 = vmatprep.subr.mxu0 0.0
    %891 = vmatpush1.msra.mxu0 0.0
    %892 = vmatprep.subr.mxu0 0.0
    %893 = vmatpush1.msra.mxu0 0.0
    %894 = vmatprep.subr.mxu0 0.0
    %895 = vmatpush1.msra.mxu0 0.0
    %896 = vmatprep.subr.mxu0 0.0
    %897 = vmatpush1.msra.mxu0 0.0
    %898 = vmatprep.subr.mxu0 0.0
    %899 = vmatpush1.msra.mxu0 0.0
    %900 = vmatprep.subr.mxu0 0.0
    %901 = vmatpush1.msra.mxu0 0.0
    %902 = vmatprep.subr.mxu0 0.0
    %903 = vmatpush1.msra.mxu0 0.0
    %904 = vmatprep.subr.mxu0 0.0
    %905 = vmatpush1.msra.mxu0 0.0
    %906 = vmatprep.subr.mxu0 0.0
    %907 = vmatpush1.msra.mxu0 0.0
    %908 = vmatprep.subr.mxu0 0.0
    %909 = vmatpush1.msra.mxu0 0.0
    %910 = vmatprep.subr.mxu0 0.0
    %911 = vmatpush1.msra.mxu0 0.0
    %912 = vmatprep.subr.mxu0 0.0
    %913 = vmatpush1.msra.mxu0 0.0
    %914 = vmatprep.subr.mxu0 0.0
    %915 = vmatpush1.msra.mxu0 0.0
    %916 = vmatprep.subr.mxu0 0.0
    %917 = vmatpush1.msra.mxu0 0.0
    %918 = vmatprep.subr.mxu0 0.0
    %919 = vmatpush1.msra.mxu0 0.0
    %920 = vmatprep.subr.mxu0 0.0
    %921 = vmatpush1.msra.mxu0 0.0
    %922 = vmatprep.subr.mxu0 0.0
    %923 = vmatpush1.msra.mxu0 0.0
    %924 = vmatprep.subr.mxu0 0.0
    %925 = vmatpush1.msra.mxu0 0.0
    %926 = vmatprep.subr.mxu0 0.0
    %927 = vmatpush1.msra.mxu0 0.0
    %928 = vmatprep.subr.mxu0 0.0
    %929 = vmatpush1.msra.mxu0 0.0
    %930 = vmatprep.subr.mxu0 0.0
    %931 = vmatpush1.msra.mxu0 0.0
    %932 = vmatprep.subr.mxu0 0.0
    %933 = vmatpush1.msra.mxu0 0.0
    %934 = vmatprep.subr.mxu0 0.0
    %935 = vmatpush1.msra.mxu0 0.0
    %936 = vmatprep.mubr.f32.mxu0 0.0
    %v937 = vand.u32 %v632, 4294901760
    %v938 = vsub.f32 %v632, %v937
    %939 = vmatmul.mubr.f32.gmra.mrb[0].mxu0 %v938
    %v940 = vpop.f32.mrb[0].mxu0
    %v941 = vadd.f32 %v841, %v940
    %v942 = vpop.f32.mrb[0].mxu0
    %943 = vmatprep.mubr.f32.mxu0 0.0
    %v944 = vand.u32 %v635, 4294901760
    %v945 = vsub.f32 %v635, %v944
    %946 = vmatmul.mubr.f32.gmra.mrb[0].mxu0 %v945
    %v947 = vpop.f32.mrb[0].mxu0
    %v948 = vadd.f32 %v847, %v947
    %v949 = vpop.f32.mrb[0].mxu0
    %950 = vmatprep.mubr.f32.mxu0 0.0
    %v951 = vand.u32 %v638, 4294901760
    %v952 = vsub.f32 %v638, %v951
    %953 = vmatmul.mubr.f32.gmra.mrb[0].mxu0 %v952
    %v954 = vpop.f32.mrb[0].mxu0
    %v955 = vadd.f32 %v853, %v954
    %v956 = vpop.f32.mrb[0].mxu0
    %957 = vmatprep.mubr.f32.mxu0 0.0
    %v958 = vand.u32 %v641, 4294901760
    %v959 = vsub.f32 %v641, %v958
    %960 = vmatmul.mubr.f32.gmra.mrb[0].mxu0 %v959
    %v961 = vpop.f32.mrb[0].mxu0
    %v962 = vadd.f32 %v859, %v961
    %v963 = vpop.f32.mrb[0].mxu0
    %964 = vmatprep.mubr.f32.mxu0 0.0
    %v965 = vand.u32 %v644, 4294901760
    %v966 = vsub.f32 %v644, %v965
    %967 = vmatmul.mubr.f32.gmra.mrb[0].mxu0 %v966
    %v968 = vpop.f32.mrb[0].mxu0
    %v969 = vadd.f32 %v865, %v968
    %v970 = vpop.f32.mrb[0].mxu0
    %971 = vdwg.mxu0
    %972 = vmatprep.subr.mxu0 0.0
    %v973 = vand.u32 %v205, 4294901760
    %974 = vmatpush1.msra.mxu0 %v973
    %975 = vmatprep.subr.mxu0 0.0
    %v976 = vand.u32 %v206, 4294901760
    %977 = vmatpush1.msra.mxu0 %v976
    %978 = vmatprep.subr.mxu0 0.0
    %979 = vmatpush1.msra.mxu0 0.0
    %980 = vmatprep.subr.mxu0 0.0
    %981 = vmatpush1.msra.mxu0 0.0
    %982 = vmatprep.subr.mxu0 0.0
    %983 = vmatpush1.msra.mxu0 0.0
    %984 = vmatprep.subr.mxu0 0.0
    %985 = vmatpush1.msra.mxu0 0.0
    %986 = vmatprep.subr.mxu0 0.0
    %987 = vmatpush1.msra.mxu0 0.0
    %988 = vmatprep.subr.mxu0 0.0
    %989 = vmatpush1.msra.mxu0 0.0
    %990 = vmatprep.subr.mxu0 0.0
    %991 = vmatpush1.msra.mxu0 0.0
    %992 = vmatprep.subr.mxu0 0.0
    %993 = vmatpush1.msra.mxu0 0.0
    %994 = vmatprep.subr.mxu0 0.0
    %995 = vmatpush1.msra.mxu0 0.0
    %996 = vmatprep.subr.mxu0 0.0
    %997 = vmatpush1.msra.mxu0 0.0
    %998 = vmatprep.subr.mxu0 0.0
    %999 = vmatpush1.msra.mxu0 0.0
    %1000 = vmatprep.subr.mxu0 0.0
    %1001 = vmatpush1.msra.mxu0 0.0
    %1002 = vmatprep.subr.mxu0 0.0
    %1003 = vmatpush1.msra.mxu0 0.0
    %1004 = vmatprep.subr.mxu0 0.0
    %1005 = vmatpush1.msra.mxu0 0.0
    %1006 = vmatprep.subr.mxu0 0.0
    %1007 = vmatpush1.msra.mxu0 0.0
    %1008 = vmatprep.subr.mxu0 0.0
    %1009 = vmatpush1.msra.mxu0 0.0
    %1010 = vmatprep.subr.mxu0 0.0
    %1011 = vmatpush1.msra.mxu0 0.0
    %1012 = vmatprep.subr.mxu0 0.0
    %1013 = vmatpush1.msra.mxu0 0.0
    %1014 = vmatprep.subr.mxu0 0.0
    %1015 = vmatpush1.msra.mxu0 0.0
    %1016 = vmatprep.subr.mxu0 0.0
    %1017 = vmatpush1.msra.mxu0 0.0
    %1018 = vmatprep.subr.mxu0 0.0
    %1019 = vmatpush1.msra.mxu0 0.0
    %1020 = vmatprep.subr.mxu0 0.0
    %1021 = vmatpush1.msra.mxu0 0.0
    %1022 = vmatprep.subr.mxu0 0.0
    %1023 = vmatpush1.msra.mxu0 0.0
    %1024 = vmatprep.subr.mxu0 0.0
    %1025 = vmatpush1.msra.mxu0 0.0
    %1026 = vmatprep.subr.mxu0 0.0
    %1027 = vmatpush1.msra.mxu0 0.0
    %1028 = vmatprep.subr.mxu0 0.0
    %1029 = vmatpush1.msra.mxu0 0.0
    %1030 = vmatprep.subr.mxu0 0.0
    %1031 = vmatpush1.msra.mxu0 0.0
    %1032 = vmatprep.subr.mxu0 0.0
    %1033 = vmatpush1.msra.mxu0 0.0
    %1034 = vmatprep.subr.mxu0 0.0
    %1035 = vmatpush1.msra.mxu0 0.0
    %1036 = vmatprep.subr.mxu0 0.0
    %1037 = vmatpush1.msra.mxu0 0.0
    %1038 = vmatprep.mubr.f32.mxu0 0.0
    %v1039 = vand.u32 %v632, 4294901760
    %v1040 = vsub.f32 %v632, %v1039
    %v1041 = vand.u32 %v1040, 4294901760
    %1042 = vmatmul.mubr.f32.gmra.mrb[0].mxu0 %v1041
    %v1043 = vpop.f32.mrb[0].mxu0
    %v1044 = vadd.f32 %v941, %v1043
    %v1045 = vpop.f32.mrb[0].mxu0
    %1046 = vmatprep.mubr.f32.mxu0 0.0
    %v1047 = vand.u32 %v635, 4294901760
    %v1048 = vsub.f32 %v635, %v1047
    %v1049 = vand.u32 %v1048, 4294901760
    %1050 = vmatmul.mubr.f32.gmra.mrb[0].mxu0 %v1049
    %v1051 = vpop.f32.mrb[0].mxu0
    %v1052 = vadd.f32 %v948, %v1051
    %v1053 = vpop.f32.mrb[0].mxu0
    %1054 = vmatprep.mubr.f32.mxu0 0.0
    %v1055 = vand.u32 %v638, 4294901760
    %v1056 = vsub.f32 %v638, %v1055
    %v1057 = vand.u32 %v1056, 4294901760
    %1058 = vmatmul.mubr.f32.gmra.mrb[0].mxu0 %v1057
    %v1059 = vpop.f32.mrb[0].mxu0
    %v1060 = vadd.f32 %v955, %v1059
    %v1061 = vpop.f32.mrb[0].mxu0
    %1062 = vmatprep.mubr.f32.mxu0 0.0
    %v1063 = vand.u32 %v641, 4294901760
    %v1064 = vsub.f32 %v641, %v1063
    %v1065 = vand.u32 %v1064, 4294901760
    %1066 = vmatmul.mubr.f32.gmra.mrb[0].mxu0 %v1065
    %v1067 = vpop.f32.mrb[0].mxu0
    %v1068 = vadd.f32 %v962, %v1067
    %v1069 = vpop.f32.mrb[0].mxu0
    %1070 = vmatprep.mubr.f32.mxu0 0.0
    %v1071 = vand.u32 %v644, 4294901760
    %v1072 = vsub.f32 %v644, %v1071
    %v1073 = vand.u32 %v1072, 4294901760
    %1074 = vmatmul.mubr.f32.gmra.mrb[0].mxu0 %v1073
    %v1075 = vpop.f32.mrb[0].mxu0
    %v1076 = vadd.f32 %v969, %v1075
    %v1077 = vpop.f32.mrb[0].mxu0
    %1078 = vdwg.mxu0
    %1079 = vmatprep.subr.mxu0 0.0
    %v1080 = vand.u32 %v205, 4294901760
    %v1081 = vsub.f32 %v205, %v1080
    %v1082 = vand.u32 %v1081, 4294901760
    %1083 = vmatpush1.msra.mxu0 %v1082
    %1084 = vmatprep.subr.mxu0 0.0
    %v1085 = vand.u32 %v206, 4294901760
    %v1086 = vsub.f32 %v206, %v1085
    %v1087 = vand.u32 %v1086, 4294901760
    %1088 = vmatpush1.msra.mxu0 %v1087
    %1089 = vmatprep.subr.mxu0 0.0
    %1090 = vmatpush1.msra.mxu0 0.0
    %1091 = vmatprep.subr.mxu0 0.0
    %1092 = vmatpush1.msra.mxu0 0.0
    %1093 = vmatprep.subr.mxu0 0.0
    %1094 = vmatpush1.msra.mxu0 0.0
    %1095 = vmatprep.subr.mxu0 0.0
    %1096 = vmatpush1.msra.mxu0 0.0
    %1097 = vmatprep.subr.mxu0 0.0
    %1098 = vmatpush1.msra.mxu0 0.0
    %1099 = vmatprep.subr.mxu0 0.0
    %1100 = vmatpush1.msra.mxu0 0.0
    %1101 = vmatprep.subr.mxu0 0.0
    %1102 = vmatpush1.msra.mxu0 0.0
    %1103 = vmatprep.subr.mxu0 0.0
    %1104 = vmatpush1.msra.mxu0 0.0
    %1105 = vmatprep.subr.mxu0 0.0
    %1106 = vmatpush1.msra.mxu0 0.0
    %1107 = vmatprep.subr.mxu0 0.0
    %1108 = vmatpush1.msra.mxu0 0.0
    %1109 = vmatprep.subr.mxu0 0.0
    %1110 = vmatpush1.msra.mxu0 0.0
    %1111 = vmatprep.subr.mxu0 0.0
    %1112 = vmatpush1.msra.mxu0 0.0
    %1113 = vmatprep.subr.mxu0 0.0
    %1114 = vmatpush1.msra.mxu0 0.0
    %1115 = vmatprep.subr.mxu0 0.0
    %1116 = vmatpush1.msra.mxu0 0.0
    %1117 = vmatprep.subr.mxu0 0.0
    %1118 = vmatpush1.msra.mxu0 0.0
    %1119 = vmatprep.subr.mxu0 0.0
    %1120 = vmatpush1.msra.mxu0 0.0
    %1121 = vmatprep.subr.mxu0 0.0
    %1122 = vmatpush1.msra.mxu0 0.0
    %1123 = vmatprep.subr.mxu0 0.0
    %1124 = vmatpush1.msra.mxu0 0.0
    %1125 = vmatprep.subr.mxu0 0.0
    %1126 = vmatpush1.msra.mxu0 0.0
    %1127 = vmatprep.subr.mxu0 0.0
    %1128 = vmatpush1.msra.mxu0 0.0
    %1129 = vmatprep.subr.mxu0 0.0
    %1130 = vmatpush1.msra.mxu0 0.0
    %1131 = vmatprep.subr.mxu0 0.0
    %1132 = vmatpush1.msra.mxu0 0.0
    %1133 = vmatprep.subr.mxu0 0.0
    %1134 = vmatpush1.msra.mxu0 0.0
    %1135 = vmatprep.subr.mxu0 0.0
    %1136 = vmatpush1.msra.mxu0 0.0
    %1137 = vmatprep.subr.mxu0 0.0
    %1138 = vmatpush1.msra.mxu0 0.0
    %1139 = vmatprep.subr.mxu0 0.0
    %1140 = vmatpush1.msra.mxu0 0.0
    %1141 = vmatprep.subr.mxu0 0.0
    %1142 = vmatpush1.msra.mxu0 0.0
    %1143 = vmatprep.subr.mxu0 0.0
    %1144 = vmatpush1.msra.mxu0 0.0
    %1145 = vmatprep.subr.mxu0 0.0
    %1146 = vmatpush1.msra.mxu0 0.0
    %1147 = vmatprep.subr.mxu0 0.0
    %1148 = vmatpush1.msra.mxu0 0.0
    %1149 = vmatprep.mubr.f32.mxu0 0.0
    %v1150 = vand.u32 %v632, 4294901760
    %1151 = vmatmul.mubr.f32.gmra.mrb[0].mxu0 %v1150
    %v1152 = vpop.f32.mrb[0].mxu0
    %v1153 = vadd.f32 %v1044, %v1152
    %v1154 = vpop.f32.mrb[0].mxu0
    %1155 = vmatprep.mubr.f32.mxu0 0.0
    %v1156 = vand.u32 %v635, 4294901760
    %1157 = vmatmul.mubr.f32.gmra.mrb[0].mxu0 %v1156
    %v1158 = vpop.f32.mrb[0].mxu0
    %v1159 = vadd.f32 %v1052, %v1158
    %v1160 = vpop.f32.mrb[0].mxu0
    %1161 = vmatprep.mubr.f32.mxu0 0.0
    %v1162 = vand.u32 %v638, 4294901760
    %1163 = vmatmul.mubr.f32.gmra.mrb[0].mxu0 %v1162
    %v1164 = vpop.f32.mrb[0].mxu0
    %v1165 = vadd.f32 %v1060, %v1164
    %v1166 = vpop.f32.mrb[0].mxu0
    %1167 = vmatprep.mubr.f32.mxu0 0.0
    %v1168 = vand.u32 %v641, 4294901760
    %1169 = vmatmul.mubr.f32.gmra.mrb[0].mxu0 %v1168
    %v1170 = vpop.f32.mrb[0].mxu0
    %v1171 = vadd.f32 %v1068, %v1170
    %v1172 = vpop.f32.mrb[0].mxu0
    %1173 = vmatprep.mubr.f32.mxu0 0.0
    %v1174 = vand.u32 %v644, 4294901760
    %1175 = vmatmul.mubr.f32.gmra.mrb[0].mxu0 %v1174
    %v1176 = vpop.f32.mrb[0].mxu0
    %v1177 = vadd.f32 %v1076, %v1176
    %v1178 = vpop.f32.mrb[0].mxu0
    %1179 = vdwg.mxu0
    %1180 = vmatprep.subr.mxu0 0.0
    %v1181 = vand.u32 %v205, 4294901760
    %1182 = vmatpush1.msra.mxu0 %v1181
    %1183 = vmatprep.subr.mxu0 0.0
    %v1184 = vand.u32 %v206, 4294901760
    %1185 = vmatpush1.msra.mxu0 %v1184
    %1186 = vmatprep.subr.mxu0 0.0
    %1187 = vmatpush1.msra.mxu0 0.0
    %1188 = vmatprep.subr.mxu0 0.0
    %1189 = vmatpush1.msra.mxu0 0.0
    %1190 = vmatprep.subr.mxu0 0.0
    %1191 = vmatpush1.msra.mxu0 0.0
    %1192 = vmatprep.subr.mxu0 0.0
    %1193 = vmatpush1.msra.mxu0 0.0
    %1194 = vmatprep.subr.mxu0 0.0
    %1195 = vmatpush1.msra.mxu0 0.0
    %1196 = vmatprep.subr.mxu0 0.0
    %1197 = vmatpush1.msra.mxu0 0.0
    %1198 = vmatprep.subr.mxu0 0.0
    %1199 = vmatpush1.msra.mxu0 0.0
    %1200 = vmatprep.subr.mxu0 0.0
    %1201 = vmatpush1.msra.mxu0 0.0
    %1202 = vmatprep.subr.mxu0 0.0
    %1203 = vmatpush1.msra.mxu0 0.0
    %1204 = vmatprep.subr.mxu0 0.0
    %1205 = vmatpush1.msra.mxu0 0.0
    %1206 = vmatprep.subr.mxu0 0.0
    %1207 = vmatpush1.msra.mxu0 0.0
    %1208 = vmatprep.subr.mxu0 0.0
    %1209 = vmatpush1.msra.mxu0 0.0
    %1210 = vmatprep.subr.mxu0 0.0
    %1211 = vmatpush1.msra.mxu0 0.0
    %1212 = vmatprep.subr.mxu0 0.0
    %1213 = vmatpush1.msra.mxu0 0.0
    %1214 = vmatprep.subr.mxu0 0.0
    %1215 = vmatpush1.msra.mxu0 0.0
    %1216 = vmatprep.subr.mxu0 0.0
    %1217 = vmatpush1.msra.mxu0 0.0
    %1218 = vmatprep.subr.mxu0 0.0
    %1219 = vmatpush1.msra.mxu0 0.0
    %1220 = vmatprep.subr.mxu0 0.0
    %1221 = vmatpush1.msra.mxu0 0.0
    %1222 = vmatprep.subr.mxu0 0.0
    %1223 = vmatpush1.msra.mxu0 0.0
    %1224 = vmatprep.subr.mxu0 0.0
    %1225 = vmatpush1.msra.mxu0 0.0
    %1226 = vmatprep.subr.mxu0 0.0
    %1227 = vmatpush1.msra.mxu0 0.0
    %1228 = vmatprep.subr.mxu0 0.0
    %1229 = vmatpush1.msra.mxu0 0.0
    %1230 = vmatprep.subr.mxu0 0.0
    %1231 = vmatpush1.msra.mxu0 0.0
    %1232 = vmatprep.subr.mxu0 0.0
    %1233 = vmatpush1.msra.mxu0 0.0
    %1234 = vmatprep.subr.mxu0 0.0
    %1235 = vmatpush1.msra.mxu0 0.0
    %1236 = vmatprep.subr.mxu0 0.0
    %1237 = vmatpush1.msra.mxu0 0.0
    %1238 = vmatprep.subr.mxu0 0.0
    %1239 = vmatpush1.msra.mxu0 0.0
    %1240 = vmatprep.subr.mxu0 0.0
    %1241 = vmatpush1.msra.mxu0 0.0
    %1242 = vmatprep.subr.mxu0 0.0
    %1243 = vmatpush1.msra.mxu0 0.0
    %1244 = vmatprep.subr.mxu0 0.0
    %1245 = vmatpush1.msra.mxu0 0.0
    %1246 = vmatprep.mubr.f32.mxu0 0.0
    %v1247 = vand.u32 %v632, 4294901760
    %1248 = vmatmul.mubr.f32.gmra.mrb[0].mxu0 %v1247
    %v1249 = vpop.f32.mrb[0].mxu0
    %v1250 = vadd.f32 %v1153, %v1249
    %v1251 = vpop.f32.mrb[0].mxu0
    %1252 = vmatprep.mubr.f32.mxu0 0.0
    %v1253 = vand.u32 %v635, 4294901760
    %1254 = vmatmul.mubr.f32.gmra.mrb[0].mxu0 %v1253
    %v1255 = vpop.f32.mrb[0].mxu0
    %v1256 = vadd.f32 %v1159, %v1255
    %v1257 = vpop.f32.mrb[0].mxu0
    %1258 = vmatprep.mubr.f32.mxu0 0.0
    %v1259 = vand.u32 %v638, 4294901760
    %1260 = vmatmul.mubr.f32.gmra.mrb[0].mxu0 %v1259
    %v1261 = vpop.f32.mrb[0].mxu0
    %v1262 = vadd.f32 %v1165, %v1261
    %v1263 = vpop.f32.mrb[0].mxu0
    %1264 = vmatprep.mubr.f32.mxu0 0.0
    %v1265 = vand.u32 %v641, 4294901760
    %1266 = vmatmul.mubr.f32.gmra.mrb[0].mxu0 %v1265
    %v1267 = vpop.f32.mrb[0].mxu0
    %v1268 = vadd.f32 %v1171, %v1267
    %v1269 = vpop.f32.mrb[0].mxu0
    %1270 = vmatprep.mubr.f32.mxu0 0.0
    %v1271 = vand.u32 %v644, 4294901760
    %1272 = vmatmul.mubr.f32.gmra.mrb[0].mxu0 %v1271
    %v1273 = vpop.f32.mrb[0].mxu0
    %v1274 = vadd.f32 %v1177, %v1273
    %v1275 = vpop.f32.mrb[0].mxu0
    %1276 = vdwg.mxu0
    %v1277 = vmax.f32 %v1250, 0.0
    %v1278 = vmax.f32 %v1256, 0.0
    %v1279 = vmax.f32 %v1262, 0.0
    %v1280 = vmax.f32 %v1268, 0.0
    %v1281 = vmax.f32 %v1274, 0.0
    %vm1282 = vcmask 326656
    %v1284 = vsel %vm1282, %v235, 0
    %v1287 = vsel %vm1282, %v236, 0
    %1289 = vmatprep.subr.mxu0 0.0
    %v1290 = vand.u32 %v1277, 4294901760
    %1291 = vmatpush1.msra.mxu0 %v1290
    %1292 = vmatprep.subr.mxu0 0.0
    %v1293 = vand.u32 %v1278, 4294901760
    %1294 = vmatpush1.msra.mxu0 %v1293
    %1295 = vmatprep.subr.mxu0 0.0
    %v1296 = vand.u32 %v1279, 4294901760
    %1297 = vmatpush1.msra.mxu0 %v1296
    %1298 = vmatprep.subr.mxu0 0.0
    %v1299 = vand.u32 %v1280, 4294901760
    %1300 = vmatpush1.msra.mxu0 %v1299
    %1301 = vmatprep.subr.mxu0 0.0
    %v1302 = vand.u32 %v1281, 4294901760
    %1303 = vmatpush1.msra.mxu0 %v1302
    %1304 = vmatprep.subr.mxu0 0.0
    %1305 = vmatpush1.msra.mxu0 0.0
    %1306 = vmatprep.subr.mxu0 0.0
    %1307 = vmatpush1.msra.mxu0 0.0
    %1308 = vmatprep.subr.mxu0 0.0
    %1309 = vmatpush1.msra.mxu0 0.0
    %1310 = vmatprep.subr.mxu0 0.0
    %1311 = vmatpush1.msra.mxu0 0.0
    %1312 = vmatprep.subr.mxu0 0.0
    %1313 = vmatpush1.msra.mxu0 0.0
    %1314 = vmatprep.subr.mxu0 0.0
    %1315 = vmatpush1.msra.mxu0 0.0
    %1316 = vmatprep.subr.mxu0 0.0
    %1317 = vmatpush1.msra.mxu0 0.0
    %1318 = vmatprep.subr.mxu0 0.0
    %1319 = vmatpush1.msra.mxu0 0.0
    %1320 = vmatprep.subr.mxu0 0.0
    %1321 = vmatpush1.msra.mxu0 0.0
    %1322 = vmatprep.subr.mxu0 0.0
    %1323 = vmatpush1.msra.mxu0 0.0
    %1324 = vmatprep.subr.mxu0 0.0
    %1325 = vmatpush1.msra.mxu0 0.0
    %1326 = vmatprep.subr.mxu0 0.0
    %1327 = vmatpush1.msra.mxu0 0.0
    %1328 = vmatprep.subr.mxu0 0.0
    %1329 = vmatpush1.msra.mxu0 0.0
    %1330 = vmatprep.subr.mxu0 0.0
    %1331 = vmatpush1.msra.mxu0 0.0
    %1332 = vmatprep.subr.mxu0 0.0
    %1333 = vmatpush1.msra.mxu0 0.0
    %1334 = vmatprep.subr.mxu0 0.0
    %1335 = vmatpush1.msra.mxu0 0.0
    %1336 = vmatprep.subr.mxu0 0.0
    %1337 = vmatpush1.msra.mxu0 0.0
    %1338 = vmatprep.subr.mxu0 0.0
    %1339 = vmatpush1.msra.mxu0 0.0
    %1340 = vmatprep.subr.mxu0 0.0
    %1341 = vmatpush1.msra.mxu0 0.0
    %1342 = vmatprep.subr.mxu0 0.0
    %1343 = vmatpush1.msra.mxu0 0.0
    %1344 = vmatprep.subr.mxu0 0.0
    %1345 = vmatpush1.msra.mxu0 0.0
    %1346 = vmatprep.subr.mxu0 0.0
    %1347 = vmatpush1.msra.mxu0 0.0
    %1348 = vmatprep.subr.mxu0 0.0
    %1349 = vmatpush1.msra.mxu0 0.0
    %1350 = vmatprep.subr.mxu0 0.0
    %1351 = vmatpush1.msra.mxu0 0.0
    %1352 = vmatprep.subr.mxu0 0.0
    %1353 = vmatpush1.msra.mxu0 0.0
    %1354 = vmatprep.subr.mxu0 0.0
    %1355 = vmatpush1.msra.mxu0 0.0
    %1356 = vmatprep.subr.mxu0 0.0
    %1357 = vmatpush1.msra.mxu0 0.0
    %1358 = vmatprep.mubr.f32.mxu0 0.0
    %v1359 = vand.u32 %v1284, 4294901760
    %v1360 = vsub.f32 %v1284, %v1359
    %v1361 = vand.u32 %v1360, 4294901760
    %v1362 = vsub.f32 %v1360, %v1361
    %v1363 = vand.u32 %v1362, 4294901760
    %1364 = vmatmul.mubr.f32.gmra.mrb[0].mxu0 %v1363
    %v1365 = vpop.f32.mrb[0].mxu0
    %v1366 = vadd.f32 0.0, %v1365
    %v1367 = vpop.f32.mrb[0].mxu0
    %1368 = vmatprep.mubr.f32.mxu0 0.0
    %v1369 = vand.u32 %v1287, 4294901760
    %v1370 = vsub.f32 %v1287, %v1369
    %v1371 = vand.u32 %v1370, 4294901760
    %v1372 = vsub.f32 %v1370, %v1371
    %v1373 = vand.u32 %v1372, 4294901760
    %1374 = vmatmul.mubr.f32.gmra.mrb[0].mxu0 %v1373
    %v1375 = vpop.f32.mrb[0].mxu0
    %v1376 = vadd.f32 0.0, %v1375
    %v1377 = vpop.f32.mrb[0].mxu0
    %1378 = vdwg.mxu0
    %1379 = vmatprep.subr.mxu0 0.0
    %v1380 = vand.u32 %v1277, 4294901760
    %v1381 = vsub.f32 %v1277, %v1380
    %v1382 = vand.u32 %v1381, 4294901760
    %v1383 = vsub.f32 %v1381, %v1382
    %v1384 = vand.u32 %v1383, 4294901760
    %1385 = vmatpush1.msra.mxu0 %v1384
    %1386 = vmatprep.subr.mxu0 0.0
    %v1387 = vand.u32 %v1278, 4294901760
    %v1388 = vsub.f32 %v1278, %v1387
    %v1389 = vand.u32 %v1388, 4294901760
    %v1390 = vsub.f32 %v1388, %v1389
    %v1391 = vand.u32 %v1390, 4294901760
    %1392 = vmatpush1.msra.mxu0 %v1391
    %1393 = vmatprep.subr.mxu0 0.0
    %v1394 = vand.u32 %v1279, 4294901760
    %v1395 = vsub.f32 %v1279, %v1394
    %v1396 = vand.u32 %v1395, 4294901760
    %v1397 = vsub.f32 %v1395, %v1396
    %v1398 = vand.u32 %v1397, 4294901760
    %1399 = vmatpush1.msra.mxu0 %v1398
    %1400 = vmatprep.subr.mxu0 0.0
    %v1401 = vand.u32 %v1280, 4294901760
    %v1402 = vsub.f32 %v1280, %v1401
    %v1403 = vand.u32 %v1402, 4294901760
    %v1404 = vsub.f32 %v1402, %v1403
    %v1405 = vand.u32 %v1404, 4294901760
    %1406 = vmatpush1.msra.mxu0 %v1405
    %1407 = vmatprep.subr.mxu0 0.0
    %v1408 = vand.u32 %v1281, 4294901760
    %v1409 = vsub.f32 %v1281, %v1408
    %v1410 = vand.u32 %v1409, 4294901760
    %v1411 = vsub.f32 %v1409, %v1410
    %v1412 = vand.u32 %v1411, 4294901760
    %1413 = vmatpush1.msra.mxu0 %v1412
    %1414 = vmatprep.subr.mxu0 0.0
    %1415 = vmatpush1.msra.mxu0 0.0
    %1416 = vmatprep.subr.mxu0 0.0
    %1417 = vmatpush1.msra.mxu0 0.0
    %1418 = vmatprep.subr.mxu0 0.0
    %1419 = vmatpush1.msra.mxu0 0.0
    %1420 = vmatprep.subr.mxu0 0.0
    %1421 = vmatpush1.msra.mxu0 0.0
    %1422 = vmatprep.subr.mxu0 0.0
    %1423 = vmatpush1.msra.mxu0 0.0
    %1424 = vmatprep.subr.mxu0 0.0
    %1425 = vmatpush1.msra.mxu0 0.0
    %1426 = vmatprep.subr.mxu0 0.0
    %1427 = vmatpush1.msra.mxu0 0.0
    %1428 = vmatprep.subr.mxu0 0.0
    %1429 = vmatpush1.msra.mxu0 0.0
    %1430 = vmatprep.subr.mxu0 0.0
    %1431 = vmatpush1.msra.mxu0 0.0
    %1432 = vmatprep.subr.mxu0 0.0
    %1433 = vmatpush1.msra.mxu0 0.0
    %1434 = vmatprep.subr.mxu0 0.0
    %1435 = vmatpush1.msra.mxu0 0.0
    %1436 = vmatprep.subr.mxu0 0.0
    %1437 = vmatpush1.msra.mxu0 0.0
    %1438 = vmatprep.subr.mxu0 0.0
    %1439 = vmatpush1.msra.mxu0 0.0
    %1440 = vmatprep.subr.mxu0 0.0
    %1441 = vmatpush1.msra.mxu0 0.0
    %1442 = vmatprep.subr.mxu0 0.0
    %1443 = vmatpush1.msra.mxu0 0.0
    %1444 = vmatprep.subr.mxu0 0.0
    %1445 = vmatpush1.msra.mxu0 0.0
    %1446 = vmatprep.subr.mxu0 0.0
    %1447 = vmatpush1.msra.mxu0 0.0
    %1448 = vmatprep.subr.mxu0 0.0
    %1449 = vmatpush1.msra.mxu0 0.0
    %1450 = vmatprep.subr.mxu0 0.0
    %1451 = vmatpush1.msra.mxu0 0.0
    %1452 = vmatprep.subr.mxu0 0.0
    %1453 = vmatpush1.msra.mxu0 0.0
    %1454 = vmatprep.subr.mxu0 0.0
    %1455 = vmatpush1.msra.mxu0 0.0
    %1456 = vmatprep.subr.mxu0 0.0
    %1457 = vmatpush1.msra.mxu0 0.0
    %1458 = vmatprep.subr.mxu0 0.0
    %1459 = vmatpush1.msra.mxu0 0.0
    %1460 = vmatprep.subr.mxu0 0.0
    %1461 = vmatpush1.msra.mxu0 0.0
    %1462 = vmatprep.subr.mxu0 0.0
    %1463 = vmatpush1.msra.mxu0 0.0
    %1464 = vmatprep.subr.mxu0 0.0
    %1465 = vmatpush1.msra.mxu0 0.0
    %1466 = vmatprep.subr.mxu0 0.0
    %1467 = vmatpush1.msra.mxu0 0.0
    %1468 = vmatprep.mubr.f32.mxu0 0.0
    %v1469 = vand.u32 %v1284, 4294901760
    %1470 = vmatmul.mubr.f32.gmra.mrb[0].mxu0 %v1469
    %v1471 = vpop.f32.mrb[0].mxu0
    %v1472 = vadd.f32 %v1366, %v1471
    %v1473 = vpop.f32.mrb[0].mxu0
    %1474 = vmatprep.mubr.f32.mxu0 0.0
    %v1475 = vand.u32 %v1287, 4294901760
    %1476 = vmatmul.mubr.f32.gmra.mrb[0].mxu0 %v1475
    %v1477 = vpop.f32.mrb[0].mxu0
    %v1478 = vadd.f32 %v1376, %v1477
    %v1479 = vpop.f32.mrb[0].mxu0
    %1480 = vdwg.mxu0
    %1481 = vmatprep.subr.mxu0 0.0
    %v1482 = vand.u32 %v1277, 4294901760
    %v1483 = vsub.f32 %v1277, %v1482
    %1484 = vmatpush1.msra.mxu0 %v1483
    %1485 = vmatprep.subr.mxu0 0.0
    %v1486 = vand.u32 %v1278, 4294901760
    %v1487 = vsub.f32 %v1278, %v1486
    %1488 = vmatpush1.msra.mxu0 %v1487
    %1489 = vmatprep.subr.mxu0 0.0
    %v1490 = vand.u32 %v1279, 4294901760
    %v1491 = vsub.f32 %v1279, %v1490
    %1492 = vmatpush1.msra.mxu0 %v1491
    %1493 = vmatprep.subr.mxu0 0.0
    %v1494 = vand.u32 %v1280, 4294901760
    %v1495 = vsub.f32 %v1280, %v1494
    %1496 = vmatpush1.msra.mxu0 %v1495
    %1497 = vmatprep.subr.mxu0 0.0
    %v1498 = vand.u32 %v1281, 4294901760
    %v1499 = vsub.f32 %v1281, %v1498
    %1500 = vmatpush1.msra.mxu0 %v1499
    %1501 = vmatprep.subr.mxu0 0.0
    %1502 = vmatpush1.msra.mxu0 0.0
    %1503 = vmatprep.subr.mxu0 0.0
    %1504 = vmatpush1.msra.mxu0 0.0
    %1505 = vmatprep.subr.mxu0 0.0
    %1506 = vmatpush1.msra.mxu0 0.0
    %1507 = vmatprep.subr.mxu0 0.0
    %1508 = vmatpush1.msra.mxu0 0.0
    %1509 = vmatprep.subr.mxu0 0.0
    %1510 = vmatpush1.msra.mxu0 0.0
    %1511 = vmatprep.subr.mxu0 0.0
    %1512 = vmatpush1.msra.mxu0 0.0
    %1513 = vmatprep.subr.mxu0 0.0
    %1514 = vmatpush1.msra.mxu0 0.0
    %1515 = vmatprep.subr.mxu0 0.0
    %1516 = vmatpush1.msra.mxu0 0.0
    %1517 = vmatprep.subr.mxu0 0.0
    %1518 = vmatpush1.msra.mxu0 0.0
    %1519 = vmatprep.subr.mxu0 0.0
    %1520 = vmatpush1.msra.mxu0 0.0
    %1521 = vmatprep.subr.mxu0 0.0
    %1522 = vmatpush1.msra.mxu0 0.0
    %1523 = vmatprep.subr.mxu0 0.0
    %1524 = vmatpush1.msra.mxu0 0.0
    %1525 = vmatprep.subr.mxu0 0.0
    %1526 = vmatpush1.msra.mxu0 0.0
    %1527 = vmatprep.subr.mxu0 0.0
    %1528 = vmatpush1.msra.mxu0 0.0
    %1529 = vmatprep.subr.mxu0 0.0
    %1530 = vmatpush1.msra.mxu0 0.0
    %1531 = vmatprep.subr.mxu0 0.0
    %1532 = vmatpush1.msra.mxu0 0.0
    %1533 = vmatprep.subr.mxu0 0.0
    %1534 = vmatpush1.msra.mxu0 0.0
    %1535 = vmatprep.subr.mxu0 0.0
    %1536 = vmatpush1.msra.mxu0 0.0
    %1537 = vmatprep.subr.mxu0 0.0
    %1538 = vmatpush1.msra.mxu0 0.0
    %1539 = vmatprep.subr.mxu0 0.0
    %1540 = vmatpush1.msra.mxu0 0.0
    %1541 = vmatprep.subr.mxu0 0.0
    %1542 = vmatpush1.msra.mxu0 0.0
    %1543 = vmatprep.subr.mxu0 0.0
    %1544 = vmatpush1.msra.mxu0 0.0
    %1545 = vmatprep.subr.mxu0 0.0
    %1546 = vmatpush1.msra.mxu0 0.0
    %1547 = vmatprep.subr.mxu0 0.0
    %1548 = vmatpush1.msra.mxu0 0.0
    %1549 = vmatprep.subr.mxu0 0.0
    %1550 = vmatpush1.msra.mxu0 0.0
    %1551 = vmatprep.subr.mxu0 0.0
    %1552 = vmatpush1.msra.mxu0 0.0
    %1553 = vmatprep.subr.mxu0 0.0
    %1554 = vmatpush1.msra.mxu0 0.0
    %1555 = vmatprep.mubr.f32.mxu0 0.0
    %v1556 = vand.u32 %v1284, 4294901760
    %v1557 = vsub.f32 %v1284, %v1556
    %1558 = vmatmul.mubr.f32.gmra.mrb[0].mxu0 %v1557
    %v1559 = vpop.f32.mrb[0].mxu0
    %v1560 = vadd.f32 %v1472, %v1559
    %v1561 = vpop.f32.mrb[0].mxu0
    %1562 = vmatprep.mubr.f32.mxu0 0.0
    %v1563 = vand.u32 %v1287, 4294901760
    %v1564 = vsub.f32 %v1287, %v1563
    %1565 = vmatmul.mubr.f32.gmra.mrb[0].mxu0 %v1564
    %v1566 = vpop.f32.mrb[0].mxu0
    %v1567 = vadd.f32 %v1478, %v1566
    %v1568 = vpop.f32.mrb[0].mxu0
    %1569 = vdwg.mxu0
    %1570 = vmatprep.subr.mxu0 0.0
    %v1571 = vand.u32 %v1277, 4294901760
    %1572 = vmatpush1.msra.mxu0 %v1571
    %1573 = vmatprep.subr.mxu0 0.0
    %v1574 = vand.u32 %v1278, 4294901760
    %1575 = vmatpush1.msra.mxu0 %v1574
    %1576 = vmatprep.subr.mxu0 0.0
    %v1577 = vand.u32 %v1279, 4294901760
    %1578 = vmatpush1.msra.mxu0 %v1577
    %1579 = vmatprep.subr.mxu0 0.0
    %v1580 = vand.u32 %v1280, 4294901760
    %1581 = vmatpush1.msra.mxu0 %v1580
    %1582 = vmatprep.subr.mxu0 0.0
    %v1583 = vand.u32 %v1281, 4294901760
    %1584 = vmatpush1.msra.mxu0 %v1583
    %1585 = vmatprep.subr.mxu0 0.0
    %1586 = vmatpush1.msra.mxu0 0.0
    %1587 = vmatprep.subr.mxu0 0.0
    %1588 = vmatpush1.msra.mxu0 0.0
    %1589 = vmatprep.subr.mxu0 0.0
    %1590 = vmatpush1.msra.mxu0 0.0
    %1591 = vmatprep.subr.mxu0 0.0
    %1592 = vmatpush1.msra.mxu0 0.0
    %1593 = vmatprep.subr.mxu0 0.0
    %1594 = vmatpush1.msra.mxu0 0.0
    %1595 = vmatprep.subr.mxu0 0.0
    %1596 = vmatpush1.msra.mxu0 0.0
    %1597 = vmatprep.subr.mxu0 0.0
    %1598 = vmatpush1.msra.mxu0 0.0
    %1599 = vmatprep.subr.mxu0 0.0
    %1600 = vmatpush1.msra.mxu0 0.0
    %1601 = vmatprep.subr.mxu0 0.0
    %1602 = vmatpush1.msra.mxu0 0.0
    %1603 = vmatprep.subr.mxu0 0.0
    %1604 = vmatpush1.msra.mxu0 0.0
    %1605 = vmatprep.subr.mxu0 0.0
    %1606 = vmatpush1.msra.mxu0 0.0
    %1607 = vmatprep.subr.mxu0 0.0
    %1608 = vmatpush1.msra.mxu0 0.0
    %1609 = vmatprep.subr.mxu0 0.0
    %1610 = vmatpush1.msra.mxu0 0.0
    %1611 = vmatprep.subr.mxu0 0.0
    %1612 = vmatpush1.msra.mxu0 0.0
    %1613 = vmatprep.subr.mxu0 0.0
    %1614 = vmatpush1.msra.mxu0 0.0
    %1615 = vmatprep.subr.mxu0 0.0
    %1616 = vmatpush1.msra.mxu0 0.0
    %1617 = vmatprep.subr.mxu0 0.0
    %1618 = vmatpush1.msra.mxu0 0.0
    %1619 = vmatprep.subr.mxu0 0.0
    %1620 = vmatpush1.msra.mxu0 0.0
    %1621 = vmatprep.subr.mxu0 0.0
    %1622 = vmatpush1.msra.mxu0 0.0
    %1623 = vmatprep.subr.mxu0 0.0
    %1624 = vmatpush1.msra.mxu0 0.0
    %1625 = vmatprep.subr.mxu0 0.0
    %1626 = vmatpush1.msra.mxu0 0.0
    %1627 = vmatprep.subr.mxu0 0.0
    %1628 = vmatpush1.msra.mxu0 0.0
    %1629 = vmatprep.subr.mxu0 0.0
    %1630 = vmatpush1.msra.mxu0 0.0
    %1631 = vmatprep.subr.mxu0 0.0
    %1632 = vmatpush1.msra.mxu0 0.0
    %1633 = vmatprep.subr.mxu0 0.0
    %1634 = vmatpush1.msra.mxu0 0.0
    %1635 = vmatprep.subr.mxu0 0.0
    %1636 = vmatpush1.msra.mxu0 0.0
    %1637 = vmatprep.subr.mxu0 0.0
    %1638 = vmatpush1.msra.mxu0 0.0
    %1639 = vmatprep.mubr.f32.mxu0 0.0
    %v1640 = vand.u32 %v1284, 4294901760
    %v1641 = vsub.f32 %v1284, %v1640
    %v1642 = vand.u32 %v1641, 4294901760
    %1643 = vmatmul.mubr.f32.gmra.mrb[0].mxu0 %v1642
    %v1644 = vpop.f32.mrb[0].mxu0
    %v1645 = vadd.f32 %v1560, %v1644
    %v1646 = vpop.f32.mrb[0].mxu0
    %1647 = vmatprep.mubr.f32.mxu0 0.0
    %v1648 = vand.u32 %v1287, 4294901760
    %v1649 = vsub.f32 %v1287, %v1648
    %v1650 = vand.u32 %v1649, 4294901760
    %1651 = vmatmul.mubr.f32.gmra.mrb[0].mxu0 %v1650
    %v1652 = vpop.f32.mrb[0].mxu0
    %v1653 = vadd.f32 %v1567, %v1652
    %v1654 = vpop.f32.mrb[0].mxu0
    %1655 = vdwg.mxu0
    %1656 = vmatprep.subr.mxu0 0.0
    %v1657 = vand.u32 %v1277, 4294901760
    %v1658 = vsub.f32 %v1277, %v1657
    %v1659 = vand.u32 %v1658, 4294901760
    %1660 = vmatpush1.msra.mxu0 %v1659
    %1661 = vmatprep.subr.mxu0 0.0
    %v1662 = vand.u32 %v1278, 4294901760
    %v1663 = vsub.f32 %v1278, %v1662
    %v1664 = vand.u32 %v1663, 4294901760
    %1665 = vmatpush1.msra.mxu0 %v1664
    %1666 = vmatprep.subr.mxu0 0.0
    %v1667 = vand.u32 %v1279, 4294901760
    %v1668 = vsub.f32 %v1279, %v1667
    %v1669 = vand.u32 %v1668, 4294901760
    %1670 = vmatpush1.msra.mxu0 %v1669
    %1671 = vmatprep.subr.mxu0 0.0
    %v1672 = vand.u32 %v1280, 4294901760
    %v1673 = vsub.f32 %v1280, %v1672
    %v1674 = vand.u32 %v1673, 4294901760
    %1675 = vmatpush1.msra.mxu0 %v1674
    %1676 = vmatprep.subr.mxu0 0.0
    %v1677 = vand.u32 %v1281, 4294901760
    %v1678 = vsub.f32 %v1281, %v1677
    %v1679 = vand.u32 %v1678, 4294901760
    %1680 = vmatpush1.msra.mxu0 %v1679
    %1681 = vmatprep.subr.mxu0 0.0
    %1682 = vmatpush1.msra.mxu0 0.0
    %1683 = vmatprep.subr.mxu0 0.0
    %1684 = vmatpush1.msra.mxu0 0.0
    %1685 = vmatprep.subr.mxu0 0.0
    %1686 = vmatpush1.msra.mxu0 0.0
    %1687 = vmatprep.subr.mxu0 0.0
    %1688 = vmatpush1.msra.mxu0 0.0
    %1689 = vmatprep.subr.mxu0 0.0
    %1690 = vmatpush1.msra.mxu0 0.0
    %1691 = vmatprep.subr.mxu0 0.0
    %1692 = vmatpush1.msra.mxu0 0.0
    %1693 = vmatprep.subr.mxu0 0.0
    %1694 = vmatpush1.msra.mxu0 0.0
    %1695 = vmatprep.subr.mxu0 0.0
    %1696 = vmatpush1.msra.mxu0 0.0
    %1697 = vmatprep.subr.mxu0 0.0
    %1698 = vmatpush1.msra.mxu0 0.0
    %1699 = vmatprep.subr.mxu0 0.0
    %1700 = vmatpush1.msra.mxu0 0.0
    %1701 = vmatprep.subr.mxu0 0.0
    %1702 = vmatpush1.msra.mxu0 0.0
    %1703 = vmatprep.subr.mxu0 0.0
    %1704 = vmatpush1.msra.mxu0 0.0
    %1705 = vmatprep.subr.mxu0 0.0
    %1706 = vmatpush1.msra.mxu0 0.0
    %1707 = vmatprep.subr.mxu0 0.0
    %1708 = vmatpush1.msra.mxu0 0.0
    %1709 = vmatprep.subr.mxu0 0.0
    %1710 = vmatpush1.msra.mxu0 0.0
    %1711 = vmatprep.subr.mxu0 0.0
    %1712 = vmatpush1.msra.mxu0 0.0
    %1713 = vmatprep.subr.mxu0 0.0
    %1714 = vmatpush1.msra.mxu0 0.0
    %1715 = vmatprep.subr.mxu0 0.0
    %1716 = vmatpush1.msra.mxu0 0.0
    %1717 = vmatprep.subr.mxu0 0.0
    %1718 = vmatpush1.msra.mxu0 0.0
    %1719 = vmatprep.subr.mxu0 0.0
    %1720 = vmatpush1.msra.mxu0 0.0
    %1721 = vmatprep.subr.mxu0 0.0
    %1722 = vmatpush1.msra.mxu0 0.0
    %1723 = vmatprep.subr.mxu0 0.0
    %1724 = vmatpush1.msra.mxu0 0.0
    %1725 = vmatprep.subr.mxu0 0.0
    %1726 = vmatpush1.msra.mxu0 0.0
    %1727 = vmatprep.subr.mxu0 0.0
    %1728 = vmatpush1.msra.mxu0 0.0
    %1729 = vmatprep.subr.mxu0 0.0
    %1730 = vmatpush1.msra.mxu0 0.0
    %1731 = vmatprep.subr.mxu0 0.0
    %1732 = vmatpush1.msra.mxu0 0.0
    %1733 = vmatprep.subr.mxu0 0.0
    %1734 = vmatpush1.msra.mxu0 0.0
    %1735 = vmatprep.mubr.f32.mxu0 0.0
    %v1736 = vand.u32 %v1284, 4294901760
    %1737 = vmatmul.mubr.f32.gmra.mrb[0].mxu0 %v1736
    %v1738 = vpop.f32.mrb[0].mxu0
    %v1739 = vadd.f32 %v1645, %v1738
    %v1740 = vpop.f32.mrb[0].mxu0
    %1741 = vmatprep.mubr.f32.mxu0 0.0
    %v1742 = vand.u32 %v1287, 4294901760
    %1743 = vmatmul.mubr.f32.gmra.mrb[0].mxu0 %v1742
    %v1744 = vpop.f32.mrb[0].mxu0
    %v1745 = vadd.f32 %v1653, %v1744
    %v1746 = vpop.f32.mrb[0].mxu0
    %1747 = vdwg.mxu0
    %1748 = vmatprep.subr.mxu0 0.0
    %v1749 = vand.u32 %v1277, 4294901760
    %1750 = vmatpush1.msra.mxu0 %v1749
    %1751 = vmatprep.subr.mxu0 0.0
    %v1752 = vand.u32 %v1278, 4294901760
    %1753 = vmatpush1.msra.mxu0 %v1752
    %1754 = vmatprep.subr.mxu0 0.0
    %v1755 = vand.u32 %v1279, 4294901760
    %1756 = vmatpush1.msra.mxu0 %v1755
    %1757 = vmatprep.subr.mxu0 0.0
    %v1758 = vand.u32 %v1280, 4294901760
    %1759 = vmatpush1.msra.mxu0 %v1758
    %1760 = vmatprep.subr.mxu0 0.0
    %v1761 = vand.u32 %v1281, 4294901760
    %1762 = vmatpush1.msra.mxu0 %v1761
    %1763 = vmatprep.subr.mxu0 0.0
    %1764 = vmatpush1.msra.mxu0 0.0
    %1765 = vmatprep.subr.mxu0 0.0
    %1766 = vmatpush1.msra.mxu0 0.0
    %1767 = vmatprep.subr.mxu0 0.0
    %1768 = vmatpush1.msra.mxu0 0.0
    %1769 = vmatprep.subr.mxu0 0.0
    %1770 = vmatpush1.msra.mxu0 0.0
    %1771 = vmatprep.subr.mxu0 0.0
    %1772 = vmatpush1.msra.mxu0 0.0
    %1773 = vmatprep.subr.mxu0 0.0
    %1774 = vmatpush1.msra.mxu0 0.0
    %1775 = vmatprep.subr.mxu0 0.0
    %1776 = vmatpush1.msra.mxu0 0.0
    %1777 = vmatprep.subr.mxu0 0.0
    %1778 = vmatpush1.msra.mxu0 0.0
    %1779 = vmatprep.subr.mxu0 0.0
    %1780 = vmatpush1.msra.mxu0 0.0
    %1781 = vmatprep.subr.mxu0 0.0
    %1782 = vmatpush1.msra.mxu0 0.0
    %1783 = vmatprep.subr.mxu0 0.0
    %1784 = vmatpush1.msra.mxu0 0.0
    %1785 = vmatprep.subr.mxu0 0.0
    %1786 = vmatpush1.msra.mxu0 0.0
    %1787 = vmatprep.subr.mxu0 0.0
    %1788 = vmatpush1.msra.mxu0 0.0
    %1789 = vmatprep.subr.mxu0 0.0
    %1790 = vmatpush1.msra.mxu0 0.0
    %1791 = vmatprep.subr.mxu0 0.0
    %1792 = vmatpush1.msra.mxu0 0.0
    %1793 = vmatprep.subr.mxu0 0.0
    %1794 = vmatpush1.msra.mxu0 0.0
    %1795 = vmatprep.subr.mxu0 0.0
    %1796 = vmatpush1.msra.mxu0 0.0
    %1797 = vmatprep.subr.mxu0 0.0
    %1798 = vmatpush1.msra.mxu0 0.0
    %1799 = vmatprep.subr.mxu0 0.0
    %1800 = vmatpush1.msra.mxu0 0.0
    %1801 = vmatprep.subr.mxu0 0.0
    %1802 = vmatpush1.msra.mxu0 0.0
    %1803 = vmatprep.subr.mxu0 0.0
    %1804 = vmatpush1.msra.mxu0 0.0
    %1805 = vmatprep.subr.mxu0 0.0
    %1806 = vmatpush1.msra.mxu0 0.0
    %1807 = vmatprep.subr.mxu0 0.0
    %1808 = vmatpush1.msra.mxu0 0.0
    %1809 = vmatprep.subr.mxu0 0.0
    %1810 = vmatpush1.msra.mxu0 0.0
    %1811 = vmatprep.subr.mxu0 0.0
    %1812 = vmatpush1.msra.mxu0 0.0
    %1813 = vmatprep.subr.mxu0 0.0
    %1814 = vmatpush1.msra.mxu0 0.0
    %1815 = vmatprep.subr.mxu0 0.0
    %1816 = vmatpush1.msra.mxu0 0.0
    %1817 = vmatprep.mubr.f32.mxu0 0.0
    %v1818 = vand.u32 %v1284, 4294901760
    %1819 = vmatmul.mubr.f32.gmra.mrb[0].mxu0 %v1818
    %v1820 = vpop.f32.mrb[0].mxu0
    %v1821 = vadd.f32 %v1739, %v1820
    %v1822 = vpop.f32.mrb[0].mxu0
    %1823 = vmatprep.mubr.f32.mxu0 0.0
    %v1824 = vand.u32 %v1287, 4294901760
    %1825 = vmatmul.mubr.f32.gmra.mrb[0].mxu0 %v1824
    %v1826 = vpop.f32.mrb[0].mxu0
    %v1827 = vadd.f32 %v1745, %v1826
    %v1828 = vpop.f32.mrb[0].mxu0
    %1829 = vdwg.mxu0
    %s1830 = sld [smem:[#allocation2]]
    %v1831 = vstv %s1830
    %v1832 = vmul.f32 %v1831, %v205
    %v1833 = vmul.f32 %v1831, %v206
    %v1834 = vadd.f32 %v1832, %v1821
    %v1835 = vadd.f32 %v1833, %v1827
    %v1836 = vld [vmem:[#allocation10] sm:$0xff]
    %v1837 = vld [vmem:[#allocation12] sm:$0xff]
    %v1838 = vld [vmem:[#allocation12 + $0x8] sm:$0xff]
    %v1839 = vld [vmem:[#allocation12 + $0x10] sm:$0xff]
    %v1840 = vld [vmem:[#allocation12 + $0x18] sm:$0xff]
    %v1841 = vld [vmem:[#allocation13] sm:$0xf]
    %v1842 = vlaneseq
    %v1843 = vshrl.u32 %v1842, 7
    %v1844 = vsub.s32 0, %v1843
    %v1845 = vrot.slane %v1841, %v1844
    %v1847 = vsel %vm469, %v1834, 0
    %v1850 = vsel %vm469, %v1835, 0
    %1852 = vmatprep.subr.mxu0 0.0
    %1853 = vmatpush1.msra.mxu0 %v1836
    %1854 = vmatprep.subr.mxu0 0.0
    %1855 = vmatpush1.msra.mxu0 0.0
    %1856 = vmatprep.subr.mxu0 0.0
    %1857 = vmatpush1.msra.mxu0 0.0
    %1858 = vmatprep.subr.mxu0 0.0
    %1859 = vmatpush1.msra.mxu0 0.0
    %1860 = vmatprep.subr.mxu0 0.0
    %1861 = vmatpush1.msra.mxu0 0.0
    %1862 = vmatprep.subr.mxu0 0.0
    %1863 = vmatpush1.msra.mxu0 0.0
    %1864 = vmatprep.subr.mxu0 0.0
    %1865 = vmatpush1.msra.mxu0 0.0
    %1866 = vmatprep.subr.mxu0 0.0
    %1867 = vmatpush1.msra.mxu0 0.0
    %1868 = vmatprep.subr.mxu0 0.0
    %1869 = vmatpush1.msra.mxu0 0.0
    %1870 = vmatprep.subr.mxu0 0.0
    %1871 = vmatpush1.msra.mxu0 0.0
    %1872 = vmatprep.subr.mxu0 0.0
    %1873 = vmatpush1.msra.mxu0 0.0
    %1874 = vmatprep.subr.mxu0 0.0
    %1875 = vmatpush1.msra.mxu0 0.0
    %1876 = vmatprep.subr.mxu0 0.0
    %1877 = vmatpush1.msra.mxu0 0.0
    %1878 = vmatprep.subr.mxu0 0.0
    %1879 = vmatpush1.msra.mxu0 0.0
    %1880 = vmatprep.subr.mxu0 0.0
    %1881 = vmatpush1.msra.mxu0 0.0
    %1882 = vmatprep.subr.mxu0 0.0
    %1883 = vmatpush1.msra.mxu0 0.0
    %1884 = vmatprep.subr.mxu0 0.0
    %1885 = vmatpush1.msra.mxu0 0.0
    %1886 = vmatprep.subr.mxu0 0.0
    %1887 = vmatpush1.msra.mxu0 0.0
    %1888 = vmatprep.subr.mxu0 0.0
    %1889 = vmatpush1.msra.mxu0 0.0
    %1890 = vmatprep.subr.mxu0 0.0
    %1891 = vmatpush1.msra.mxu0 0.0
    %1892 = vmatprep.subr.mxu0 0.0
    %1893 = vmatpush1.msra.mxu0 0.0
    %1894 = vmatprep.subr.mxu0 0.0
    %1895 = vmatpush1.msra.mxu0 0.0
    %1896 = vmatprep.subr.mxu0 0.0
    %1897 = vmatpush1.msra.mxu0 0.0
    %1898 = vmatprep.subr.mxu0 0.0
    %1899 = vmatpush1.msra.mxu0 0.0
    %1900 = vmatprep.subr.mxu0 0.0
    %1901 = vmatpush1.msra.mxu0 0.0
    %1902 = vmatprep.subr.mxu0 0.0
    %1903 = vmatpush1.msra.mxu0 0.0
    %1904 = vmatprep.subr.mxu0 0.0
    %1905 = vmatpush1.msra.mxu0 0.0
    %1906 = vmatprep.subr.mxu0 0.0
    %1907 = vmatpush1.msra.mxu0 0.0
    %1908 = vmatprep.subr.mxu0 0.0
    %1909 = vmatpush1.msra.mxu0 0.0
    %1910 = vmatprep.subr.mxu0 0.0
    %1911 = vmatpush1.msra.mxu0 0.0
    %1912 = vmatprep.subr.mxu0 0.0
    %1913 = vmatpush1.msra.mxu0 0.0
    %1914 = vmatprep.subr.mxu0 0.0
    %1915 = vmatpush1.msra.mxu0 0.0
    %1916 = vmatprep.mubr.f32.mxu0 0.0
    %1917 = vmatmul.mubr.f32.gmra.mrb[0].mxu0 %v1847
    %v1918 = vpop.f32.mrb[0].mxu0
    %v1919 = vadd.f32 %v1845, %v1918
    %v1920 = vpop.f32.mrb[0].mxu0
    %1921 = vmatprep.mubr.f32.mxu0 0.0
    %1922 = vmatmul.mubr.f32.gmra.mrb[0].mxu0 %v1850
    %v1923 = vpop.f32.mrb[0].mxu0
    %v1924 = vadd.f32 %v1845, %v1923
    %v1925 = vpop.f32.mrb[0].mxu0
    %1926 = vdwg.mxu0
    %v1927 = vmax.f32 %v1919, 0.0
    %v1928 = vmax.f32 %v1924, 0.0
    %v1929 = vlaneseq
    %v1930 = vshrl.u32 %v1929, 7
    %v1931 = vsub.s32 1, %v1930
    %v1932 = vrot.slane %v1841, %v1931
    %vm1933 = vcmask 261120
    %v1935 = vsel %vm1933, %v1927, 0
    %v1938 = vsel %vm1933, %v1928, 0
    %1940 = vmatprep.subr.mxu0 0.0
    %1941 = vmatpush1.msra.mxu0 %v1837
    %1942 = vmatprep.subr.mxu0 0.0
    %1943 = vmatpush1.msra.mxu0 %v1838
    %1944 = vmatprep.subr.mxu0 0.0
    %1945 = vmatpush1.msra.mxu0 %v1839
    %1946 = vmatprep.subr.mxu0 0.0
    %1947 = vmatpush1.msra.mxu0 %v1840
    %1948 = vmatprep.subr.mxu0 0.0
    %1949 = vmatpush1.msra.mxu0 0.0
    %1950 = vmatprep.subr.mxu0 0.0
    %1951 = vmatpush1.msra.mxu0 0.0
    %1952 = vmatprep.subr.mxu0 0.0
    %1953 = vmatpush1.msra.mxu0 0.0
    %1954 = vmatprep.subr.mxu0 0.0
    %1955 = vmatpush1.msra.mxu0 0.0
    %1956 = vmatprep.subr.mxu0 0.0
    %1957 = vmatpush1.msra.mxu0 0.0
    %1958 = vmatprep.subr.mxu0 0.0
    %1959 = vmatpush1.msra.mxu0 0.0
    %1960 = vmatprep.subr.mxu0 0.0
    %1961 = vmatpush1.msra.mxu0 0.0
    %1962 = vmatprep.subr.mxu0 0.0
    %1963 = vmatpush1.msra.mxu0 0.0
    %1964 = vmatprep.subr.mxu0 0.0
    %1965 = vmatpush1.msra.mxu0 0.0
    %1966 = vmatprep.subr.mxu0 0.0
    %1967 = vmatpush1.msra.mxu0 0.0
    %1968 = vmatprep.subr.mxu0 0.0
    %1969 = vmatpush1.msra.mxu0 0.0
    %1970 = vmatprep.subr.mxu0 0.0
    %1971 = vmatpush1.msra.mxu0 0.0
    %1972 = vmatprep.subr.mxu0 0.0
    %1973 = vmatpush1.msra.mxu0 0.0
    %1974 = vmatprep.subr.mxu0 0.0
    %1975 = vmatpush1.msra.mxu0 0.0
    %1976 = vmatprep.subr.mxu0 0.0
    %1977 = vmatpush1.msra.mxu0 0.0
    %1978 = vmatprep.subr.mxu0 0.0
    %1979 = vmatpush1.msra.mxu0 0.0
    %1980 = vmatprep.subr.mxu0 0.0
    %1981 = vmatpush1.msra.mxu0 0.0
    %1982 = vmatprep.subr.mxu0 0.0
    %1983 = vmatpush1.msra.mxu0 0.0
    %1984 = vmatprep.subr.mxu0 0.0
    %1985 = vmatpush1.msra.mxu0 0.0
    %1986 = vmatprep.subr.mxu0 0.0
    %1987 = vmatpush1.msra.mxu0 0.0
    %1988 = vmatprep.subr.mxu0 0.0
    %1989 = vmatpush1.msra.mxu0 0.0
    %1990 = vmatprep.subr.mxu0 0.0
    %1991 = vmatpush1.msra.mxu0 0.0
    %1992 = vmatprep.subr.mxu0 0.0
    %1993 = vmatpush1.msra.mxu0 0.0
    %1994 = vmatprep.subr.mxu0 0.0
    %1995 = vmatpush1.msra.mxu0 0.0
    %1996 = vmatprep.subr.mxu0 0.0
    %1997 = vmatpush1.msra.mxu0 0.0
    %1998 = vmatprep.subr.mxu0 0.0
    %1999 = vmatpush1.msra.mxu0 0.0
    %2000 = vmatprep.subr.mxu0 0.0
    %2001 = vmatpush1.msra.mxu0 0.0
    %2002 = vmatprep.subr.mxu0 0.0
    %2003 = vmatpush1.msra.mxu0 0.0
    %2004 = vmatprep.mubr.f32.mxu0 0.0
    %2005 = vmatmul.mubr.f32.gmra.mrb[0].mxu0 %v1935
    %v2006 = vpop.f32.mrb[0].mxu0
    %v2007 = vadd.f32 %v1932, %v2006
    %v2008 = vpop.f32.mrb[0].mxu0
    %2009 = vmatprep.mubr.f32.mxu0 0.0
    %2010 = vmatmul.mubr.f32.gmra.mrb[0].mxu0 %v1938
    %v2011 = vpop.f32.mrb[0].mxu0
    %v2012 = vadd.f32 %v1932, %v2011
    %v2013 = vpop.f32.mrb[0].mxu0
    %2014 = vdwg.mxu0
    %v2015 = vmax.f32 %v2007, 0.0
    %v2016 = vmax.f32 %v2012, 0.0
    %v2017 = vlaneseq
    %v2018 = vshrl.u32 %v2017, 7
    %v2019 = vsub.s32 2, %v2018
    %v2020 = vrot.slane %v1841, %v2019
    %v2021 = vmul.f32 %v2015, %v2020
    %v2022 = vmul.f32 %v2016, %v2020
    %v2023 = vlaneseq
    %v2024 = vshrl.u32 %v2023, 7
    %v2025 = vsub.s32 3, %v2024
    %v2026 = vrot.slane %v1841, %v2025
    %v2027 = vadd.f32 %v2021, %v2026
    %v2028 = vadd.f32 %v2022, %v2026
    %v2029 = vld [vmem:[%s15] sm:$0x7]
    %v2030 = vld [vmem:[%s14] sm:$0xff]
    %v2031 = vld [vmem:[%s14 + $0x8] sm:$0xff]
    %v2032 = vld [vmem:[%s14 + $0x10] sm:$0xff]
    %v2033 = vld [vmem:[%s14 + $0x18] sm:$0xff]
    %v2034 = vlaneseq
    %v2035 = vshrl.u32 %v2034, 7
    %v2036 = vsub.s32 0, %v2035
    %v2037 = vrot.slane %v2029, %v2036
    %v2039 = vsel %vm1933, %v355, 0
    %v2042 = vsel %vm1933, %v356, 0
    %v2045 = vsel %vm1933, %v357, 0
    %v2048 = vsel %vm1933, %v358, 0
    %v2051 = vsel %vm1933, %v359, 0
    %2053 = vmatprep.subr.mxu0 0.0
    %2054 = vmatpush1.msra.mxu0 %v2030
    %2055 = vmatprep.subr.mxu0 0.0
    %2056 = vmatpush1.msra.mxu0 %v2031
    %2057 = vmatprep.subr.mxu0 0.0
    %2058 = vmatpush1.msra.mxu0 %v2032
    %2059 = vmatprep.subr.mxu0 0.0
    %2060 = vmatpush1.msra.mxu0 %v2033
    %2061 = vmatprep.subr.mxu0 0.0
    %2062 = vmatpush1.msra.mxu0 0.0
    %2063 = vmatprep.subr.mxu0 0.0
    %2064 = vmatpush1.msra.mxu0 0.0
    %2065 = vmatprep.subr.mxu0 0.0
    %2066 = vmatpush1.msra.mxu0 0.0
    %2067 = vmatprep.subr.mxu0 0.0
    %2068 = vmatpush1.msra.mxu0 0.0
    %2069 = vmatprep.subr.mxu0 0.0
    %2070 = vmatpush1.msra.mxu0 0.0
    %2071 = vmatprep.subr.mxu0 0.0
    %2072 = vmatpush1.msra.mxu0 0.0
    %2073 = vmatprep.subr.mxu0 0.0
    %2074 = vmatpush1.msra.mxu0 0.0
    %2075 = vmatprep.subr.mxu0 0.0
    %2076 = vmatpush1.msra.mxu0 0.0
    %2077 = vmatprep.subr.mxu0 0.0
    %2078 = vmatpush1.msra.mxu0 0.0
    %2079 = vmatprep.subr.mxu0 0.0
    %2080 = vmatpush1.msra.mxu0 0.0
    %2081 = vmatprep.subr.mxu0 0.0
    %2082 = vmatpush1.msra.mxu0 0.0
    %2083 = vmatprep.subr.mxu0 0.0
    %2084 = vmatpush1.msra.mxu0 0.0
    %2085 = vmatprep.subr.mxu0 0.0
    %2086 = vmatpush1.msra.mxu0 0.0
    %2087 = vmatprep.subr.mxu0 0.0
    %2088 = vmatpush1.msra.mxu0 0.0
    %2089 = vmatprep.subr.mxu0 0.0
    %2090 = vmatpush1.msra.mxu0 0.0
    %2091 = vmatprep.subr.mxu0 0.0
    %2092 = vmatpush1.msra.mxu0 0.0
    %2093 = vmatprep.subr.mxu0 0.0
    %2094 = vmatpush1.msra.mxu0 0.0
    %2095 = vmatprep.subr.mxu0 0.0
    %2096 = vmatpush1.msra.mxu0 0.0
    %2097 = vmatprep.subr.mxu0 0.0
    %2098 = vmatpush1.msra.mxu0 0.0
    %2099 = vmatprep.subr.mxu0 0.0
    %2100 = vmatpush1.msra.mxu0 0.0
    %2101 = vmatprep.subr.mxu0 0.0
    %2102 = vmatpush1.msra.mxu0 0.0
    %2103 = vmatprep.subr.mxu0 0.0
    %2104 = vmatpush1.msra.mxu0 0.0
    %2105 = vmatprep.subr.mxu0 0.0
    %2106 = vmatpush1.msra.mxu0 0.0
    %2107 = vmatprep.subr.mxu0 0.0
    %2108 = vmatpush1.msra.mxu0 0.0
    %2109 = vmatprep.subr.mxu0 0.0
    %2110 = vmatpush1.msra.mxu0 0.0
    %2111 = vmatprep.subr.mxu0 0.0
    %2112 = vmatpush1.msra.mxu0 0.0
    %2113 = vmatprep.subr.mxu0 0.0
    %2114 = vmatpush1.msra.mxu0 0.0
    %2115 = vmatprep.subr.mxu0 0.0
    %2116 = vmatpush1.msra.mxu0 0.0
    %2117 = vmatprep.mubr.f32.mxu0 0.0
    %2118 = vmatmul.mubr.f32.gmra.mrb[0].mxu0 %v2039
    %v2119 = vpop.f32.mrb[0].mxu0
    %v2120 = vadd.f32 %v2037, %v2119
    %v2121 = vpop.f32.mrb[0].mxu0
    %2122 = vmatprep.mubr.f32.mxu0 0.0
    %2123 = vmatmul.mubr.f32.gmra.mrb[0].mxu0 %v2042
    %v2124 = vpop.f32.mrb[0].mxu0
    %v2125 = vadd.f32 %v2037, %v2124
    %v2126 = vpop.f32.mrb[0].mxu0
    %2127 = vmatprep.mubr.f32.mxu0 0.0
    %2128 = vmatmul.mubr.f32.gmra.mrb[0].mxu0 %v2045
    %v2129 = vpop.f32.mrb[0].mxu0
    %v2130 = vadd.f32 %v2037, %v2129
    %v2131 = vpop.f32.mrb[0].mxu0
    %2132 = vmatprep.mubr.f32.mxu0 0.0
    %2133 = vmatmul.mubr.f32.gmra.mrb[0].mxu0 %v2048
    %v2134 = vpop.f32.mrb[0].mxu0
    %v2135 = vadd.f32 %v2037, %v2134
    %v2136 = vpop.f32.mrb[0].mxu0
    %2137 = vmatprep.mubr.f32.mxu0 0.0
    %2138 = vmatmul.mubr.f32.gmra.mrb[0].mxu0 %v2051
    %v2139 = vpop.f32.mrb[0].mxu0
    %v2140 = vadd.f32 %v2037, %v2139
    %v2141 = vpop.f32.mrb[0].mxu0
    %2142 = vdwg.mxu0
    %v2143 = vmax.f32 %v2120, 0.0
    %v2144 = vmax.f32 %v2125, 0.0
    %v2145 = vmax.f32 %v2130, 0.0
    %v2146 = vmax.f32 %v2135, 0.0
    %v2147 = vmax.f32 %v2140, 0.0
    %v2148 = vlaneseq
    %v2149 = vshrl.u32 %v2148, 7
    %v2150 = vsub.s32 1, %v2149
    %v2151 = vrot.slane %v2029, %v2150
    %v2152 = vmul.f32 %v2143, %v2151
    %v2153 = vmul.f32 %v2144, %v2151
    %v2154 = vmul.f32 %v2145, %v2151
    %v2155 = vmul.f32 %v2146, %v2151
    %v2156 = vmul.f32 %v2147, %v2151
    %v2157 = vlaneseq
    %v2158 = vshrl.u32 %v2157, 7
    %v2159 = vsub.s32 2, %v2158
    %v2160 = vrot.slane %v2029, %v2159
    %v2161 = vadd.f32 %v2152, %v2160
    %v2162 = vadd.f32 %v2153, %v2160
    %v2163 = vadd.f32 %v2154, %v2160
    %v2164 = vadd.f32 %v2155, %v2160
    %v2165 = vadd.f32 %v2156, %v2160
    %2166 = vmatprep.subr.mxu0 0.0
    %v2167 = vand.u32 %v2027, 4294901760
    %2168 = vmatpush1.msra.mxu0 %v2167
    %2169 = vmatprep.subr.mxu0 0.0
    %v2170 = vand.u32 %v2028, 4294901760
    %2171 = vmatpush1.msra.mxu0 %v2170
    %2172 = vmatprep.subr.mxu0 0.0
    %2173 = vmatpush1.msra.mxu0 0.0
    %2174 = vmatprep.subr.mxu0 0.0
    %2175 = vmatpush1.msra.mxu0 0.0
    %2176 = vmatprep.subr.mxu0 0.0
    %2177 = vmatpush1.msra.mxu0 0.0
    %2178 = vmatprep.subr.mxu0 0.0
    %2179 = vmatpush1.msra.mxu0 0.0
    %2180 = vmatprep.subr.mxu0 0.0
    %2181 = vmatpush1.msra.mxu0 0.0
    %2182 = vmatprep.subr.mxu0 0.0
    %2183 = vmatpush1.msra.mxu0 0.0
    %2184 = vmatprep.subr.mxu0 0.0
    %2185 = vmatpush1.msra.mxu0 0.0
    %2186 = vmatprep.subr.mxu0 0.0
    %2187 = vmatpush1.msra.mxu0 0.0
    %2188 = vmatprep.subr.mxu0 0.0
    %2189 = vmatpush1.msra.mxu0 0.0
    %2190 = vmatprep.subr.mxu0 0.0
    %2191 = vmatpush1.msra.mxu0 0.0
    %2192 = vmatprep.subr.mxu0 0.0
    %2193 = vmatpush1.msra.mxu0 0.0
    %2194 = vmatprep.subr.mxu0 0.0
    %2195 = vmatpush1.msra.mxu0 0.0
    %2196 = vmatprep.subr.mxu0 0.0
    %2197 = vmatpush1.msra.mxu0 0.0
    %2198 = vmatprep.subr.mxu0 0.0
    %2199 = vmatpush1.msra.mxu0 0.0
    %2200 = vmatprep.subr.mxu0 0.0
    %2201 = vmatpush1.msra.mxu0 0.0
    %2202 = vmatprep.subr.mxu0 0.0
    %2203 = vmatpush1.msra.mxu0 0.0
    %2204 = vmatprep.subr.mxu0 0.0
    %2205 = vmatpush1.msra.mxu0 0.0
    %2206 = vmatprep.subr.mxu0 0.0
    %2207 = vmatpush1.msra.mxu0 0.0
    %2208 = vmatprep.subr.mxu0 0.0
    %2209 = vmatpush1.msra.mxu0 0.0
    %2210 = vmatprep.subr.mxu0 0.0
    %2211 = vmatpush1.msra.mxu0 0.0
    %2212 = vmatprep.subr.mxu0 0.0
    %2213 = vmatpush1.msra.mxu0 0.0
    %2214 = vmatprep.subr.mxu0 0.0
    %2215 = vmatpush1.msra.mxu0 0.0
    %2216 = vmatprep.subr.mxu0 0.0
    %2217 = vmatpush1.msra.mxu0 0.0
    %2218 = vmatprep.subr.mxu0 0.0
    %2219 = vmatpush1.msra.mxu0 0.0
    %2220 = vmatprep.subr.mxu0 0.0
    %2221 = vmatpush1.msra.mxu0 0.0
    %2222 = vmatprep.subr.mxu0 0.0
    %2223 = vmatpush1.msra.mxu0 0.0
    %2224 = vmatprep.subr.mxu0 0.0
    %2225 = vmatpush1.msra.mxu0 0.0
    %2226 = vmatprep.subr.mxu0 0.0
    %2227 = vmatpush1.msra.mxu0 0.0
    %2228 = vmatprep.subr.mxu0 0.0
    %2229 = vmatpush1.msra.mxu0 0.0
    %2230 = vmatprep.subr.mxu0 0.0
    %2231 = vmatpush1.msra.mxu0 0.0
    %2232 = vmatprep.mubr.f32.mxu0 0.0
    %v2233 = vand.u32 %v632, 4294901760
    %v2234 = vsub.f32 %v632, %v2233
    %v2235 = vand.u32 %v2234, 4294901760
    %v2236 = vsub.f32 %v2234, %v2235
    %v2237 = vand.u32 %v2236, 4294901760
    %2238 = vmatmul.mubr.f32.gmra.mrb[0].mxu0 %v2237
    %v2239 = vpop.f32.mrb[0].mxu0
    %v2240 = vadd.f32 %v2161, %v2239
    %v2241 = vpop.f32.mrb[0].mxu0
    %2242 = vmatprep.mubr.f32.mxu0 0.0
    %v2243 = vand.u32 %v635, 4294901760
    %v2244 = vsub.f32 %v635, %v2243
    %v2245 = vand.u32 %v2244, 4294901760
    %v2246 = vsub.f32 %v2244, %v2245
    %v2247 = vand.u32 %v2246, 4294901760
    %2248 = vmatmul.mubr.f32.gmra.mrb[0].mxu0 %v2247
    %v2249 = vpop.f32.mrb[0].mxu0
    %v2250 = vadd.f32 %v2162, %v2249
    %v2251 = vpop.f32.mrb[0].mxu0
    %2252 = vmatprep.mubr.f32.mxu0 0.0
    %v2253 = vand.u32 %v638, 4294901760
    %v2254 = vsub.f32 %v638, %v2253
    %v2255 = vand.u32 %v2254, 4294901760
    %v2256 = vsub.f32 %v2254, %v2255
    %v2257 = vand.u32 %v2256, 4294901760
    %2258 = vmatmul.mubr.f32.gmra.mrb[0].mxu0 %v2257
    %v2259 = vpop.f32.mrb[0].mxu0
    %v2260 = vadd.f32 %v2163, %v2259
    %v2261 = vpop.f32.mrb[0].mxu0
    %2262 = vmatprep.mubr.f32.mxu0 0.0
    %v2263 = vand.u32 %v641, 4294901760
    %v2264 = vsub.f32 %v641, %v2263
    %v2265 = vand.u32 %v2264, 4294901760
    %v2266 = vsub.f32 %v2264, %v2265
    %v2267 = vand.u32 %v2266, 4294901760
    %2268 = vmatmul.mubr.f32.gmra.mrb[0].mxu0 %v2267
    %v2269 = vpop.f32.mrb[0].mxu0
    %v2270 = vadd.f32 %v2164, %v2269
    %v2271 = vpop.f32.mrb[0].mxu0
    %2272 = vmatprep.mubr.f32.mxu0 0.0
    %v2273 = vand.u32 %v644, 4294901760
    %v2274 = vsub.f32 %v644, %v2273
    %v2275 = vand.u32 %v2274, 4294901760
    %v2276 = vsub.f32 %v2274, %v2275
    %v2277 = vand.u32 %v2276, 4294901760
    %2278 = vmatmul.mubr.f32.gmra.mrb[0].mxu0 %v2277
    %v2279 = vpop.f32.mrb[0].mxu0
    %v2280 = vadd.f32 %v2165, %v2279
    %v2281 = vpop.f32.mrb[0].mxu0
    %2282 = vdwg.mxu0
    %2283 = vmatprep.subr.mxu0 0.0
    %v2284 = vand.u32 %v2027, 4294901760
    %v2285 = vsub.f32 %v2027, %v2284
    %v2286 = vand.u32 %v2285, 4294901760
    %v2287 = vsub.f32 %v2285, %v2286
    %v2288 = vand.u32 %v2287, 4294901760
    %2289 = vmatpush1.msra.mxu0 %v2288
    %2290 = vmatprep.subr.mxu0 0.0
    %v2291 = vand.u32 %v2028, 4294901760
    %v2292 = vsub.f32 %v2028, %v2291
    %v2293 = vand.u32 %v2292, 4294901760
    %v2294 = vsub.f32 %v2292, %v2293
    %v2295 = vand.u32 %v2294, 4294901760
    %2296 = vmatpush1.msra.mxu0 %v2295
    %2297 = vmatprep.subr.mxu0 0.0
    %2298 = vmatpush1.msra.mxu0 0.0
    %2299 = vmatprep.subr.mxu0 0.0
    %2300 = vmatpush1.msra.mxu0 0.0
    %2301 = vmatprep.subr.mxu0 0.0
    %2302 = vmatpush1.msra.mxu0 0.0
    %2303 = vmatprep.subr.mxu0 0.0
    %2304 = vmatpush1.msra.mxu0 0.0
    %2305 = vmatprep.subr.mxu0 0.0
    %2306 = vmatpush1.msra.mxu0 0.0
    %2307 = vmatprep.subr.mxu0 0.0
    %2308 = vmatpush1.msra.mxu0 0.0
    %2309 = vmatprep.subr.mxu0 0.0
    %2310 = vmatpush1.msra.mxu0 0.0
    %2311 = vmatprep.subr.mxu0 0.0
    %2312 = vmatpush1.msra.mxu0 0.0
    %2313 = vmatprep.subr.mxu0 0.0
    %2314 = vmatpush1.msra.mxu0 0.0
    %2315 = vmatprep.subr.mxu0 0.0
    %2316 = vmatpush1.msra.mxu0 0.0
    %2317 = vmatprep.subr.mxu0 0.0
    %2318 = vmatpush1.msra.mxu0 0.0
    %2319 = vmatprep.subr.mxu0 0.0
    %2320 = vmatpush1.msra.mxu0 0.0
    %2321 = vmatprep.subr.mxu0 0.0
    %2322 = vmatpush1.msra.mxu0 0.0
    %2323 = vmatprep.subr.mxu0 0.0
    %2324 = vmatpush1.msra.mxu0 0.0
    %2325 = vmatprep.subr.mxu0 0.0
    %2326 = vmatpush1.msra.mxu0 0.0
    %2327 = vmatprep.subr.mxu0 0.0
    %2328 = vmatpush1.msra.mxu0 0.0
    %2329 = vmatprep.subr.mxu0 0.0
    %2330 = vmatpush1.msra.mxu0 0.0
    %2331 = vmatprep.subr.mxu0 0.0
    %2332 = vmatpush1.msra.mxu0 0.0
    %2333 = vmatprep.subr.mxu0 0.0
    %2334 = vmatpush1.msra.mxu0 0.0
    %2335 = vmatprep.subr.mxu0 0.0
    %2336 = vmatpush1.msra.mxu0 0.0
    %2337 = vmatprep.subr.mxu0 0.0
    %2338 = vmatpush1.msra.mxu0 0.0
    %2339 = vmatprep.subr.mxu0 0.0
    %2340 = vmatpush1.msra.mxu0 0.0
    %2341 = vmatprep.subr.mxu0 0.0
    %2342 = vmatpush1.msra.mxu0 0.0
    %2343 = vmatprep.subr.mxu0 0.0
    %2344 = vmatpush1.msra.mxu0 0.0
    %2345 = vmatprep.subr.mxu0 0.0
    %2346 = vmatpush1.msra.mxu0 0.0
    %2347 = vmatprep.subr.mxu0 0.0
    %2348 = vmatpush1.msra.mxu0 0.0
    %2349 = vmatprep.subr.mxu0 0.0
    %2350 = vmatpush1.msra.mxu0 0.0
    %2351 = vmatprep.subr.mxu0 0.0
    %2352 = vmatpush1.msra.mxu0 0.0
    %2353 = vmatprep.subr.mxu0 0.0
    %2354 = vmatpush1.msra.mxu0 0.0
    %2355 = vmatprep.subr.mxu0 0.0
    %2356 = vmatpush1.msra.mxu0 0.0
    %2357 = vmatprep.mubr.f32.mxu0 0.0
    %v2358 = vand.u32 %v632, 4294901760
    %2359 = vmatmul.mubr.f32.gmra.mrb[0].mxu0 %v2358
    %v2360 = vpop.f32.mrb[0].mxu0
    %v2361 = vadd.f32 %v2240, %v2360
    %v2362 = vpop.f32.mrb[0].mxu0
    %2363 = vmatprep.mubr.f32.mxu0 0.0
    %v2364 = vand.u32 %v635, 4294901760
    %2365 = vmatmul.mubr.f32.gmra.mrb[0].mxu0 %v2364
    %v2366 = vpop.f32.mrb[0].mxu0
    %v2367 = vadd.f32 %v2250, %v2366
    %v2368 = vpop.f32.mrb[0].mxu0
    %2369 = vmatprep.mubr.f32.mxu0 0.0
    %v2370 = vand.u32 %v638, 4294901760
    %2371 = vmatmul.mubr.f32.gmra.mrb[0].mxu0 %v2370
    %v2372 = vpop.f32.mrb[0].mxu0
    %v2373 = vadd.f32 %v2260, %v2372
    %v2374 = vpop.f32.mrb[0].mxu0
    %2375 = vmatprep.mubr.f32.mxu0 0.0
    %v2376 = vand.u32 %v641, 4294901760
    %2377 = vmatmul.mubr.f32.gmra.mrb[0].mxu0 %v2376
    %v2378 = vpop.f32.mrb[0].mxu0
    %v2379 = vadd.f32 %v2270, %v2378
    %v2380 = vpop.f32.mrb[0].mxu0
    %2381 = vmatprep.mubr.f32.mxu0 0.0
    %v2382 = vand.u32 %v644, 4294901760
    %2383 = vmatmul.mubr.f32.gmra.mrb[0].mxu0 %v2382
    %v2384 = vpop.f32.mrb[0].mxu0
    %v2385 = vadd.f32 %v2280, %v2384
    %v2386 = vpop.f32.mrb[0].mxu0
    %2387 = vdwg.mxu0
    %2388 = vmatprep.subr.mxu0 0.0
    %v2389 = vand.u32 %v2027, 4294901760
    %v2390 = vsub.f32 %v2027, %v2389
    %2391 = vmatpush1.msra.mxu0 %v2390
    %2392 = vmatprep.subr.mxu0 0.0
    %v2393 = vand.u32 %v2028, 4294901760
    %v2394 = vsub.f32 %v2028, %v2393
    %2395 = vmatpush1.msra.mxu0 %v2394
    %2396 = vmatprep.subr.mxu0 0.0
    %2397 = vmatpush1.msra.mxu0 0.0
    %2398 = vmatprep.subr.mxu0 0.0
    %2399 = vmatpush1.msra.mxu0 0.0
    %2400 = vmatprep.subr.mxu0 0.0
    %2401 = vmatpush1.msra.mxu0 0.0
    %2402 = vmatprep.subr.mxu0 0.0
    %2403 = vmatpush1.msra.mxu0 0.0
    %2404 = vmatprep.subr.mxu0 0.0
    %2405 = vmatpush1.msra.mxu0 0.0
    %2406 = vmatprep.subr.mxu0 0.0
    %2407 = vmatpush1.msra.mxu0 0.0
    %2408 = vmatprep.subr.mxu0 0.0
    %2409 = vmatpush1.msra.mxu0 0.0
    %2410 = vmatprep.subr.mxu0 0.0
    %2411 = vmatpush1.msra.mxu0 0.0
    %2412 = vmatprep.subr.mxu0 0.0
    %2413 = vmatpush1.msra.mxu0 0.0
    %2414 = vmatprep.subr.mxu0 0.0
    %2415 = vmatpush1.msra.mxu0 0.0
    %2416 = vmatprep.subr.mxu0 0.0
    %2417 = vmatpush1.msra.mxu0 0.0
    %2418 = vmatprep.subr.mxu0 0.0
    %2419 = vmatpush1.msra.mxu0 0.0
    %2420 = vmatprep.subr.mxu0 0.0
    %2421 = vmatpush1.msra.mxu0 0.0
    %2422 = vmatprep.subr.mxu0 0.0
    %2423 = vmatpush1.msra.mxu0 0.0
    %2424 = vmatprep.subr.mxu0 0.0
    %2425 = vmatpush1.msra.mxu0 0.0
    %2426 = vmatprep.subr.mxu0 0.0
    %2427 = vmatpush1.msra.mxu0 0.0
    %2428 = vmatprep.subr.mxu0 0.0
    %2429 = vmatpush1.msra.mxu0 0.0
    %2430 = vmatprep.subr.mxu0 0.0
    %2431 = vmatpush1.msra.mxu0 0.0
    %2432 = vmatprep.subr.mxu0 0.0
    %2433 = vmatpush1.msra.mxu0 0.0
    %2434 = vmatprep.subr.mxu0 0.0
    %2435 = vmatpush1.msra.mxu0 0.0
    %2436 = vmatprep.subr.mxu0 0.0
    %2437 = vmatpush1.msra.mxu0 0.0
    %2438 = vmatprep.subr.mxu0 0.0
    %2439 = vmatpush1.msra.mxu0 0.0
    %2440 = vmatprep.subr.mxu0 0.0
    %2441 = vmatpush1.msra.mxu0 0.0
    %2442 = vmatprep.subr.mxu0 0.0
    %2443 = vmatpush1.msra.mxu0 0.0
    %2444 = vmatprep.subr.mxu0 0.0
    %2445 = vmatpush1.msra.mxu0 0.0
    %2446 = vmatprep.subr.mxu0 0.0
    %2447 = vmatpush1.msra.mxu0 0.0
    %2448 = vmatprep.subr.mxu0 0.0
    %2449 = vmatpush1.msra.mxu0 0.0
    %2450 = vmatprep.subr.mxu0 0.0
    %2451 = vmatpush1.msra.mxu0 0.0
    %2452 = vmatprep.subr.mxu0 0.0
    %2453 = vmatpush1.msra.mxu0 0.0
    %2454 = vmatprep.subr.mxu0 0.0
    %2455 = vmatpush1.msra.mxu0 0.0
    %2456 = vmatprep.mubr.f32.mxu0 0.0
    %v2457 = vand.u32 %v632, 4294901760
    %v2458 = vsub.f32 %v632, %v2457
    %2459 = vmatmul.mubr.f32.gmra.mrb[0].mxu0 %v2458
    %v2460 = vpop.f32.mrb[0].mxu0
    %v2461 = vadd.f32 %v2361, %v2460
    %v2462 = vpop.f32.mrb[0].mxu0
    %2463 = vmatprep.mubr.f32.mxu0 0.0
    %v2464 = vand.u32 %v635, 4294901760
    %v2465 = vsub.f32 %v635, %v2464
    %2466 = vmatmul.mubr.f32.gmra.mrb[0].mxu0 %v2465
    %v2467 = vpop.f32.mrb[0].mxu0
    %v2468 = vadd.f32 %v2367, %v2467
    %v2469 = vpop.f32.mrb[0].mxu0
    %2470 = vmatprep.mubr.f32.mxu0 0.0
    %v2471 = vand.u32 %v638, 4294901760
    %v2472 = vsub.f32 %v638, %v2471
    %2473 = vmatmul.mubr.f32.gmra.mrb[0].mxu0 %v2472
    %v2474 = vpop.f32.mrb[0].mxu0
    %v2475 = vadd.f32 %v2373, %v2474
    %v2476 = vpop.f32.mrb[0].mxu0
    %2477 = vmatprep.mubr.f32.mxu0 0.0
    %v2478 = vand.u32 %v641, 4294901760
    %v2479 = vsub.f32 %v641, %v2478
    %2480 = vmatmul.mubr.f32.gmra.mrb[0].mxu0 %v2479
    %v2481 = vpop.f32.mrb[0].mxu0
    %v2482 = vadd.f32 %v2379, %v2481
    %v2483 = vpop.f32.mrb[0].mxu0
    %2484 = vmatprep.mubr.f32.mxu0 0.0
    %v2485 = vand.u32 %v644, 4294901760
    %v2486 = vsub.f32 %v644, %v2485
    %2487 = vmatmul.mubr.f32.gmra.mrb[0].mxu0 %v2486
    %v2488 = vpop.f32.mrb[0].mxu0
    %v2489 = vadd.f32 %v2385, %v2488
    %v2490 = vpop.f32.mrb[0].mxu0
    %2491 = vdwg.mxu0
    %2492 = vmatprep.subr.mxu0 0.0
    %v2493 = vand.u32 %v2027, 4294901760
    %2494 = vmatpush1.msra.mxu0 %v2493
    %2495 = vmatprep.subr.mxu0 0.0
    %v2496 = vand.u32 %v2028, 4294901760
    %2497 = vmatpush1.msra.mxu0 %v2496
    %2498 = vmatprep.subr.mxu0 0.0
    %2499 = vmatpush1.msra.mxu0 0.0
    %2500 = vmatprep.subr.mxu0 0.0
    %2501 = vmatpush1.msra.mxu0 0.0
    %2502 = vmatprep.subr.mxu0 0.0
    %2503 = vmatpush1.msra.mxu0 0.0
    %2504 = vmatprep.subr.mxu0 0.0
    %2505 = vmatpush1.msra.mxu0 0.0
    %2506 = vmatprep.subr.mxu0 0.0
    %2507 = vmatpush1.msra.mxu0 0.0
    %2508 = vmatprep.subr.mxu0 0.0
    %2509 = vmatpush1.msra.mxu0 0.0
    %2510 = vmatprep.subr.mxu0 0.0
    %2511 = vmatpush1.msra.mxu0 0.0
    %2512 = vmatprep.subr.mxu0 0.0
    %2513 = vmatpush1.msra.mxu0 0.0
    %2514 = vmatprep.subr.mxu0 0.0
    %2515 = vmatpush1.msra.mxu0 0.0
    %2516 = vmatprep.subr.mxu0 0.0
    %2517 = vmatpush1.msra.mxu0 0.0
    %2518 = vmatprep.subr.mxu0 0.0
    %2519 = vmatpush1.msra.mxu0 0.0
    %2520 = vmatprep.subr.mxu0 0.0
    %2521 = vmatpush1.msra.mxu0 0.0
    %2522 = vmatprep.subr.mxu0 0.0
    %2523 = vmatpush1.msra.mxu0 0.0
    %2524 = vmatprep.subr.mxu0 0.0
    %2525 = vmatpush1.msra.mxu0 0.0
    %2526 = vmatprep.subr.mxu0 0.0
    %2527 = vmatpush1.msra.mxu0 0.0
    %2528 = vmatprep.subr.mxu0 0.0
    %2529 = vmatpush1.msra.mxu0 0.0
    %2530 = vmatprep.subr.mxu0 0.0
    %2531 = vmatpush1.msra.mxu0 0.0
    %2532 = vmatprep.subr.mxu0 0.0
    %2533 = vmatpush1.msra.mxu0 0.0
    %2534 = vmatprep.subr.mxu0 0.0
    %2535 = vmatpush1.msra.mxu0 0.0
    %2536 = vmatprep.subr.mxu0 0.0
    %2537 = vmatpush1.msra.mxu0 0.0
    %2538 = vmatprep.subr.mxu0 0.0
    %2539 = vmatpush1.msra.mxu0 0.0
    %2540 = vmatprep.subr.mxu0 0.0
    %2541 = vmatpush1.msra.mxu0 0.0
    %2542 = vmatprep.subr.mxu0 0.0
    %2543 = vmatpush1.msra.mxu0 0.0
    %2544 = vmatprep.subr.mxu0 0.0
    %2545 = vmatpush1.msra.mxu0 0.0
    %2546 = vmatprep.subr.mxu0 0.0
    %2547 = vmatpush1.msra.mxu0 0.0
    %2548 = vmatprep.subr.mxu0 0.0
    %2549 = vmatpush1.msra.mxu0 0.0
    %2550 = vmatprep.subr.mxu0 0.0
    %2551 = vmatpush1.msra.mxu0 0.0
    %2552 = vmatprep.subr.mxu0 0.0
    %2553 = vmatpush1.msra.mxu0 0.0
    %2554 = vmatprep.subr.mxu0 0.0
    %2555 = vmatpush1.msra.mxu0 0.0
    %2556 = vmatprep.subr.mxu0 0.0
    %2557 = vmatpush1.msra.mxu0 0.0
    %2558 = vmatprep.mubr.f32.mxu0 0.0
    %v2559 = vand.u32 %v632, 4294901760
    %v2560 = vsub.f32 %v632, %v2559
    %v2561 = vand.u32 %v2560, 4294901760
    %2562 = vmatmul.mubr.f32.gmra.mrb[0].mxu0 %v2561
    %v2563 = vpop.f32.mrb[0].mxu0
    %v2564 = vadd.f32 %v2461, %v2563
    %v2565 = vpop.f32.mrb[0].mxu0
    %2566 = vmatprep.mubr.f32.mxu0 0.0
    %v2567 = vand.u32 %v635, 4294901760
    %v2568 = vsub.f32 %v635, %v2567
    %v2569 = vand.u32 %v2568, 4294901760
    %2570 = vmatmul.mubr.f32.gmra.mrb[0].mxu0 %v2569
    %v2571 = vpop.f32.mrb[0].mxu0
    %v2572 = vadd.f32 %v2468, %v2571
    %v2573 = vpop.f32.mrb[0].mxu0
    %2574 = vmatprep.mubr.f32.mxu0 0.0
    %v2575 = vand.u32 %v638, 4294901760
    %v2576 = vsub.f32 %v638, %v2575
    %v2577 = vand.u32 %v2576, 4294901760
    %2578 = vmatmul.mubr.f32.gmra.mrb[0].mxu0 %v2577
    %v2579 = vpop.f32.mrb[0].mxu0
    %v2580 = vadd.f32 %v2475, %v2579
    %v2581 = vpop.f32.mrb[0].mxu0
    %2582 = vmatprep.mubr.f32.mxu0 0.0
    %v2583 = vand.u32 %v641, 4294901760
    %v2584 = vsub.f32 %v641, %v2583
    %v2585 = vand.u32 %v2584, 4294901760
    %2586 = vmatmul.mubr.f32.gmra.mrb[0].mxu0 %v2585
    %v2587 = vpop.f32.mrb[0].mxu0
    %v2588 = vadd.f32 %v2482, %v2587
    %v2589 = vpop.f32.mrb[0].mxu0
    %2590 = vmatprep.mubr.f32.mxu0 0.0
    %v2591 = vand.u32 %v644, 4294901760
    %v2592 = vsub.f32 %v644, %v2591
    %v2593 = vand.u32 %v2592, 4294901760
    %2594 = vmatmul.mubr.f32.gmra.mrb[0].mxu0 %v2593
    %v2595 = vpop.f32.mrb[0].mxu0
    %v2596 = vadd.f32 %v2489, %v2595
    %v2597 = vpop.f32.mrb[0].mxu0
    %2598 = vdwg.mxu0
    %2599 = vmatprep.subr.mxu0 0.0
    %v2600 = vand.u32 %v2027, 4294901760
    %v2601 = vsub.f32 %v2027, %v2600
    %v2602 = vand.u32 %v2601, 4294901760
    %2603 = vmatpush1.msra.mxu0 %v2602
    %2604 = vmatprep.subr.mxu0 0.0
    %v2605 = vand.u32 %v2028, 4294901760
    %v2606 = vsub.f32 %v2028, %v2605
    %v2607 = vand.u32 %v2606, 4294901760
    %2608 = vmatpush1.msra.mxu0 %v2607
    %2609 = vmatprep.subr.mxu0 0.0
    %2610 = vmatpush1.msra.mxu0 0.0
    %2611 = vmatprep.subr.mxu0 0.0
    %2612 = vmatpush1.msra.mxu0 0.0
    %2613 = vmatprep.subr.mxu0 0.0
    %2614 = vmatpush1.msra.mxu0 0.0
    %2615 = vmatprep.subr.mxu0 0.0
    %2616 = vmatpush1.msra.mxu0 0.0
    %2617 = vmatprep.subr.mxu0 0.0
    %2618 = vmatpush1.msra.mxu0 0.0
    %2619 = vmatprep.subr.mxu0 0.0
    %2620 = vmatpush1.msra.mxu0 0.0
    %2621 = vmatprep.subr.mxu0 0.0
    %2622 = vmatpush1.msra.mxu0 0.0
    %2623 = vmatprep.subr.mxu0 0.0
    %2624 = vmatpush1.msra.mxu0 0.0
    %2625 = vmatprep.subr.mxu0 0.0
    %2626 = vmatpush1.msra.mxu0 0.0
    %2627 = vmatprep.subr.mxu0 0.0
    %2628 = vmatpush1.msra.mxu0 0.0
    %2629 = vmatprep.subr.mxu0 0.0
    %2630 = vmatpush1.msra.mxu0 0.0
    %2631 = vmatprep.subr.mxu0 0.0
    %2632 = vmatpush1.msra.mxu0 0.0
    %2633 = vmatprep.subr.mxu0 0.0
    %2634 = vmatpush1.msra.mxu0 0.0
    %2635 = vmatprep.subr.mxu0 0.0
    %2636 = vmatpush1.msra.mxu0 0.0
    %2637 = vmatprep.subr.mxu0 0.0
    %2638 = vmatpush1.msra.mxu0 0.0
    %2639 = vmatprep.subr.mxu0 0.0
    %2640 = vmatpush1.msra.mxu0 0.0
    %2641 = vmatprep.subr.mxu0 0.0
    %2642 = vmatpush1.msra.mxu0 0.0
    %2643 = vmatprep.subr.mxu0 0.0
    %2644 = vmatpush1.msra.mxu0 0.0
    %2645 = vmatprep.subr.mxu0 0.0
    %2646 = vmatpush1.msra.mxu0 0.0
    %2647 = vmatprep.subr.mxu0 0.0
    %2648 = vmatpush1.msra.mxu0 0.0
    %2649 = vmatprep.subr.mxu0 0.0
    %2650 = vmatpush1.msra.mxu0 0.0
    %2651 = vmatprep.subr.mxu0 0.0
    %2652 = vmatpush1.msra.mxu0 0.0
    %2653 = vmatprep.subr.mxu0 0.0
    %2654 = vmatpush1.msra.mxu0 0.0
    %2655 = vmatprep.subr.mxu0 0.0
    %2656 = vmatpush1.msra.mxu0 0.0
    %2657 = vmatprep.subr.mxu0 0.0
    %2658 = vmatpush1.msra.mxu0 0.0
    %2659 = vmatprep.subr.mxu0 0.0
    %2660 = vmatpush1.msra.mxu0 0.0
    %2661 = vmatprep.subr.mxu0 0.0
    %2662 = vmatpush1.msra.mxu0 0.0
    %2663 = vmatprep.subr.mxu0 0.0
    %2664 = vmatpush1.msra.mxu0 0.0
    %2665 = vmatprep.subr.mxu0 0.0
    %2666 = vmatpush1.msra.mxu0 0.0
    %2667 = vmatprep.subr.mxu0 0.0
    %2668 = vmatpush1.msra.mxu0 0.0
    %2669 = vmatprep.mubr.f32.mxu0 0.0
    %v2670 = vand.u32 %v632, 4294901760
    %2671 = vmatmul.mubr.f32.gmra.mrb[0].mxu0 %v2670
    %v2672 = vpop.f32.mrb[0].mxu0
    %v2673 = vadd.f32 %v2564, %v2672
    %v2674 = vpop.f32.mrb[0].mxu0
    %2675 = vmatprep.mubr.f32.mxu0 0.0
    %v2676 = vand.u32 %v635, 4294901760
    %2677 = vmatmul.mubr.f32.gmra.mrb[0].mxu0 %v2676
    %v2678 = vpop.f32.mrb[0].mxu0
    %v2679 = vadd.f32 %v2572, %v2678
    %v2680 = vpop.f32.mrb[0].mxu0
    %2681 = vmatprep.mubr.f32.mxu0 0.0
    %v2682 = vand.u32 %v638, 4294901760
    %2683 = vmatmul.mubr.f32.gmra.mrb[0].mxu0 %v2682
    %v2684 = vpop.f32.mrb[0].mxu0
    %v2685 = vadd.f32 %v2580, %v2684
    %v2686 = vpop.f32.mrb[0].mxu0
    %2687 = vmatprep.mubr.f32.mxu0 0.0
    %v2688 = vand.u32 %v641, 4294901760
    %2689 = vmatmul.mubr.f32.gmra.mrb[0].mxu0 %v2688
    %v2690 = vpop.f32.mrb[0].mxu0
    %v2691 = vadd.f32 %v2588, %v2690
    %v2692 = vpop.f32.mrb[0].mxu0
    %2693 = vmatprep.mubr.f32.mxu0 0.0
    %v2694 = vand.u32 %v644, 4294901760
    %2695 = vmatmul.mubr.f32.gmra.mrb[0].mxu0 %v2694
    %v2696 = vpop.f32.mrb[0].mxu0
    %v2697 = vadd.f32 %v2596, %v2696
    %v2698 = vpop.f32.mrb[0].mxu0
    %2699 = vdwg.mxu0
    %2700 = vmatprep.subr.mxu0 0.0
    %v2701 = vand.u32 %v2027, 4294901760
    %2702 = vmatpush1.msra.mxu0 %v2701
    %2703 = vmatprep.subr.mxu0 0.0
    %v2704 = vand.u32 %v2028, 4294901760
    %2705 = vmatpush1.msra.mxu0 %v2704
    %2706 = vmatprep.subr.mxu0 0.0
    %2707 = vmatpush1.msra.mxu0 0.0
    %2708 = vmatprep.subr.mxu0 0.0
    %2709 = vmatpush1.msra.mxu0 0.0
    %2710 = vmatprep.subr.mxu0 0.0
    %2711 = vmatpush1.msra.mxu0 0.0
    %2712 = vmatprep.subr.mxu0 0.0
    %2713 = vmatpush1.msra.mxu0 0.0
    %2714 = vmatprep.subr.mxu0 0.0
    %2715 = vmatpush1.msra.mxu0 0.0
    %2716 = vmatprep.subr.mxu0 0.0
    %2717 = vmatpush1.msra.mxu0 0.0
    %2718 = vmatprep.subr.mxu0 0.0
    %2719 = vmatpush1.msra.mxu0 0.0
    %2720 = vmatprep.subr.mxu0 0.0
    %2721 = vmatpush1.msra.mxu0 0.0
    %2722 = vmatprep.subr.mxu0 0.0
    %2723 = vmatpush1.msra.mxu0 0.0
    %2724 = vmatprep.subr.mxu0 0.0
    %2725 = vmatpush1.msra.mxu0 0.0
    %2726 = vmatprep.subr.mxu0 0.0
    %2727 = vmatpush1.msra.mxu0 0.0
    %2728 = vmatprep.subr.mxu0 0.0
    %2729 = vmatpush1.msra.mxu0 0.0
    %2730 = vmatprep.subr.mxu0 0.0
    %2731 = vmatpush1.msra.mxu0 0.0
    %2732 = vmatprep.subr.mxu0 0.0
    %2733 = vmatpush1.msra.mxu0 0.0
    %2734 = vmatprep.subr.mxu0 0.0
    %2735 = vmatpush1.msra.mxu0 0.0
    %2736 = vmatprep.subr.mxu0 0.0
    %2737 = vmatpush1.msra.mxu0 0.0
    %2738 = vmatprep.subr.mxu0 0.0
    %2739 = vmatpush1.msra.mxu0 0.0
    %2740 = vmatprep.subr.mxu0 0.0
    %2741 = vmatpush1.msra.mxu0 0.0
    %2742 = vmatprep.subr.mxu0 0.0
    %2743 = vmatpush1.msra.mxu0 0.0
    %2744 = vmatprep.subr.mxu0 0.0
    %2745 = vmatpush1.msra.mxu0 0.0
    %2746 = vmatprep.subr.mxu0 0.0
    %2747 = vmatpush1.msra.mxu0 0.0
    %2748 = vmatprep.subr.mxu0 0.0
    %2749 = vmatpush1.msra.mxu0 0.0
    %2750 = vmatprep.subr.mxu0 0.0
    %2751 = vmatpush1.msra.mxu0 0.0
    %2752 = vmatprep.subr.mxu0 0.0
    %2753 = vmatpush1.msra.mxu0 0.0
    %2754 = vmatprep.subr.mxu0 0.0
    %2755 = vmatpush1.msra.mxu0 0.0
    %2756 = vmatprep.subr.mxu0 0.0
    %2757 = vmatpush1.msra.mxu0 0.0
    %2758 = vmatprep.subr.mxu0 0.0
    %2759 = vmatpush1.msra.mxu0 0.0
    %2760 = vmatprep.subr.mxu0 0.0
    %2761 = vmatpush1.msra.mxu0 0.0
    %2762 = vmatprep.subr.mxu0 0.0
    %2763 = vmatpush1.msra.mxu0 0.0
    %2764 = vmatprep.subr.mxu0 0.0
    %2765 = vmatpush1.msra.mxu0 0.0
    %2766 = vmatprep.mubr.f32.mxu0 0.0
    %v2767 = vand.u32 %v632, 4294901760
    %2768 = vmatmul.mubr.f32.gmra.mrb[0].mxu0 %v2767
    %v2769 = vpop.f32.mrb[0].mxu0
    %v2770 = vadd.f32 %v2673, %v2769
    %v2771 = vpop.f32.mrb[0].mxu0
    %2772 = vmatprep.mubr.f32.mxu0 0.0
    %v2773 = vand.u32 %v635, 4294901760
    %2774 = vmatmul.mubr.f32.gmra.mrb[0].mxu0 %v2773
    %v2775 = vpop.f32.mrb[0].mxu0
    %v2776 = vadd.f32 %v2679, %v2775
    %v2777 = vpop.f32.mrb[0].mxu0
    %2778 = vmatprep.mubr.f32.mxu0 0.0
    %v2779 = vand.u32 %v638, 4294901760
    %2780 = vmatmul.mubr.f32.gmra.mrb[0].mxu0 %v2779
    %v2781 = vpop.f32.mrb[0].mxu0
    %v2782 = vadd.f32 %v2685, %v2781
    %v2783 = vpop.f32.mrb[0].mxu0
    %2784 = vmatprep.mubr.f32.mxu0 0.0
    %v2785 = vand.u32 %v641, 4294901760
    %2786 = vmatmul.mubr.f32.gmra.mrb[0].mxu0 %v2785
    %v2787 = vpop.f32.mrb[0].mxu0
    %v2788 = vadd.f32 %v2691, %v2787
    %v2789 = vpop.f32.mrb[0].mxu0
    %2790 = vmatprep.mubr.f32.mxu0 0.0
    %v2791 = vand.u32 %v644, 4294901760
    %2792 = vmatmul.mubr.f32.gmra.mrb[0].mxu0 %v2791
    %v2793 = vpop.f32.mrb[0].mxu0
    %v2794 = vadd.f32 %v2697, %v2793
    %v2795 = vpop.f32.mrb[0].mxu0
    %2796 = vdwg.mxu0
    %v2797 = vmax.f32 %v2770, 0.0
    %v2798 = vmax.f32 %v2776, 0.0
    %v2799 = vmax.f32 %v2782, 0.0
    %v2800 = vmax.f32 %v2788, 0.0
    %v2801 = vmax.f32 %v2794, 0.0
    %2802 = vmatprep.subr.mxu0 0.0
    %v2803 = vand.u32 %v2797, 4294901760
    %2804 = vmatpush1.msra.mxu0 %v2803
    %2805 = vmatprep.subr.mxu0 0.0
    %v2806 = vand.u32 %v2798, 4294901760
    %2807 = vmatpush1.msra.mxu0 %v2806
    %2808 = vmatprep.subr.mxu0 0.0
    %v2809 = vand.u32 %v2799, 4294901760
    %2810 = vmatpush1.msra.mxu0 %v2809
    %2811 = vmatprep.subr.mxu0 0.0
    %v2812 = vand.u32 %v2800, 4294901760
    %2813 = vmatpush1.msra.mxu0 %v2812
    %2814 = vmatprep.subr.mxu0 0.0
    %v2815 = vand.u32 %v2801, 4294901760
    %2816 = vmatpush1.msra.mxu0 %v2815
    %2817 = vmatprep.subr.mxu0 0.0
    %2818 = vmatpush1.msra.mxu0 0.0
    %2819 = vmatprep.subr.mxu0 0.0
    %2820 = vmatpush1.msra.mxu0 0.0
    %2821 = vmatprep.subr.mxu0 0.0
    %2822 = vmatpush1.msra.mxu0 0.0
    %2823 = vmatprep.subr.mxu0 0.0
    %2824 = vmatpush1.msra.mxu0 0.0
    %2825 = vmatprep.subr.mxu0 0.0
    %2826 = vmatpush1.msra.mxu0 0.0
    %2827 = vmatprep.subr.mxu0 0.0
    %2828 = vmatpush1.msra.mxu0 0.0
    %2829 = vmatprep.subr.mxu0 0.0
    %2830 = vmatpush1.msra.mxu0 0.0
    %2831 = vmatprep.subr.mxu0 0.0
    %2832 = vmatpush1.msra.mxu0 0.0
    %2833 = vmatprep.subr.mxu0 0.0
    %2834 = vmatpush1.msra.mxu0 0.0
    %2835 = vmatprep.subr.mxu0 0.0
    %2836 = vmatpush1.msra.mxu0 0.0
    %2837 = vmatprep.subr.mxu0 0.0
    %2838 = vmatpush1.msra.mxu0 0.0
    %2839 = vmatprep.subr.mxu0 0.0
    %2840 = vmatpush1.msra.mxu0 0.0
    %2841 = vmatprep.subr.mxu0 0.0
    %2842 = vmatpush1.msra.mxu0 0.0
    %2843 = vmatprep.subr.mxu0 0.0
    %2844 = vmatpush1.msra.mxu0 0.0
    %2845 = vmatprep.subr.mxu0 0.0
    %2846 = vmatpush1.msra.mxu0 0.0
    %2847 = vmatprep.subr.mxu0 0.0
    %2848 = vmatpush1.msra.mxu0 0.0
    %2849 = vmatprep.subr.mxu0 0.0
    %2850 = vmatpush1.msra.mxu0 0.0
    %2851 = vmatprep.subr.mxu0 0.0
    %2852 = vmatpush1.msra.mxu0 0.0
    %2853 = vmatprep.subr.mxu0 0.0
    %2854 = vmatpush1.msra.mxu0 0.0
    %2855 = vmatprep.subr.mxu0 0.0
    %2856 = vmatpush1.msra.mxu0 0.0
    %2857 = vmatprep.subr.mxu0 0.0
    %2858 = vmatpush1.msra.mxu0 0.0
    %2859 = vmatprep.subr.mxu0 0.0
    %2860 = vmatpush1.msra.mxu0 0.0
    %2861 = vmatprep.subr.mxu0 0.0
    %2862 = vmatpush1.msra.mxu0 0.0
    %2863 = vmatprep.subr.mxu0 0.0
    %2864 = vmatpush1.msra.mxu0 0.0
    %2865 = vmatprep.subr.mxu0 0.0
    %2866 = vmatpush1.msra.mxu0 0.0
    %2867 = vmatprep.subr.mxu0 0.0
    %2868 = vmatpush1.msra.mxu0 0.0
    %2869 = vmatprep.subr.mxu0 0.0
    %2870 = vmatpush1.msra.mxu0 0.0
    %2871 = vmatprep.mubr.f32.mxu0 0.0
    %v2872 = vand.u32 %v1284, 4294901760
    %v2873 = vsub.f32 %v1284, %v2872
    %v2874 = vand.u32 %v2873, 4294901760
    %v2875 = vsub.f32 %v2873, %v2874
    %v2876 = vand.u32 %v2875, 4294901760
    %2877 = vmatmul.mubr.f32.gmra.mrb[0].mxu0 %v2876
    %v2878 = vpop.f32.mrb[0].mxu0
    %v2879 = vadd.f32 0.0, %v2878
    %v2880 = vpop.f32.mrb[0].mxu0
    %2881 = vmatprep.mubr.f32.mxu0 0.0
    %v2882 = vand.u32 %v1287, 4294901760
    %v2883 = vsub.f32 %v1287, %v2882
    %v2884 = vand.u32 %v2883, 4294901760
    %v2885 = vsub.f32 %v2883, %v2884
    %v2886 = vand.u32 %v2885, 4294901760
    %2887 = vmatmul.mubr.f32.gmra.mrb[0].mxu0 %v2886
    %v2888 = vpop.f32.mrb[0].mxu0
    %v2889 = vadd.f32 0.0, %v2888
    %v2890 = vpop.f32.mrb[0].mxu0
    %2891 = vdwg.mxu0
    %2892 = vmatprep.subr.mxu0 0.0
    %v2893 = vand.u32 %v2797, 4294901760
    %v2894 = vsub.f32 %v2797, %v2893
    %v2895 = vand.u32 %v2894, 4294901760
    %v2896 = vsub.f32 %v2894, %v2895
    %v2897 = vand.u32 %v2896, 4294901760
    %2898 = vmatpush1.msra.mxu0 %v2897
    %2899 = vmatprep.subr.mxu0 0.0
    %v2900 = vand.u32 %v2798, 4294901760
    %v2901 = vsub.f32 %v2798, %v2900
    %v2902 = vand.u32 %v2901, 4294901760
    %v2903 = vsub.f32 %v2901, %v2902
    %v2904 = vand.u32 %v2903, 4294901760
    %2905 = vmatpush1.msra.mxu0 %v2904
    %2906 = vmatprep.subr.mxu0 0.0
    %v2907 = vand.u32 %v2799, 4294901760
    %v2908 = vsub.f32 %v2799, %v2907
    %v2909 = vand.u32 %v2908, 4294901760
    %v2910 = vsub.f32 %v2908, %v2909
    %v2911 = vand.u32 %v2910, 4294901760
    %2912 = vmatpush1.msra.mxu0 %v2911
    %2913 = vmatprep.subr.mxu0 0.0
    %v2914 = vand.u32 %v2800, 4294901760
    %v2915 = vsub.f32 %v2800, %v2914
    %v2916 = vand.u32 %v2915, 4294901760
    %v2917 = vsub.f32 %v2915, %v2916
    %v2918 = vand.u32 %v2917, 4294901760
    %2919 = vmatpush1.msra.mxu0 %v2918
    %2920 = vmatprep.subr.mxu0 0.0
    %v2921 = vand.u32 %v2801, 4294901760
    %v2922 = vsub.f32 %v2801, %v2921
    %v2923 = vand.u32 %v2922, 4294901760
    %v2924 = vsub.f32 %v2922, %v2923
    %v2925 = vand.u32 %v2924, 4294901760
    %2926 = vmatpush1.msra.mxu0 %v2925
    %2927 = vmatprep.subr.mxu0 0.0
    %2928 = vmatpush1.msra.mxu0 0.0
    %2929 = vmatprep.subr.mxu0 0.0
    %2930 = vmatpush1.msra.mxu0 0.0
    %2931 = vmatprep.subr.mxu0 0.0
    %2932 = vmatpush1.msra.mxu0 0.0
    %2933 = vmatprep.subr.mxu0 0.0
    %2934 = vmatpush1.msra.mxu0 0.0
    %2935 = vmatprep.subr.mxu0 0.0
    %2936 = vmatpush1.msra.mxu0 0.0
    %2937 = vmatprep.subr.mxu0 0.0
    %2938 = vmatpush1.msra.mxu0 0.0
    %2939 = vmatprep.subr.mxu0 0.0
    %2940 = vmatpush1.msra.mxu0 0.0
    %2941 = vmatprep.subr.mxu0 0.0
    %2942 = vmatpush1.msra.mxu0 0.0
    %2943 = vmatprep.subr.mxu0 0.0
    %2944 = vmatpush1.msra.mxu0 0.0
    %2945 = vmatprep.subr.mxu0 0.0
    %2946 = vmatpush1.msra.mxu0 0.0
    %2947 = vmatprep.subr.mxu0 0.0
    %2948 = vmatpush1.msra.mxu0 0.0
    %2949 = vmatprep.subr.mxu0 0.0
    %2950 = vmatpush1.msra.mxu0 0.0
    %2951 = vmatprep.subr.mxu0 0.0
    %2952 = vmatpush1.msra.mxu0 0.0
    %2953 = vmatprep.subr.mxu0 0.0
    %2954 = vmatpush1.msra.mxu0 0.0
    %2955 = vmatprep.subr.mxu0 0.0
    %2956 = vmatpush1.msra.mxu0 0.0
    %2957 = vmatprep.subr.mxu0 0.0
    %2958 = vmatpush1.msra.mxu0 0.0
    %2959 = vmatprep.subr.mxu0 0.0
    %2960 = vmatpush1.msra.mxu0 0.0
    %2961 = vmatprep.subr.mxu0 0.0
    %2962 = vmatpush1.msra.mxu0 0.0
    %2963 = vmatprep.subr.mxu0 0.0
    %2964 = vmatpush1.msra.mxu0 0.0
    %2965 = vmatprep.subr.mxu0 0.0
    %2966 = vmatpush1.msra.mxu0 0.0
    %2967 = vmatprep.subr.mxu0 0.0
    %2968 = vmatpush1.msra.mxu0 0.0
    %2969 = vmatprep.subr.mxu0 0.0
    %2970 = vmatpush1.msra.mxu0 0.0
    %2971 = vmatprep.subr.mxu0 0.0
    %2972 = vmatpush1.msra.mxu0 0.0
    %2973 = vmatprep.subr.mxu0 0.0
    %2974 = vmatpush1.msra.mxu0 0.0
    %2975 = vmatprep.subr.mxu0 0.0
    %2976 = vmatpush1.msra.mxu0 0.0
    %2977 = vmatprep.subr.mxu0 0.0
    %2978 = vmatpush1.msra.mxu0 0.0
    %2979 = vmatprep.subr.mxu0 0.0
    %2980 = vmatpush1.msra.mxu0 0.0
    %2981 = vmatprep.mubr.f32.mxu0 0.0
    %v2982 = vand.u32 %v1284, 4294901760
    %2983 = vmatmul.mubr.f32.gmra.mrb[0].mxu0 %v2982
    %v2984 = vpop.f32.mrb[0].mxu0
    %v2985 = vadd.f32 %v2879, %v2984
    %v2986 = vpop.f32.mrb[0].mxu0
    %2987 = vmatprep.mubr.f32.mxu0 0.0
    %v2988 = vand.u32 %v1287, 4294901760
    %2989 = vmatmul.mubr.f32.gmra.mrb[0].mxu0 %v2988
    %v2990 = vpop.f32.mrb[0].mxu0
    %v2991 = vadd.f32 %v2889, %v2990
    %v2992 = vpop.f32.mrb[0].mxu0
    %2993 = vdwg.mxu0
    %2994 = vmatprep.subr.mxu0 0.0
    %v2995 = vand.u32 %v2797, 4294901760
    %v2996 = vsub.f32 %v2797, %v2995
    %2997 = vmatpush1.msra.mxu0 %v2996
    %2998 = vmatprep.subr.mxu0 0.0
    %v2999 = vand.u32 %v2798, 4294901760
    %v3000 = vsub.f32 %v2798, %v2999
    %3001 = vmatpush1.msra.mxu0 %v3000
    %3002 = vmatprep.subr.mxu0 0.0
    %v3003 = vand.u32 %v2799, 4294901760
    %v3004 = vsub.f32 %v2799, %v3003
    %3005 = vmatpush1.msra.mxu0 %v3004
    %3006 = vmatprep.subr.mxu0 0.0
    %v3007 = vand.u32 %v2800, 4294901760
    %v3008 = vsub.f32 %v2800, %v3007
    %3009 = vmatpush1.msra.mxu0 %v3008
    %3010 = vmatprep.subr.mxu0 0.0
    %v3011 = vand.u32 %v2801, 4294901760
    %v3012 = vsub.f32 %v2801, %v3011
    %3013 = vmatpush1.msra.mxu0 %v3012
    %3014 = vmatprep.subr.mxu0 0.0
    %3015 = vmatpush1.msra.mxu0 0.0
    %3016 = vmatprep.subr.mxu0 0.0
    %3017 = vmatpush1.msra.mxu0 0.0
    %3018 = vmatprep.subr.mxu0 0.0
    %3019 = vmatpush1.msra.mxu0 0.0
    %3020 = vmatprep.subr.mxu0 0.0
    %3021 = vmatpush1.msra.mxu0 0.0
    %3022 = vmatprep.subr.mxu0 0.0
    %3023 = vmatpush1.msra.mxu0 0.0
    %3024 = vmatprep.subr.mxu0 0.0
    %3025 = vmatpush1.msra.mxu0 0.0
    %3026 = vmatprep.subr.mxu0 0.0
    %3027 = vmatpush1.msra.mxu0 0.0
    %3028 = vmatprep.subr.mxu0 0.0
    %3029 = vmatpush1.msra.mxu0 0.0
    %3030 = vmatprep.subr.mxu0 0.0
    %3031 = vmatpush1.msra.mxu0 0.0
    %3032 = vmatprep.subr.mxu0 0.0
    %3033 = vmatpush1.msra.mxu0 0.0
    %3034 = vmatprep.subr.mxu0 0.0
    %3035 = vmatpush1.msra.mxu0 0.0
    %3036 = vmatprep.subr.mxu0 0.0
    %3037 = vmatpush1.msra.mxu0 0.0
    %3038 = vmatprep.subr.mxu0 0.0
    %3039 = vmatpush1.msra.mxu0 0.0
    %3040 = vmatprep.subr.mxu0 0.0
    %3041 = vmatpush1.msra.mxu0 0.0
    %3042 = vmatprep.subr.mxu0 0.0
    %3043 = vmatpush1.msra.mxu0 0.0
    %3044 = vmatprep.subr.mxu0 0.0
    %3045 = vmatpush1.msra.mxu0 0.0
    %3046 = vmatprep.subr.mxu0 0.0
    %3047 = vmatpush1.msra.mxu0 0.0
    %3048 = vmatprep.subr.mxu0 0.0
    %3049 = vmatpush1.msra.mxu0 0.0
    %3050 = vmatprep.subr.mxu0 0.0
    %3051 = vmatpush1.msra.mxu0 0.0
    %3052 = vmatprep.subr.mxu0 0.0
    %3053 = vmatpush1.msra.mxu0 0.0
    %3054 = vmatprep.subr.mxu0 0.0
    %3055 = vmatpush1.msra.mxu0 0.0
    %3056 = vmatprep.subr.mxu0 0.0
    %3057 = vmatpush1.msra.mxu0 0.0
    %3058 = vmatprep.subr.mxu0 0.0
    %3059 = vmatpush1.msra.mxu0 0.0
    %3060 = vmatprep.subr.mxu0 0.0
    %3061 = vmatpush1.msra.mxu0 0.0
    %3062 = vmatprep.subr.mxu0 0.0
    %3063 = vmatpush1.msra.mxu0 0.0
    %3064 = vmatprep.subr.mxu0 0.0
    %3065 = vmatpush1.msra.mxu0 0.0
    %3066 = vmatprep.subr.mxu0 0.0
    %3067 = vmatpush1.msra.mxu0 0.0
    %3068 = vmatprep.mubr.f32.mxu0 0.0
    %v3069 = vand.u32 %v1284, 4294901760
    %v3070 = vsub.f32 %v1284, %v3069
    %3071 = vmatmul.mubr.f32.gmra.mrb[0].mxu0 %v3070
    %v3072 = vpop.f32.mrb[0].mxu0
    %v3073 = vadd.f32 %v2985, %v3072
    %v3074 = vpop.f32.mrb[0].mxu0
    %3075 = vmatprep.mubr.f32.mxu0 0.0
    %v3076 = vand.u32 %v1287, 4294901760
    %v3077 = vsub.f32 %v1287, %v3076
    %3078 = vmatmul.mubr.f32.gmra.mrb[0].mxu0 %v3077
    %v3079 = vpop.f32.mrb[0].mxu0
    %v3080 = vadd.f32 %v2991, %v3079
    %v3081 = vpop.f32.mrb[0].mxu0
    %3082 = vdwg.mxu0
    %3083 = vmatprep.subr.mxu0 0.0
    %v3084 = vand.u32 %v2797, 4294901760
    %3085 = vmatpush1.msra.mxu0 %v3084
    %3086 = vmatprep.subr.mxu0 0.0
    %v3087 = vand.u32 %v2798, 4294901760
    %3088 = vmatpush1.msra.mxu0 %v3087
    %3089 = vmatprep.subr.mxu0 0.0
    %v3090 = vand.u32 %v2799, 4294901760
    %3091 = vmatpush1.msra.mxu0 %v3090
    %3092 = vmatprep.subr.mxu0 0.0
    %v3093 = vand.u32 %v2800, 4294901760
    %3094 = vmatpush1.msra.mxu0 %v3093
    %3095 = vmatprep.subr.mxu0 0.0
    %v3096 = vand.u32 %v2801, 4294901760
    %3097 = vmatpush1.msra.mxu0 %v3096
    %3098 = vmatprep.subr.mxu0 0.0
    %3099 = vmatpush1.msra.mxu0 0.0
    %3100 = vmatprep.subr.mxu0 0.0
    %3101 = vmatpush1.msra.mxu0 0.0
    %3102 = vmatprep.subr.mxu0 0.0
    %3103 = vmatpush1.msra.mxu0 0.0
    %3104 = vmatprep.subr.mxu0 0.0
    %3105 = vmatpush1.msra.mxu0 0.0
    %3106 = vmatprep.subr.mxu0 0.0
    %3107 = vmatpush1.msra.mxu0 0.0
    %3108 = vmatprep.subr.mxu0 0.0
    %3109 = vmatpush1.msra.mxu0 0.0
    %3110 = vmatprep.subr.mxu0 0.0
    %3111 = vmatpush1.msra.mxu0 0.0
    %3112 = vmatprep.subr.mxu0 0.0
    %3113 = vmatpush1.msra.mxu0 0.0
    %3114 = vmatprep.subr.mxu0 0.0
    %3115 = vmatpush1.msra.mxu0 0.0
    %3116 = vmatprep.subr.mxu0 0.0
    %3117 = vmatpush1.msra.mxu0 0.0
    %3118 = vmatprep.subr.mxu0 0.0
    %3119 = vmatpush1.msra.mxu0 0.0
    %3120 = vmatprep.subr.mxu0 0.0
    %3121 = vmatpush1.msra.mxu0 0.0
    %3122 = vmatprep.subr.mxu0 0.0
    %3123 = vmatpush1.msra.mxu0 0.0
    %3124 = vmatprep.subr.mxu0 0.0
    %3125 = vmatpush1.msra.mxu0 0.0
    %3126 = vmatprep.subr.mxu0 0.0
    %3127 = vmatpush1.msra.mxu0 0.0
    %3128 = vmatprep.subr.mxu0 0.0
    %3129 = vmatpush1.msra.mxu0 0.0
    %3130 = vmatprep.subr.mxu0 0.0
    %3131 = vmatpush1.msra.mxu0 0.0
    %3132 = vmatprep.subr.mxu0 0.0
    %3133 = vmatpush1.msra.mxu0 0.0
    %3134 = vmatprep.subr.mxu0 0.0
    %3135 = vmatpush1.msra.mxu0 0.0
    %3136 = vmatprep.subr.mxu0 0.0
    %3137 = vmatpush1.msra.mxu0 0.0
    %3138 = vmatprep.subr.mxu0 0.0
    %3139 = vmatpush1.msra.mxu0 0.0
    %3140 = vmatprep.subr.mxu0 0.0
    %3141 = vmatpush1.msra.mxu0 0.0
    %3142 = vmatprep.subr.mxu0 0.0
    %3143 = vmatpush1.msra.mxu0 0.0
    %3144 = vmatprep.subr.mxu0 0.0
    %3145 = vmatpush1.msra.mxu0 0.0
    %3146 = vmatprep.subr.mxu0 0.0
    %3147 = vmatpush1.msra.mxu0 0.0
    %3148 = vmatprep.subr.mxu0 0.0
    %3149 = vmatpush1.msra.mxu0 0.0
    %3150 = vmatprep.subr.mxu0 0.0
    %3151 = vmatpush1.msra.mxu0 0.0
    %3152 = vmatprep.mubr.f32.mxu0 0.0
    %v3153 = vand.u32 %v1284, 4294901760
    %v3154 = vsub.f32 %v1284, %v3153
    %v3155 = vand.u32 %v3154, 4294901760
    %3156 = vmatmul.mubr.f32.gmra.mrb[0].mxu0 %v3155
    %v3157 = vpop.f32.mrb[0].mxu0
    %v3158 = vadd.f32 %v3073, %v3157
    %v3159 = vpop.f32.mrb[0].mxu0
    %3160 = vmatprep.mubr.f32.mxu0 0.0
    %v3161 = vand.u32 %v1287, 4294901760
    %v3162 = vsub.f32 %v1287, %v3161
    %v3163 = vand.u32 %v3162, 4294901760
    %3164 = vmatmul.mubr.f32.gmra.mrb[0].mxu0 %v3163
    %v3165 = vpop.f32.mrb[0].mxu0
    %v3166 = vadd.f32 %v3080, %v3165
    %v3167 = vpop.f32.mrb[0].mxu0
    %3168 = vdwg.mxu0
    %3169 = vmatprep.subr.mxu0 0.0
    %v3170 = vand.u32 %v2797, 4294901760
    %v3171 = vsub.f32 %v2797, %v3170
    %v3172 = vand.u32 %v3171, 4294901760
    %3173 = vmatpush1.msra.mxu0 %v3172
    %3174 = vmatprep.subr.mxu0 0.0
    %v3175 = vand.u32 %v2798, 4294901760
    %v3176 = vsub.f32 %v2798, %v3175
    %v3177 = vand.u32 %v3176, 4294901760
    %3178 = vmatpush1.msra.mxu0 %v3177
    %3179 = vmatprep.subr.mxu0 0.0
    %v3180 = vand.u32 %v2799, 4294901760
    %v3181 = vsub.f32 %v2799, %v3180
    %v3182 = vand.u32 %v3181, 4294901760
    %3183 = vmatpush1.msra.mxu0 %v3182
    %3184 = vmatprep.subr.mxu0 0.0
    %v3185 = vand.u32 %v2800, 4294901760
    %v3186 = vsub.f32 %v2800, %v3185
    %v3187 = vand.u32 %v3186, 4294901760
    %3188 = vmatpush1.msra.mxu0 %v3187
    %3189 = vmatprep.subr.mxu0 0.0
    %v3190 = vand.u32 %v2801, 4294901760
    %v3191 = vsub.f32 %v2801, %v3190
    %v3192 = vand.u32 %v3191, 4294901760
    %3193 = vmatpush1.msra.mxu0 %v3192
    %3194 = vmatprep.subr.mxu0 0.0
    %3195 = vmatpush1.msra.mxu0 0.0
    %3196 = vmatprep.subr.mxu0 0.0
    %3197 = vmatpush1.msra.mxu0 0.0
    %3198 = vmatprep.subr.mxu0 0.0
    %3199 = vmatpush1.msra.mxu0 0.0
    %3200 = vmatprep.subr.mxu0 0.0
    %3201 = vmatpush1.msra.mxu0 0.0
    %3202 = vmatprep.subr.mxu0 0.0
    %3203 = vmatpush1.msra.mxu0 0.0
    %3204 = vmatprep.subr.mxu0 0.0
    %3205 = vmatpush1.msra.mxu0 0.0
    %3206 = vmatprep.subr.mxu0 0.0
    %3207 = vmatpush1.msra.mxu0 0.0
    %3208 = vmatprep.subr.mxu0 0.0
    %3209 = vmatpush1.msra.mxu0 0.0
    %3210 = vmatprep.subr.mxu0 0.0
    %3211 = vmatpush1.msra.mxu0 0.0
    %3212 = vmatprep.subr.mxu0 0.0
    %3213 = vmatpush1.msra.mxu0 0.0
    %3214 = vmatprep.subr.mxu0 0.0
    %3215 = vmatpush1.msra.mxu0 0.0
    %3216 = vmatprep.subr.mxu0 0.0
    %3217 = vmatpush1.msra.mxu0 0.0
    %3218 = vmatprep.subr.mxu0 0.0
    %3219 = vmatpush1.msra.mxu0 0.0
    %3220 = vmatprep.subr.mxu0 0.0
    %3221 = vmatpush1.msra.mxu0 0.0
    %3222 = vmatprep.subr.mxu0 0.0
    %3223 = vmatpush1.msra.mxu0 0.0
    %3224 = vmatprep.subr.mxu0 0.0
    %3225 = vmatpush1.msra.mxu0 0.0
    %3226 = vmatprep.subr.mxu0 0.0
    %3227 = vmatpush1.msra.mxu0 0.0
    %3228 = vmatprep.subr.mxu0 0.0
    %3229 = vmatpush1.msra.mxu0 0.0
    %3230 = vmatprep.subr.mxu0 0.0
    %3231 = vmatpush1.msra.mxu0 0.0
    %3232 = vmatprep.subr.mxu0 0.0
    %3233 = vmatpush1.msra.mxu0 0.0
    %3234 = vmatprep.subr.mxu0 0.0
    %3235 = vmatpush1.msra.mxu0 0.0
    %3236 = vmatprep.subr.mxu0 0.0
    %3237 = vmatpush1.msra.mxu0 0.0
    %3238 = vmatprep.subr.mxu0 0.0
    %3239 = vmatpush1.msra.mxu0 0.0
    %3240 = vmatprep.subr.mxu0 0.0
    %3241 = vmatpush1.msra.mxu0 0.0
    %3242 = vmatprep.subr.mxu0 0.0
    %3243 = vmatpush1.msra.mxu0 0.0
    %3244 = vmatprep.subr.mxu0 0.0
    %3245 = vmatpush1.msra.mxu0 0.0
    %3246 = vmatprep.subr.mxu0 0.0
    %3247 = vmatpush1.msra.mxu0 0.0
    %3248 = vmatprep.mubr.f32.mxu0 0.0
    %v3249 = vand.u32 %v1284, 4294901760
    %3250 = vmatmul.mubr.f32.gmra.mrb[0].mxu0 %v3249
    %v3251 = vpop.f32.mrb[0].mxu0
    %v3252 = vadd.f32 %v3158, %v3251
    %v3253 = vpop.f32.mrb[0].mxu0
    %3254 = vmatprep.mubr.f32.mxu0 0.0
    %v3255 = vand.u32 %v1287, 4294901760
    %3256 = vmatmul.mubr.f32.gmra.mrb[0].mxu0 %v3255
    %v3257 = vpop.f32.mrb[0].mxu0
    %v3258 = vadd.f32 %v3166, %v3257
    %v3259 = vpop.f32.mrb[0].mxu0
    %3260 = vdwg.mxu0
    %3261 = vmatprep.subr.mxu0 0.0
    %v3262 = vand.u32 %v2797, 4294901760
    %3263 = vmatpush1.msra.mxu0 %v3262
    %3264 = vmatprep.subr.mxu0 0.0
    %v3265 = vand.u32 %v2798, 4294901760
    %3266 = vmatpush1.msra.mxu0 %v3265
    %3267 = vmatprep.subr.mxu0 0.0
    %v3268 = vand.u32 %v2799, 4294901760
    %3269 = vmatpush1.msra.mxu0 %v3268
    %3270 = vmatprep.subr.mxu0 0.0
    %v3271 = vand.u32 %v2800, 4294901760
    %3272 = vmatpush1.msra.mxu0 %v3271
    %3273 = vmatprep.subr.mxu0 0.0
    %v3274 = vand.u32 %v2801, 4294901760
    %3275 = vmatpush1.msra.mxu0 %v3274
    %3276 = vmatprep.subr.mxu0 0.0
    %3277 = vmatpush1.msra.mxu0 0.0
    %3278 = vmatprep.subr.mxu0 0.0
    %3279 = vmatpush1.msra.mxu0 0.0
    %3280 = vmatprep.subr.mxu0 0.0
    %3281 = vmatpush1.msra.mxu0 0.0
    %3282 = vmatprep.subr.mxu0 0.0
    %3283 = vmatpush1.msra.mxu0 0.0
    %3284 = vmatprep.subr.mxu0 0.0
    %3285 = vmatpush1.msra.mxu0 0.0
    %3286 = vmatprep.subr.mxu0 0.0
    %3287 = vmatpush1.msra.mxu0 0.0
    %3288 = vmatprep.subr.mxu0 0.0
    %3289 = vmatpush1.msra.mxu0 0.0
    %3290 = vmatprep.subr.mxu0 0.0
    %3291 = vmatpush1.msra.mxu0 0.0
    %3292 = vmatprep.subr.mxu0 0.0
    %3293 = vmatpush1.msra.mxu0 0.0
    %3294 = vmatprep.subr.mxu0 0.0
    %3295 = vmatpush1.msra.mxu0 0.0
    %3296 = vmatprep.subr.mxu0 0.0
    %3297 = vmatpush1.msra.mxu0 0.0
    %3298 = vmatprep.subr.mxu0 0.0
    %3299 = vmatpush1.msra.mxu0 0.0
    %3300 = vmatprep.subr.mxu0 0.0
    %3301 = vmatpush1.msra.mxu0 0.0
    %3302 = vmatprep.subr.mxu0 0.0
    %3303 = vmatpush1.msra.mxu0 0.0
    %3304 = vmatprep.subr.mxu0 0.0
    %3305 = vmatpush1.msra.mxu0 0.0
    %3306 = vmatprep.subr.mxu0 0.0
    %3307 = vmatpush1.msra.mxu0 0.0
    %3308 = vmatprep.subr.mxu0 0.0
    %3309 = vmatpush1.msra.mxu0 0.0
    %3310 = vmatprep.subr.mxu0 0.0
    %3311 = vmatpush1.msra.mxu0 0.0
    %3312 = vmatprep.subr.mxu0 0.0
    %3313 = vmatpush1.msra.mxu0 0.0
    %3314 = vmatprep.subr.mxu0 0.0
    %3315 = vmatpush1.msra.mxu0 0.0
    %3316 = vmatprep.subr.mxu0 0.0
    %3317 = vmatpush1.msra.mxu0 0.0
    %3318 = vmatprep.subr.mxu0 0.0
    %3319 = vmatpush1.msra.mxu0 0.0
    %3320 = vmatprep.subr.mxu0 0.0
    %3321 = vmatpush1.msra.mxu0 0.0
    %3322 = vmatprep.subr.mxu0 0.0
    %3323 = vmatpush1.msra.mxu0 0.0
    %3324 = vmatprep.subr.mxu0 0.0
    %3325 = vmatpush1.msra.mxu0 0.0
    %3326 = vmatprep.subr.mxu0 0.0
    %3327 = vmatpush1.msra.mxu0 0.0
    %3328 = vmatprep.subr.mxu0 0.0
    %3329 = vmatpush1.msra.mxu0 0.0
    %3330 = vmatprep.mubr.f32.mxu0 0.0
    %v3331 = vand.u32 %v1284, 4294901760
    %3332 = vmatmul.mubr.f32.gmra.mrb[0].mxu0 %v3331
    %v3333 = vpop.f32.mrb[0].mxu0
    %v3334 = vadd.f32 %v3252, %v3333
    %v3335 = vpop.f32.mrb[0].mxu0
    %3336 = vmatprep.mubr.f32.mxu0 0.0
    %v3337 = vand.u32 %v1287, 4294901760
    %3338 = vmatmul.mubr.f32.gmra.mrb[0].mxu0 %v3337
    %v3339 = vpop.f32.mrb[0].mxu0
    %v3340 = vadd.f32 %v3258, %v3339
    %v3341 = vpop.f32.mrb[0].mxu0
    %3342 = vdwg.mxu0
    %s3343 = sld [smem:[#allocation2 + $0x1]]
    %v3344 = vstv %s3343
    %v3345 = vmul.f32 %v3344, %v2027
    %v3346 = vmul.f32 %v3344, %v2028
    %v3347 = vadd.f32 %v3345, %v3334
    %v3348 = vadd.f32 %v3346, %v3340
    %v3349 = vld [vmem:[%s16] sm:$0xff]
    %v3350 = vld [vmem:[%s16 + $0x8] sm:$0xff]
    %v3351 = vld [vmem:[%s16 + $0x10] sm:$0xff]
    %v3352 = vld [vmem:[%s16 + $0x18] sm:$0xff]
    %v3353 = vld [vmem:[#allocation16] sm:$0xff]
    %v3354 = vld [vmem:[#allocation16 + $0x8] sm:$0xff]
    %v3355 = vld [vmem:[#allocation16 + $0x10] sm:$0xff]
    %v3356 = vld [vmem:[#allocation16 + $0x18] sm:$0xff]
    %v3357 = vld [vmem:[%s18] sm:$0xf]
    %v3358 = vlaneseq
    %v3359 = vshrl.u32 %v3358, 7
    %v3360 = vsub.s32 0, %v3359
    %v3361 = vrot.slane %v3357, %v3360
    %v3363 = vsel %vm1933, %v3347, 0
    %v3366 = vsel %vm1933, %v3348, 0
    %3368 = vmatprep.subr.mxu0 0.0
    %3369 = vmatpush1.msra.mxu0 %v3349
    %3370 = vmatprep.subr.mxu0 0.0
    %3371 = vmatpush1.msra.mxu0 %v3350
    %3372 = vmatprep.subr.mxu0 0.0
    %3373 = vmatpush1.msra.mxu0 %v3351
    %3374 = vmatprep.subr.mxu0 0.0
    %3375 = vmatpush1.msra.mxu0 %v3352
    %3376 = vmatprep.subr.mxu0 0.0
    %3377 = vmatpush1.msra.mxu0 0.0
    %3378 = vmatprep.subr.mxu0 0.0
    %3379 = vmatpush1.msra.mxu0 0.0
    %3380 = vmatprep.subr.mxu0 0.0
    %3381 = vmatpush1.msra.mxu0 0.0
    %3382 = vmatprep.subr.mxu0 0.0
    %3383 = vmatpush1.msra.mxu0 0.0
    %3384 = vmatprep.subr.mxu0 0.0
    %3385 = vmatpush1.msra.mxu0 0.0
    %3386 = vmatprep.subr.mxu0 0.0
    %3387 = vmatpush1.msra.mxu0 0.0
    %3388 = vmatprep.subr.mxu0 0.0
    %3389 = vmatpush1.msra.mxu0 0.0
    %3390 = vmatprep.subr.mxu0 0.0
    %3391 = vmatpush1.msra.mxu0 0.0
    %3392 = vmatprep.subr.mxu0 0.0
    %3393 = vmatpush1.msra.mxu0 0.0
    %3394 = vmatprep.subr.mxu0 0.0
    %3395 = vmatpush1.msra.mxu0 0.0
    %3396 = vmatprep.subr.mxu0 0.0
    %3397 = vmatpush1.msra.mxu0 0.0
    %3398 = vmatprep.subr.mxu0 0.0
    %3399 = vmatpush1.msra.mxu0 0.0
    %3400 = vmatprep.subr.mxu0 0.0
    %3401 = vmatpush1.msra.mxu0 0.0
    %3402 = vmatprep.subr.mxu0 0.0
    %3403 = vmatpush1.msra.mxu0 0.0
    %3404 = vmatprep.subr.mxu0 0.0
    %3405 = vmatpush1.msra.mxu0 0.0
    %3406 = vmatprep.subr.mxu0 0.0
    %3407 = vmatpush1.msra.mxu0 0.0
    %3408 = vmatprep.subr.mxu0 0.0
    %3409 = vmatpush1.msra.mxu0 0.0
    %3410 = vmatprep.subr.mxu0 0.0
    %3411 = vmatpush1.msra.mxu0 0.0
    %3412 = vmatprep.subr.mxu0 0.0
    %3413 = vmatpush1.msra.mxu0 0.0
    %3414 = vmatprep.subr.mxu0 0.0
    %3415 = vmatpush1.msra.mxu0 0.0
    %3416 = vmatprep.subr.mxu0 0.0
    %3417 = vmatpush1.msra.mxu0 0.0
    %3418 = vmatprep.subr.mxu0 0.0
    %3419 = vmatpush1.msra.mxu0 0.0
    %3420 = vmatprep.subr.mxu0 0.0
    %3421 = vmatpush1.msra.mxu0 0.0
    %3422 = vmatprep.subr.mxu0 0.0
    %3423 = vmatpush1.msra.mxu0 0.0
    %3424 = vmatprep.subr.mxu0 0.0
    %3425 = vmatpush1.msra.mxu0 0.0
    %3426 = vmatprep.subr.mxu0 0.0
    %3427 = vmatpush1.msra.mxu0 0.0
    %3428 = vmatprep.subr.mxu0 0.0
    %3429 = vmatpush1.msra.mxu0 0.0
    %3430 = vmatprep.subr.mxu0 0.0
    %3431 = vmatpush1.msra.mxu0 0.0
    %3432 = vmatprep.mubr.f32.mxu0 0.0
    %3433 = vmatmul.mubr.f32.gmra.mrb[0].mxu0 %v3363
    %v3434 = vpop.f32.mrb[0].mxu0
    %v3435 = vadd.f32 %v3361, %v3434
    %v3436 = vpop.f32.mrb[0].mxu0
    %3437 = vmatprep.mubr.f32.mxu0 0.0
    %3438 = vmatmul.mubr.f32.gmra.mrb[0].mxu0 %v3366
    %v3439 = vpop.f32.mrb[0].mxu0
    %v3440 = vadd.f32 %v3361, %v3439
    %v3441 = vpop.f32.mrb[0].mxu0
    %3442 = vdwg.mxu0
    %v3443 = vmax.f32 %v3435, 0.0
    %v3444 = vmax.f32 %v3440, 0.0
    %v3445 = vlaneseq
    %v3446 = vshrl.u32 %v3445, 7
    %v3447 = vsub.s32 1, %v3446
    %v3448 = vrot.slane %v3357, %v3447
    %v3450 = vsel %vm1933, %v3443, 0
    %v3453 = vsel %vm1933, %v3444, 0
    %3455 = vmatprep.subr.mxu0 0.0
    %3456 = vmatpush1.msra.mxu0 %v3353
    %3457 = vmatprep.subr.mxu0 0.0
    %3458 = vmatpush1.msra.mxu0 %v3354
    %3459 = vmatprep.subr.mxu0 0.0
    %3460 = vmatpush1.msra.mxu0 %v3355
    %3461 = vmatprep.subr.mxu0 0.0
    %3462 = vmatpush1.msra.mxu0 %v3356
    %3463 = vmatprep.subr.mxu0 0.0
    %3464 = vmatpush1.msra.mxu0 0.0
    %3465 = vmatprep.subr.mxu0 0.0
    %3466 = vmatpush1.msra.mxu0 0.0
    %3467 = vmatprep.subr.mxu0 0.0
    %3468 = vmatpush1.msra.mxu0 0.0
    %3469 = vmatprep.subr.mxu0 0.0
    %3470 = vmatpush1.msra.mxu0 0.0
    %3471 = vmatprep.subr.mxu0 0.0
    %3472 = vmatpush1.msra.mxu0 0.0
    %3473 = vmatprep.subr.mxu0 0.0
    %3474 = vmatpush1.msra.mxu0 0.0
    %3475 = vmatprep.subr.mxu0 0.0
    %3476 = vmatpush1.msra.mxu0 0.0
    %3477 = vmatprep.subr.mxu0 0.0
    %3478 = vmatpush1.msra.mxu0 0.0
    %3479 = vmatprep.subr.mxu0 0.0
    %3480 = vmatpush1.msra.mxu0 0.0
    %3481 = vmatprep.subr.mxu0 0.0
    %3482 = vmatpush1.msra.mxu0 0.0
    %3483 = vmatprep.subr.mxu0 0.0
    %3484 = vmatpush1.msra.mxu0 0.0
    %3485 = vmatprep.subr.mxu0 0.0
    %3486 = vmatpush1.msra.mxu0 0.0
    %3487 = vmatprep.subr.mxu0 0.0
    %3488 = vmatpush1.msra.mxu0 0.0
    %3489 = vmatprep.subr.mxu0 0.0
    %3490 = vmatpush1.msra.mxu0 0.0
    %3491 = vmatprep.subr.mxu0 0.0
    %3492 = vmatpush1.msra.mxu0 0.0
    %3493 = vmatprep.subr.mxu0 0.0
    %3494 = vmatpush1.msra.mxu0 0.0
    %3495 = vmatprep.subr.mxu0 0.0
    %3496 = vmatpush1.msra.mxu0 0.0
    %3497 = vmatprep.subr.mxu0 0.0
    %3498 = vmatpush1.msra.mxu0 0.0
    %3499 = vmatprep.subr.mxu0 0.0
    %3500 = vmatpush1.msra.mxu0 0.0
    %3501 = vmatprep.subr.mxu0 0.0
    %3502 = vmatpush1.msra.mxu0 0.0
    %3503 = vmatprep.subr.mxu0 0.0
    %3504 = vmatpush1.msra.mxu0 0.0
    %3505 = vmatprep.subr.mxu0 0.0
    %3506 = vmatpush1.msra.mxu0 0.0
    %3507 = vmatprep.subr.mxu0 0.0
    %3508 = vmatpush1.msra.mxu0 0.0
    %3509 = vmatprep.subr.mxu0 0.0
    %3510 = vmatpush1.msra.mxu0 0.0
    %3511 = vmatprep.subr.mxu0 0.0
    %3512 = vmatpush1.msra.mxu0 0.0
    %3513 = vmatprep.subr.mxu0 0.0
    %3514 = vmatpush1.msra.mxu0 0.0
    %3515 = vmatprep.subr.mxu0 0.0
    %3516 = vmatpush1.msra.mxu0 0.0
    %3517 = vmatprep.subr.mxu0 0.0
    %3518 = vmatpush1.msra.mxu0 0.0
    %3519 = vmatprep.mubr.f32.mxu0 0.0
    %3520 = vmatmul.mubr.f32.gmra.mrb[0].mxu0 %v3450
    %v3521 = vpop.f32.mrb[0].mxu0
    %v3522 = vadd.f32 %v3448, %v3521
    %v3523 = vpop.f32.mrb[0].mxu0
    %3524 = vmatprep.mubr.f32.mxu0 0.0
    %3525 = vmatmul.mubr.f32.gmra.mrb[0].mxu0 %v3453
    %v3526 = vpop.f32.mrb[0].mxu0
    %v3527 = vadd.f32 %v3448, %v3526
    %v3528 = vpop.f32.mrb[0].mxu0
    %3529 = vdwg.mxu0
    %v3530 = vmax.f32 %v3522, 0.0
    %v3531 = vmax.f32 %v3527, 0.0
    %v3532 = vlaneseq
    %v3533 = vshrl.u32 %v3532, 7
    %v3534 = vsub.s32 2, %v3533
    %v3535 = vrot.slane %v3357, %v3534
    %v3536 = vmul.f32 %v3530, %v3535
    %v3537 = vmul.f32 %v3531, %v3535
    %v3538 = vlaneseq
    %v3539 = vshrl.u32 %v3538, 7
    %v3540 = vsub.s32 3, %v3539
    %v3541 = vrot.slane %v3357, %v3540
    %v3542 = vadd.f32 %v3536, %v3541
    %v3543 = vadd.f32 %v3537, %v3541
    %s3544 = scalar_lea.vmem %s15, 4
    %v3545 = vld [vmem:[%s3544] sm:$0x7]
    %s3546 = scalar_lea.vmem %s14, 32
    %v3547 = vld [vmem:[%s3546] sm:$0xff]
    %v3548 = vld [vmem:[%s3546 + $0x8] sm:$0xff]
    %v3549 = vld [vmem:[%s3546 + $0x10] sm:$0xff]
    %v3550 = vld [vmem:[%s3546 + $0x18] sm:$0xff]
    %v3551 = vlaneseq
    %v3552 = vshrl.u32 %v3551, 7
    %v3553 = vsub.s32 0, %v3552
    %v3554 = vrot.slane %v3545, %v3553
    %3555 = vrot.lane.b32.xlu0 %v355, 96
    %v3556 = vpop.permute.xlu0 %3555
    %3557 = vrot.lane.b32.xlu0 %v356, 96
    %v3558 = vpop.permute.xlu0 %3557
    %3559 = vrot.lane.b32.xlu0 %v357, 96
    %v3560 = vpop.permute.xlu0 %3559
    %3561 = vrot.lane.b32.xlu0 %v358, 96
    %v3562 = vpop.permute.xlu0 %3561
    %3563 = vrot.lane.b32.xlu0 %v359, 96
    %v3564 = vpop.permute.xlu0 %3563
    %v3565 = vsel %vm1933, %v3556, 0
    %v3567 = vsel %vm1933, %v3558, 0
    %v3569 = vsel %vm1933, %v3560, 0
    %v3571 = vsel %vm1933, %v3562, 0
    %v3573 = vsel %vm1933, %v3564, 0
    %3575 = vmatprep.subr.mxu0 0.0
    %3576 = vmatpush1.msra.mxu0 %v3547
    %3577 = vmatprep.subr.mxu0 0.0
    %3578 = vmatpush1.msra.mxu0 %v3548
    %3579 = vmatprep.subr.mxu0 0.0
    %3580 = vmatpush1.msra.mxu0 %v3549
    %3581 = vmatprep.subr.mxu0 0.0
    %3582 = vmatpush1.msra.mxu0 %v3550
    %3583 = vmatprep.subr.mxu0 0.0
    %3584 = vmatpush1.msra.mxu0 0.0
    %3585 = vmatprep.subr.mxu0 0.0
    %3586 = vmatpush1.msra.mxu0 0.0
    %3587 = vmatprep.subr.mxu0 0.0
    %3588 = vmatpush1.msra.mxu0 0.0
    %3589 = vmatprep.subr.mxu0 0.0
    %3590 = vmatpush1.msra.mxu0 0.0
    %3591 = vmatprep.subr.mxu0 0.0
    %3592 = vmatpush1.msra.mxu0 0.0
    %3593 = vmatprep.subr.mxu0 0.0
    %3594 = vmatpush1.msra.mxu0 0.0
    %3595 = vmatprep.subr.mxu0 0.0
    %3596 = vmatpush1.msra.mxu0 0.0
    %3597 = vmatprep.subr.mxu0 0.0
    %3598 = vmatpush1.msra.mxu0 0.0
    %3599 = vmatprep.subr.mxu0 0.0
    %3600 = vmatpush1.msra.mxu0 0.0
    %3601 = vmatprep.subr.mxu0 0.0
    %3602 = vmatpush1.msra.mxu0 0.0
    %3603 = vmatprep.subr.mxu0 0.0
    %3604 = vmatpush1.msra.mxu0 0.0
    %3605 = vmatprep.subr.mxu0 0.0
    %3606 = vmatpush1.msra.mxu0 0.0
    %3607 = vmatprep.subr.mxu0 0.0
    %3608 = vmatpush1.msra.mxu0 0.0
    %3609 = vmatprep.subr.mxu0 0.0
    %3610 = vmatpush1.msra.mxu0 0.0
    %3611 = vmatprep.subr.mxu0 0.0
    %3612 = vmatpush1.msra.mxu0 0.0
    %3613 = vmatprep.subr.mxu0 0.0
    %3614 = vmatpush1.msra.mxu0 0.0
    %3615 = vmatprep.subr.mxu0 0.0
    %3616 = vmatpush1.msra.mxu0 0.0
    %3617 = vmatprep.subr.mxu0 0.0
    %3618 = vmatpush1.msra.mxu0 0.0
    %3619 = vmatprep.subr.mxu0 0.0
    %3620 = vmatpush1.msra.mxu0 0.0
    %3621 = vmatprep.subr.mxu0 0.0
    %3622 = vmatpush1.msra.mxu0 0.0
    %3623 = vmatprep.subr.mxu0 0.0
    %3624 = vmatpush1.msra.mxu0 0.0
    %3625 = vmatprep.subr.mxu0 0.0
    %3626 = vmatpush1.msra.mxu0 0.0
    %3627 = vmatprep.subr.mxu0 0.0
    %3628 = vmatpush1.msra.mxu0 0.0
    %3629 = vmatprep.subr.mxu0 0.0
    %3630 = vmatpush1.msra.mxu0 0.0
    %3631 = vmatprep.subr.mxu0 0.0
    %3632 = vmatpush1.msra.mxu0 0.0
    %3633 = vmatprep.subr.mxu0 0.0
    %3634 = vmatpush1.msra.mxu0 0.0
    %3635 = vmatprep.subr.mxu0 0.0
    %3636 = vmatpush1.msra.mxu0 0.0
    %3637 = vmatprep.subr.mxu0 0.0
    %3638 = vmatpush1.msra.mxu0 0.0
    %3639 = vmatprep.mubr.f32.mxu0 0.0
    %3640 = vmatmul.mubr.f32.gmra.mrb[0].mxu0 %v3565
    %v3641 = vpop.f32.mrb[0].mxu0
    %v3642 = vadd.f32 %v3554, %v3641
    %v3643 = vpop.f32.mrb[0].mxu0
    %3644 = vmatprep.mubr.f32.mxu0 0.0
    %3645 = vmatmul.mubr.f32.gmra.mrb[0].mxu0 %v3567
    %v3646 = vpop.f32.mrb[0].mxu0
    %v3647 = vadd.f32 %v3554, %v3646
    %v3648 = vpop.f32.mrb[0].mxu0
    %3649 = vmatprep.mubr.f32.mxu0 0.0
    %3650 = vmatmul.mubr.f32.gmra.mrb[0].mxu0 %v3569
    %v3651 = vpop.f32.mrb[0].mxu0
    %v3652 = vadd.f32 %v3554, %v3651
    %v3653 = vpop.f32.mrb[0].mxu0
    %3654 = vmatprep.mubr.f32.mxu0 0.0
    %3655 = vmatmul.mubr.f32.gmra.mrb[0].mxu0 %v3571
    %v3656 = vpop.f32.mrb[0].mxu0
    %v3657 = vadd.f32 %v3554, %v3656
    %v3658 = vpop.f32.mrb[0].mxu0
    %3659 = vmatprep.mubr.f32.mxu0 0.0
    %3660 = vmatmul.mubr.f32.gmra.mrb[0].mxu0 %v3573
    %v3661 = vpop.f32.mrb[0].mxu0
    %v3662 = vadd.f32 %v3554, %v3661
    %v3663 = vpop.f32.mrb[0].mxu0
    %3664 = vdwg.mxu0
    %v3665 = vmax.f32 %v3642, 0.0
    %v3666 = vmax.f32 %v3647, 0.0
    %v3667 = vmax.f32 %v3652, 0.0
    %v3668 = vmax.f32 %v3657, 0.0
    %v3669 = vmax.f32 %v3662, 0.0
    %v3670 = vlaneseq
    %v3671 = vshrl.u32 %v3670, 7
    %v3672 = vsub.s32 1, %v3671
    %v3673 = vrot.slane %v3545, %v3672
    %v3674 = vmul.f32 %v3665, %v3673
    %v3675 = vmul.f32 %v3666, %v3673
    %v3676 = vmul.f32 %v3667, %v3673
    %v3677 = vmul.f32 %v3668, %v3673
    %v3678 = vmul.f32 %v3669, %v3673
    %v3679 = vlaneseq
    %v3680 = vshrl.u32 %v3679, 7
    %v3681 = vsub.s32 2, %v3680
    %v3682 = vrot.slane %v3545, %v3681
    %v3683 = vadd.f32 %v3674, %v3682
    %v3684 = vadd.f32 %v3675, %v3682
    %v3685 = vadd.f32 %v3676, %v3682
    %v3686 = vadd.f32 %v3677, %v3682
    %v3687 = vadd.f32 %v3678, %v3682
    %3688 = vmatprep.subr.mxu0 0.0
    %v3689 = vand.u32 %v3542, 4294901760
    %3690 = vmatpush1.msra.mxu0 %v3689
    %3691 = vmatprep.subr.mxu0 0.0
    %v3692 = vand.u32 %v3543, 4294901760
    %3693 = vmatpush1.msra.mxu0 %v3692
    %3694 = vmatprep.subr.mxu0 0.0
    %3695 = vmatpush1.msra.mxu0 0.0
    %3696 = vmatprep.subr.mxu0 0.0
    %3697 = vmatpush1.msra.mxu0 0.0
    %3698 = vmatprep.subr.mxu0 0.0
    %3699 = vmatpush1.msra.mxu0 0.0
    %3700 = vmatprep.subr.mxu0 0.0
    %3701 = vmatpush1.msra.mxu0 0.0
    %3702 = vmatprep.subr.mxu0 0.0
    %3703 = vmatpush1.msra.mxu0 0.0
    %3704 = vmatprep.subr.mxu0 0.0
    %3705 = vmatpush1.msra.mxu0 0.0
    %3706 = vmatprep.subr.mxu0 0.0
    %3707 = vmatpush1.msra.mxu0 0.0
    %3708 = vmatprep.subr.mxu0 0.0
    %3709 = vmatpush1.msra.mxu0 0.0
    %3710 = vmatprep.subr.mxu0 0.0
    %3711 = vmatpush1.msra.mxu0 0.0
    %3712 = vmatprep.subr.mxu0 0.0
    %3713 = vmatpush1.msra.mxu0 0.0
    %3714 = vmatprep.subr.mxu0 0.0
    %3715 = vmatpush1.msra.mxu0 0.0
    %3716 = vmatprep.subr.mxu0 0.0
    %3717 = vmatpush1.msra.mxu0 0.0
    %3718 = vmatprep.subr.mxu0 0.0
    %3719 = vmatpush1.msra.mxu0 0.0
    %3720 = vmatprep.subr.mxu0 0.0
    %3721 = vmatpush1.msra.mxu0 0.0
    %3722 = vmatprep.subr.mxu0 0.0
    %3723 = vmatpush1.msra.mxu0 0.0
    %3724 = vmatprep.subr.mxu0 0.0
    %3725 = vmatpush1.msra.mxu0 0.0
    %3726 = vmatprep.subr.mxu0 0.0
    %3727 = vmatpush1.msra.mxu0 0.0
    %3728 = vmatprep.subr.mxu0 0.0
    %3729 = vmatpush1.msra.mxu0 0.0
    %3730 = vmatprep.subr.mxu0 0.0
    %3731 = vmatpush1.msra.mxu0 0.0
    %3732 = vmatprep.subr.mxu0 0.0
    %3733 = vmatpush1.msra.mxu0 0.0
    %3734 = vmatprep.subr.mxu0 0.0
    %3735 = vmatpush1.msra.mxu0 0.0
    %3736 = vmatprep.subr.mxu0 0.0
    %3737 = vmatpush1.msra.mxu0 0.0
    %3738 = vmatprep.subr.mxu0 0.0
    %3739 = vmatpush1.msra.mxu0 0.0
    %3740 = vmatprep.subr.mxu0 0.0
    %3741 = vmatpush1.msra.mxu0 0.0
    %3742 = vmatprep.subr.mxu0 0.0
    %3743 = vmatpush1.msra.mxu0 0.0
    %3744 = vmatprep.subr.mxu0 0.0
    %3745 = vmatpush1.msra.mxu0 0.0
    %3746 = vmatprep.subr.mxu0 0.0
    %3747 = vmatpush1.msra.mxu0 0.0
    %3748 = vmatprep.subr.mxu0 0.0
    %3749 = vmatpush1.msra.mxu0 0.0
    %3750 = vmatprep.subr.mxu0 0.0
    %3751 = vmatpush1.msra.mxu0 0.0
    %3752 = vmatprep.subr.mxu0 0.0
    %3753 = vmatpush1.msra.mxu0 0.0
    %3754 = vmatprep.mubr.f32.mxu0 0.0
    %v3755 = vand.u32 %v632, 4294901760
    %v3756 = vsub.f32 %v632, %v3755
    %v3757 = vand.u32 %v3756, 4294901760
    %v3758 = vsub.f32 %v3756, %v3757
    %v3759 = vand.u32 %v3758, 4294901760
    %3760 = vmatmul.mubr.f32.gmra.mrb[0].mxu0 %v3759
    %v3761 = vpop.f32.mrb[0].mxu0
    %v3762 = vadd.f32 %v3683, %v3761
    %v3763 = vpop.f32.mrb[0].mxu0
    %3764 = vmatprep.mubr.f32.mxu0 0.0
    %v3765 = vand.u32 %v635, 4294901760
    %v3766 = vsub.f32 %v635, %v3765
    %v3767 = vand.u32 %v3766, 4294901760
    %v3768 = vsub.f32 %v3766, %v3767
    %v3769 = vand.u32 %v3768, 4294901760
    %3770 = vmatmul.mubr.f32.gmra.mrb[0].mxu0 %v3769
    %v3771 = vpop.f32.mrb[0].mxu0
    %v3772 = vadd.f32 %v3684, %v3771
    %v3773 = vpop.f32.mrb[0].mxu0
    %3774 = vmatprep.mubr.f32.mxu0 0.0
    %v3775 = vand.u32 %v638, 4294901760
    %v3776 = vsub.f32 %v638, %v3775
    %v3777 = vand.u32 %v3776, 4294901760
    %v3778 = vsub.f32 %v3776, %v3777
    %v3779 = vand.u32 %v3778, 4294901760
    %3780 = vmatmul.mubr.f32.gmra.mrb[0].mxu0 %v3779
    %v3781 = vpop.f32.mrb[0].mxu0
    %v3782 = vadd.f32 %v3685, %v3781
    %v3783 = vpop.f32.mrb[0].mxu0
    %3784 = vmatprep.mubr.f32.mxu0 0.0
    %v3785 = vand.u32 %v641, 4294901760
    %v3786 = vsub.f32 %v641, %v3785
    %v3787 = vand.u32 %v3786, 4294901760
    %v3788 = vsub.f32 %v3786, %v3787
    %v3789 = vand.u32 %v3788, 4294901760
    %3790 = vmatmul.mubr.f32.gmra.mrb[0].mxu0 %v3789
    %v3791 = vpop.f32.mrb[0].mxu0
    %v3792 = vadd.f32 %v3686, %v3791
    %v3793 = vpop.f32.mrb[0].mxu0
    %3794 = vmatprep.mubr.f32.mxu0 0.0
    %v3795 = vand.u32 %v644, 4294901760
    %v3796 = vsub.f32 %v644, %v3795
    %v3797 = vand.u32 %v3796, 4294901760
    %v3798 = vsub.f32 %v3796, %v3797
    %v3799 = vand.u32 %v3798, 4294901760
    %3800 = vmatmul.mubr.f32.gmra.mrb[0].mxu0 %v3799
    %v3801 = vpop.f32.mrb[0].mxu0
    %v3802 = vadd.f32 %v3687, %v3801
    %v3803 = vpop.f32.mrb[0].mxu0
    %3804 = vdwg.mxu0
    %3805 = vmatprep.subr.mxu0 0.0
    %v3806 = vand.u32 %v3542, 4294901760
    %v3807 = vsub.f32 %v3542, %v3806
    %v3808 = vand.u32 %v3807, 4294901760
    %v3809 = vsub.f32 %v3807, %v3808
    %v3810 = vand.u32 %v3809, 4294901760
    %3811 = vmatpush1.msra.mxu0 %v3810
    %3812 = vmatprep.subr.mxu0 0.0
    %v3813 = vand.u32 %v3543, 4294901760
    %v3814 = vsub.f32 %v3543, %v3813
    %v3815 = vand.u32 %v3814, 4294901760
    %v3816 = vsub.f32 %v3814, %v3815
    %v3817 = vand.u32 %v3816, 4294901760
    %3818 = vmatpush1.msra.mxu0 %v3817
    %3819 = vmatprep.subr.mxu0 0.0
    %3820 = vmatpush1.msra.mxu0 0.0
    %3821 = vmatprep.subr.mxu0 0.0
    %3822 = vmatpush1.msra.mxu0 0.0
    %3823 = vmatprep.subr.mxu0 0.0
    %3824 = vmatpush1.msra.mxu0 0.0
    %3825 = vmatprep.subr.mxu0 0.0
    %3826 = vmatpush1.msra.mxu0 0.0
    %3827 = vmatprep.subr.mxu0 0.0
    %3828 = vmatpush1.msra.mxu0 0.0
    %3829 = vmatprep.subr.mxu0 0.0
    %3830 = vmatpush1.msra.mxu0 0.0
    %3831 = vmatprep.subr.mxu0 0.0
    %3832 = vmatpush1.msra.mxu0 0.0
    %3833 = vmatprep.subr.mxu0 0.0
    %3834 = vmatpush1.msra.mxu0 0.0
    %3835 = vmatprep.subr.mxu0 0.0
    %3836 = vmatpush1.msra.mxu0 0.0
    %3837 = vmatprep.subr.mxu0 0.0
    %3838 = vmatpush1.msra.mxu0 0.0
    %3839 = vmatprep.subr.mxu0 0.0
    %3840 = vmatpush1.msra.mxu0 0.0
    %3841 = vmatprep.subr.mxu0 0.0
    %3842 = vmatpush1.msra.mxu0 0.0
    %3843 = vmatprep.subr.mxu0 0.0
    %3844 = vmatpush1.msra.mxu0 0.0
    %3845 = vmatprep.subr.mxu0 0.0
    %3846 = vmatpush1.msra.mxu0 0.0
    %3847 = vmatprep.subr.mxu0 0.0
    %3848 = vmatpush1.msra.mxu0 0.0
    %3849 = vmatprep.subr.mxu0 0.0
    %3850 = vmatpush1.msra.mxu0 0.0
    %3851 = vmatprep.subr.mxu0 0.0
    %3852 = vmatpush1.msra.mxu0 0.0
    %3853 = vmatprep.subr.mxu0 0.0
    %3854 = vmatpush1.msra.mxu0 0.0
    %3855 = vmatprep.subr.mxu0 0.0
    %3856 = vmatpush1.msra.mxu0 0.0
    %3857 = vmatprep.subr.mxu0 0.0
    %3858 = vmatpush1.msra.mxu0 0.0
    %3859 = vmatprep.subr.mxu0 0.0
    %3860 = vmatpush1.msra.mxu0 0.0
    %3861 = vmatprep.subr.mxu0 0.0
    %3862 = vmatpush1.msra.mxu0 0.0
    %3863 = vmatprep.subr.mxu0 0.0
    %3864 = vmatpush1.msra.mxu0 0.0
    %3865 = vmatprep.subr.mxu0 0.0
    %3866 = vmatpush1.msra.mxu0 0.0
    %3867 = vmatprep.subr.mxu0 0.0
    %3868 = vmatpush1.msra.mxu0 0.0
    %3869 = vmatprep.subr.mxu0 0.0
    %3870 = vmatpush1.msra.mxu0 0.0
    %3871 = vmatprep.subr.mxu0 0.0
    %3872 = vmatpush1.msra.mxu0 0.0
    %3873 = vmatprep.subr.mxu0 0.0
    %3874 = vmatpush1.msra.mxu0 0.0
    %3875 = vmatprep.subr.mxu0 0.0
    %3876 = vmatpush1.msra.mxu0 0.0
    %3877 = vmatprep.subr.mxu0 0.0
    %3878 = vmatpush1.msra.mxu0 0.0
    %3879 = vmatprep.mubr.f32.mxu0 0.0
    %v3880 = vand.u32 %v632, 4294901760
    %3881 = vmatmul.mubr.f32.gmra.mrb[0].mxu0 %v3880
    %v3882 = vpop.f32.mrb[0].mxu0
    %v3883 = vadd.f32 %v3762, %v3882
    %v3884 = vpop.f32.mrb[0].mxu0
    %3885 = vmatprep.mubr.f32.mxu0 0.0
    %v3886 = vand.u32 %v635, 4294901760
    %3887 = vmatmul.mubr.f32.gmra.mrb[0].mxu0 %v3886
    %v3888 = vpop.f32.mrb[0].mxu0
    %v3889 = vadd.f32 %v3772, %v3888
    %v3890 = vpop.f32.mrb[0].mxu0
    %3891 = vmatprep.mubr.f32.mxu0 0.0
    %v3892 = vand.u32 %v638, 4294901760
    %3893 = vmatmul.mubr.f32.gmra.mrb[0].mxu0 %v3892
    %v3894 = vpop.f32.mrb[0].mxu0
    %v3895 = vadd.f32 %v3782, %v3894
    %v3896 = vpop.f32.mrb[0].mxu0
    %3897 = vmatprep.mubr.f32.mxu0 0.0
    %v3898 = vand.u32 %v641, 4294901760
    %3899 = vmatmul.mubr.f32.gmra.mrb[0].mxu0 %v3898
    %v3900 = vpop.f32.mrb[0].mxu0
    %v3901 = vadd.f32 %v3792, %v3900
    %v3902 = vpop.f32.mrb[0].mxu0
    %3903 = vmatprep.mubr.f32.mxu0 0.0
    %v3904 = vand.u32 %v644, 4294901760
    %3905 = vmatmul.mubr.f32.gmra.mrb[0].mxu0 %v3904
    %v3906 = vpop.f32.mrb[0].mxu0
    %v3907 = vadd.f32 %v3802, %v3906
    %v3908 = vpop.f32.mrb[0].mxu0
    %3909 = vdwg.mxu0
    %3910 = vmatprep.subr.mxu0 0.0
    %v3911 = vand.u32 %v3542, 4294901760
    %v3912 = vsub.f32 %v3542, %v3911
    %3913 = vmatpush1.msra.mxu0 %v3912
    %3914 = vmatprep.subr.mxu0 0.0
    %v3915 = vand.u32 %v3543, 4294901760
    %v3916 = vsub.f32 %v3543, %v3915
    %3917 = vmatpush1.msra.mxu0 %v3916
    %3918 = vmatprep.subr.mxu0 0.0
    %3919 = vmatpush1.msra.mxu0 0.0
    %3920 = vmatprep.subr.mxu0 0.0
    %3921 = vmatpush1.msra.mxu0 0.0
    %3922 = vmatprep.subr.mxu0 0.0
    %3923 = vmatpush1.msra.mxu0 0.0
    %3924 = vmatprep.subr.mxu0 0.0
    %3925 = vmatpush1.msra.mxu0 0.0
    %3926 = vmatprep.subr.mxu0 0.0
    %3927 = vmatpush1.msra.mxu0 0.0
    %3928 = vmatprep.subr.mxu0 0.0
    %3929 = vmatpush1.msra.mxu0 0.0
    %3930 = vmatprep.subr.mxu0 0.0
    %3931 = vmatpush1.msra.mxu0 0.0
    %3932 = vmatprep.subr.mxu0 0.0
    %3933 = vmatpush1.msra.mxu0 0.0
    %3934 = vmatprep.subr.mxu0 0.0
    %3935 = vmatpush1.msra.mxu0 0.0
    %3936 = vmatprep.subr.mxu0 0.0
    %3937 = vmatpush1.msra.mxu0 0.0
    %3938 = vmatprep.subr.mxu0 0.0
    %3939 = vmatpush1.msra.mxu0 0.0
    %3940 = vmatprep.subr.mxu0 0.0
    %3941 = vmatpush1.msra.mxu0 0.0
    %3942 = vmatprep.subr.mxu0 0.0
    %3943 = vmatpush1.msra.mxu0 0.0
    %3944 = vmatprep.subr.mxu0 0.0
    %3945 = vmatpush1.msra.mxu0 0.0
    %3946 = vmatprep.subr.mxu0 0.0
    %3947 = vmatpush1.msra.mxu0 0.0
    %3948 = vmatprep.subr.mxu0 0.0
    %3949 = vmatpush1.msra.mxu0 0.0
    %3950 = vmatprep.subr.mxu0 0.0
    %3951 = vmatpush1.msra.mxu0 0.0
    %3952 = vmatprep.subr.mxu0 0.0
    %3953 = vmatpush1.msra.mxu0 0.0
    %3954 = vmatprep.subr.mxu0 0.0
    %3955 = vmatpush1.msra.mxu0 0.0
    %3956 = vmatprep.subr.mxu0 0.0
    %3957 = vmatpush1.msra.mxu0 0.0
    %3958 = vmatprep.subr.mxu0 0.0
    %3959 = vmatpush1.msra.mxu0 0.0
    %3960 = vmatprep.subr.mxu0 0.0
    %3961 = vmatpush1.msra.mxu0 0.0
    %3962 = vmatprep.subr.mxu0 0.0
    %3963 = vmatpush1.msra.mxu0 0.0
    %3964 = vmatprep.subr.mxu0 0.0
    %3965 = vmatpush1.msra.mxu0 0.0
    %3966 = vmatprep.subr.mxu0 0.0
    %3967 = vmatpush1.msra.mxu0 0.0
    %3968 = vmatprep.subr.mxu0 0.0
    %3969 = vmatpush1.msra.mxu0 0.0
    %3970 = vmatprep.subr.mxu0 0.0
    %3971 = vmatpush1.msra.mxu0 0.0
    %3972 = vmatprep.subr.mxu0 0.0
    %3973 = vmatpush1.msra.mxu0 0.0
    %3974 = vmatprep.subr.mxu0 0.0
    %3975 = vmatpush1.msra.mxu0 0.0
    %3976 = vmatprep.subr.mxu0 0.0
    %3977 = vmatpush1.msra.mxu0 0.0
    %3978 = vmatprep.mubr.f32.mxu0 0.0
    %v3979 = vand.u32 %v632, 4294901760
    %v3980 = vsub.f32 %v632, %v3979
    %3981 = vmatmul.mubr.f32.gmra.mrb[0].mxu0 %v3980
    %v3982 = vpop.f32.mrb[0].mxu0
    %v3983 = vadd.f32 %v3883, %v3982
    %v3984 = vpop.f32.mrb[0].mxu0
    %3985 = vmatprep.mubr.f32.mxu0 0.0
    %v3986 = vand.u32 %v635, 4294901760
    %v3987 = vsub.f32 %v635, %v3986
    %3988 = vmatmul.mubr.f32.gmra.mrb[0].mxu0 %v3987
    %v3989 = vpop.f32.mrb[0].mxu0
    %v3990 = vadd.f32 %v3889, %v3989
    %v3991 = vpop.f32.mrb[0].mxu0
    %3992 = vmatprep.mubr.f32.mxu0 0.0
    %v3993 = vand.u32 %v638, 4294901760
    %v3994 = vsub.f32 %v638, %v3993
    %3995 = vmatmul.mubr.f32.gmra.mrb[0].mxu0 %v3994
    %v3996 = vpop.f32.mrb[0].mxu0
    %v3997 = vadd.f32 %v3895, %v3996
    %v3998 = vpop.f32.mrb[0].mxu0
    %3999 = vmatprep.mubr.f32.mxu0 0.0
    %v4000 = vand.u32 %v641, 4294901760
    %v4001 = vsub.f32 %v641, %v4000
    %4002 = vmatmul.mubr.f32.gmra.mrb[0].mxu0 %v4001
    %v4003 = vpop.f32.mrb[0].mxu0
    %v4004 = vadd.f32 %v3901, %v4003
    %v4005 = vpop.f32.mrb[0].mxu0
    %4006 = vmatprep.mubr.f32.mxu0 0.0
    %v4007 = vand.u32 %v644, 4294901760
    %v4008 = vsub.f32 %v644, %v4007
    %4009 = vmatmul.mubr.f32.gmra.mrb[0].mxu0 %v4008
    %v4010 = vpop.f32.mrb[0].mxu0
    %v4011 = vadd.f32 %v3907, %v4010
    %v4012 = vpop.f32.mrb[0].mxu0
    %4013 = vdwg.mxu0
    %4014 = vmatprep.subr.mxu0 0.0
    %v4015 = vand.u32 %v3542, 4294901760
    %4016 = vmatpush1.msra.mxu0 %v4015
    %4017 = vmatprep.subr.mxu0 0.0
    %v4018 = vand.u32 %v3543, 4294901760
    %4019 = vmatpush1.msra.mxu0 %v4018
    %4020 = vmatprep.subr.mxu0 0.0
    %4021 = vmatpush1.msra.mxu0 0.0
    %4022 = vmatprep.subr.mxu0 0.0
    %4023 = vmatpush1.msra.mxu0 0.0
    %4024 = vmatprep.subr.mxu0 0.0
    %4025 = vmatpush1.msra.mxu0 0.0
    %4026 = vmatprep.subr.mxu0 0.0
    %4027 = vmatpush1.msra.mxu0 0.0
    %4028 = vmatprep.subr.mxu0 0.0
    %4029 = vmatpush1.msra.mxu0 0.0
    %4030 = vmatprep.subr.mxu0 0.0
    %4031 = vmatpush1.msra.mxu0 0.0
    %4032 = vmatprep.subr.mxu0 0.0
    %4033 = vmatpush1.msra.mxu0 0.0
    %4034 = vmatprep.subr.mxu0 0.0
    %4035 = vmatpush1.msra.mxu0 0.0
    %4036 = vmatprep.subr.mxu0 0.0
    %4037 = vmatpush1.msra.mxu0 0.0
    %4038 = vmatprep.subr.mxu0 0.0
    %4039 = vmatpush1.msra.mxu0 0.0
    %4040 = vmatprep.subr.mxu0 0.0
    %4041 = vmatpush1.msra.mxu0 0.0
    %4042 = vmatprep.subr.mxu0 0.0
    %4043 = vmatpush1.msra.mxu0 0.0
    %4044 = vmatprep.subr.mxu0 0.0
    %4045 = vmatpush1.msra.mxu0 0.0
    %4046 = vmatprep.subr.mxu0 0.0
    %4047 = vmatpush1.msra.mxu0 0.0
    %4048 = vmatprep.subr.mxu0 0.0
    %4049 = vmatpush1.msra.mxu0 0.0
    %4050 = vmatprep.subr.mxu0 0.0
    %4051 = vmatpush1.msra.mxu0 0.0
    %4052 = vmatprep.subr.mxu0 0.0
    %4053 = vmatpush1.msra.mxu0 0.0
    %4054 = vmatprep.subr.mxu0 0.0
    %4055 = vmatpush1.msra.mxu0 0.0
    %4056 = vmatprep.subr.mxu0 0.0
    %4057 = vmatpush1.msra.mxu0 0.0
    %4058 = vmatprep.subr.mxu0 0.0
    %4059 = vmatpush1.msra.mxu0 0.0
    %4060 = vmatprep.subr.mxu0 0.0
    %4061 = vmatpush1.msra.mxu0 0.0
    %4062 = vmatprep.subr.mxu0 0.0
    %4063 = vmatpush1.msra.mxu0 0.0
    %4064 = vmatprep.subr.mxu0 0.0
    %4065 = vmatpush1.msra.mxu0 0.0
    %4066 = vmatprep.subr.mxu0 0.0
    %4067 = vmatpush1.msra.mxu0 0.0
    %4068 = vmatprep.subr.mxu0 0.0
    %4069 = vmatpush1.msra.mxu0 0.0
    %4070 = vmatprep.subr.mxu0 0.0
    %4071 = vmatpush1.msra.mxu0 0.0
    %4072 = vmatprep.subr.mxu0 0.0
    %4073 = vmatpush1.msra.mxu0 0.0
    %4074 = vmatprep.subr.mxu0 0.0
    %4075 = vmatpush1.msra.mxu0 0.0
    %4076 = vmatprep.subr.mxu0 0.0
    %4077 = vmatpush1.msra.mxu0 0.0
    %4078 = vmatprep.subr.mxu0 0.0
    %4079 = vmatpush1.msra.mxu0 0.0
    %4080 = vmatprep.mubr.f32.mxu0 0.0
    %v4081 = vand.u32 %v632, 4294901760
    %v4082 = vsub.f32 %v632, %v4081
    %v4083 = vand.u32 %v4082, 4294901760
    %4084 = vmatmul.mubr.f32.gmra.mrb[0].mxu0 %v4083
    %v4085 = vpop.f32.mrb[0].mxu0
    %v4086 = vadd.f32 %v3983, %v4085
    %v4087 = vpop.f32.mrb[0].mxu0
    %4088 = vmatprep.mubr.f32.mxu0 0.0
    %v4089 = vand.u32 %v635, 4294901760
    %v4090 = vsub.f32 %v635, %v4089
    %v4091 = vand.u32 %v4090, 4294901760
    %4092 = vmatmul.mubr.f32.gmra.mrb[0].mxu0 %v4091
    %v4093 = vpop.f32.mrb[0].mxu0
    %v4094 = vadd.f32 %v3990, %v4093
    %v4095 = vpop.f32.mrb[0].mxu0
    %4096 = vmatprep.mubr.f32.mxu0 0.0
    %v4097 = vand.u32 %v638, 4294901760
    %v4098 = vsub.f32 %v638, %v4097
    %v4099 = vand.u32 %v4098, 4294901760
    %4100 = vmatmul.mubr.f32.gmra.mrb[0].mxu0 %v4099
    %v4101 = vpop.f32.mrb[0].mxu0
    %v4102 = vadd.f32 %v3997, %v4101
    %v4103 = vpop.f32.mrb[0].mxu0
    %4104 = vmatprep.mubr.f32.mxu0 0.0
    %v4105 = vand.u32 %v641, 4294901760
    %v4106 = vsub.f32 %v641, %v4105
    %v4107 = vand.u32 %v4106, 4294901760
    %4108 = vmatmul.mubr.f32.gmra.mrb[0].mxu0 %v4107
    %v4109 = vpop.f32.mrb[0].mxu0
    %v4110 = vadd.f32 %v4004, %v4109
    %v4111 = vpop.f32.mrb[0].mxu0
    %4112 = vmatprep.mubr.f32.mxu0 0.0
    %v4113 = vand.u32 %v644, 4294901760
    %v4114 = vsub.f32 %v644, %v4113
    %v4115 = vand.u32 %v4114, 4294901760
    %4116 = vmatmul.mubr.f32.gmra.mrb[0].mxu0 %v4115
    %v4117 = vpop.f32.mrb[0].mxu0
    %v4118 = vadd.f32 %v4011, %v4117
    %v4119 = vpop.f32.mrb[0].mxu0
    %4120 = vdwg.mxu0
    %4121 = vmatprep.subr.mxu0 0.0
    %v4122 = vand.u32 %v3542, 4294901760
    %v4123 = vsub.f32 %v3542, %v4122
    %v4124 = vand.u32 %v4123, 4294901760
    %4125 = vmatpush1.msra.mxu0 %v4124
    %4126 = vmatprep.subr.mxu0 0.0
    %v4127 = vand.u32 %v3543, 4294901760
    %v4128 = vsub.f32 %v3543, %v4127
    %v4129 = vand.u32 %v4128, 4294901760
    %4130 = vmatpush1.msra.mxu0 %v4129
    %4131 = vmatprep.subr.mxu0 0.0
    %4132 = vmatpush1.msra.mxu0 0.0
    %4133 = vmatprep.subr.mxu0 0.0
    %4134 = vmatpush1.msra.mxu0 0.0
    %4135 = vmatprep.subr.mxu0 0.0
    %4136 = vmatpush1.msra.mxu0 0.0
    %4137 = vmatprep.subr.mxu0 0.0
    %4138 = vmatpush1.msra.mxu0 0.0
    %4139 = vmatprep.subr.mxu0 0.0
    %4140 = vmatpush1.msra.mxu0 0.0
    %4141 = vmatprep.subr.mxu0 0.0
    %4142 = vmatpush1.msra.mxu0 0.0
    %4143 = vmatprep.subr.mxu0 0.0
    %4144 = vmatpush1.msra.mxu0 0.0
    %4145 = vmatprep.subr.mxu0 0.0
    %4146 = vmatpush1.msra.mxu0 0.0
    %4147 = vmatprep.subr.mxu0 0.0
    %4148 = vmatpush1.msra.mxu0 0.0
    %4149 = vmatprep.subr.mxu0 0.0
    %4150 = vmatpush1.msra.mxu0 0.0
    %4151 = vmatprep.subr.mxu0 0.0
    %4152 = vmatpush1.msra.mxu0 0.0
    %4153 = vmatprep.subr.mxu0 0.0
    %4154 = vmatpush1.msra.mxu0 0.0
    %4155 = vmatprep.subr.mxu0 0.0
    %4156 = vmatpush1.msra.mxu0 0.0
    %4157 = vmatprep.subr.mxu0 0.0
    %4158 = vmatpush1.msra.mxu0 0.0
    %4159 = vmatprep.subr.mxu0 0.0
    %4160 = vmatpush1.msra.mxu0 0.0
    %4161 = vmatprep.subr.mxu0 0.0
    %4162 = vmatpush1.msra.mxu0 0.0
    %4163 = vmatprep.subr.mxu0 0.0
    %4164 = vmatpush1.msra.mxu0 0.0
    %4165 = vmatprep.subr.mxu0 0.0
    %4166 = vmatpush1.msra.mxu0 0.0
    %4167 = vmatprep.subr.mxu0 0.0
    %4168 = vmatpush1.msra.mxu0 0.0
    %4169 = vmatprep.subr.mxu0 0.0
    %4170 = vmatpush1.msra.mxu0 0.0
    %4171 = vmatprep.subr.mxu0 0.0
    %4172 = vmatpush1.msra.mxu0 0.0
    %4173 = vmatprep.subr.mxu0 0.0
    %4174 = vmatpush1.msra.mxu0 0.0
    %4175 = vmatprep.subr.mxu0 0.0
    %4176 = vmatpush1.msra.mxu0 0.0
    %4177 = vmatprep.subr.mxu0 0.0
    %4178 = vmatpush1.msra.mxu0 0.0
    %4179 = vmatprep.subr.mxu0 0.0
    %4180 = vmatpush1.msra.mxu0 0.0
    %4181 = vmatprep.subr.mxu0 0.0
    %4182 = vmatpush1.msra.mxu0 0.0
    %4183 = vmatprep.subr.mxu0 0.0
    %4184 = vmatpush1.msra.mxu0 0.0
    %4185 = vmatprep.subr.mxu0 0.0
    %4186 = vmatpush1.msra.mxu0 0.0
    %4187 = vmatprep.subr.mxu0 0.0
    %4188 = vmatpush1.msra.mxu0 0.0
    %4189 = vmatprep.subr.mxu0 0.0
    %4190 = vmatpush1.msra.mxu0 0.0
    %4191 = vmatprep.mubr.f32.mxu0 0.0
    %v4192 = vand.u32 %v632, 4294901760
    %4193 = vmatmul.mubr.f32.gmra.mrb[0].mxu0 %v4192
    %v4194 = vpop.f32.mrb[0].mxu0
    %v4195 = vadd.f32 %v4086, %v4194
    %v4196 = vpop.f32.mrb[0].mxu0
    %4197 = vmatprep.mubr.f32.mxu0 0.0
    %v4198 = vand.u32 %v635, 4294901760
    %4199 = vmatmul.mubr.f32.gmra.mrb[0].mxu0 %v4198
    %v4200 = vpop.f32.mrb[0].mxu0
    %v4201 = vadd.f32 %v4094, %v4200
    %v4202 = vpop.f32.mrb[0].mxu0
    %4203 = vmatprep.mubr.f32.mxu0 0.0
    %v4204 = vand.u32 %v638, 4294901760
    %4205 = vmatmul.mubr.f32.gmra.mrb[0].mxu0 %v4204
    %v4206 = vpop.f32.mrb[0].mxu0
    %v4207 = vadd.f32 %v4102, %v4206
    %v4208 = vpop.f32.mrb[0].mxu0
    %4209 = vmatprep.mubr.f32.mxu0 0.0
    %v4210 = vand.u32 %v641, 4294901760
    %4211 = vmatmul.mubr.f32.gmra.mrb[0].mxu0 %v4210
    %v4212 = vpop.f32.mrb[0].mxu0
    %v4213 = vadd.f32 %v4110, %v4212
    %v4214 = vpop.f32.mrb[0].mxu0
    %4215 = vmatprep.mubr.f32.mxu0 0.0
    %v4216 = vand.u32 %v644, 4294901760
    %4217 = vmatmul.mubr.f32.gmra.mrb[0].mxu0 %v4216
    %v4218 = vpop.f32.mrb[0].mxu0
    %v4219 = vadd.f32 %v4118, %v4218
    %v4220 = vpop.f32.mrb[0].mxu0
    %4221 = vdwg.mxu0
    %4222 = vmatprep.subr.mxu0 0.0
    %v4223 = vand.u32 %v3542, 4294901760
    %4224 = vmatpush1.msra.mxu0 %v4223
    %4225 = vmatprep.subr.mxu0 0.0
    %v4226 = vand.u32 %v3543, 4294901760
    %4227 = vmatpush1.msra.mxu0 %v4226
    %4228 = vmatprep.subr.mxu0 0.0
    %4229 = vmatpush1.msra.mxu0 0.0
    %4230 = vmatprep.subr.mxu0 0.0
    %4231 = vmatpush1.msra.mxu0 0.0
    %4232 = vmatprep.subr.mxu0 0.0
    %4233 = vmatpush1.msra.mxu0 0.0
    %4234 = vmatprep.subr.mxu0 0.0
    %4235 = vmatpush1.msra.mxu0 0.0
    %4236 = vmatprep.subr.mxu0 0.0
    %4237 = vmatpush1.msra.mxu0 0.0
    %4238 = vmatprep.subr.mxu0 0.0
    %4239 = vmatpush1.msra.mxu0 0.0
    %4240 = vmatprep.subr.mxu0 0.0
    %4241 = vmatpush1.msra.mxu0 0.0
    %4242 = vmatprep.subr.mxu0 0.0
    %4243 = vmatpush1.msra.mxu0 0.0
    %4244 = vmatprep.subr.mxu0 0.0
    %4245 = vmatpush1.msra.mxu0 0.0
    %4246 = vmatprep.subr.mxu0 0.0
    %4247 = vmatpush1.msra.mxu0 0.0
    %4248 = vmatprep.subr.mxu0 0.0
    %4249 = vmatpush1.msra.mxu0 0.0
    %4250 = vmatprep.subr.mxu0 0.0
    %4251 = vmatpush1.msra.mxu0 0.0
    %4252 = vmatprep.subr.mxu0 0.0
    %4253 = vmatpush1.msra.mxu0 0.0
    %4254 = vmatprep.subr.mxu0 0.0
    %4255 = vmatpush1.msra.mxu0 0.0
    %4256 = vmatprep.subr.mxu0 0.0
    %4257 = vmatpush1.msra.mxu0 0.0
    %4258 = vmatprep.subr.mxu0 0.0
    %4259 = vmatpush1.msra.mxu0 0.0
    %4260 = vmatprep.subr.mxu0 0.0
    %4261 = vmatpush1.msra.mxu0 0.0
    %4262 = vmatprep.subr.mxu0 0.0
    %4263 = vmatpush1.msra.mxu0 0.0
    %4264 = vmatprep.subr.mxu0 0.0
    %4265 = vmatpush1.msra.mxu0 0.0
    %4266 = vmatprep.subr.mxu0 0.0
    %4267 = vmatpush1.msra.mxu0 0.0
    %4268 = vmatprep.subr.mxu0 0.0
    %4269 = vmatpush1.msra.mxu0 0.0
    %4270 = vmatprep.subr.mxu0 0.0
    %4271 = vmatpush1.msra.mxu0 0.0
    %4272 = vmatprep.subr.mxu0 0.0
    %4273 = vmatpush1.msra.mxu0 0.0
    %4274 = vmatprep.subr.mxu0 0.0
    %4275 = vmatpush1.msra.mxu0 0.0
    %4276 = vmatprep.subr.mxu0 0.0
    %4277 = vmatpush1.msra.mxu0 0.0
    %4278 = vmatprep.subr.mxu0 0.0
    %4279 = vmatpush1.msra.mxu0 0.0
    %4280 = vmatprep.subr.mxu0 0.0
    %4281 = vmatpush1.msra.mxu0 0.0
    %4282 = vmatprep.subr.mxu0 0.0
    %4283 = vmatpush1.msra.mxu0 0.0
    %4284 = vmatprep.subr.mxu0 0.0
    %4285 = vmatpush1.msra.mxu0 0.0
    %4286 = vmatprep.subr.mxu0 0.0
    %4287 = vmatpush1.msra.mxu0 0.0
    %4288 = vmatprep.mubr.f32.mxu0 0.0
    %v4289 = vand.u32 %v632, 4294901760
    %4290 = vmatmul.mubr.f32.gmra.mrb[0].mxu0 %v4289
    %v4291 = vpop.f32.mrb[0].mxu0
    %v4292 = vadd.f32 %v4195, %v4291
    %v4293 = vpop.f32.mrb[0].mxu0
    %4294 = vmatprep.mubr.f32.mxu0 0.0
    %v4295 = vand.u32 %v635, 4294901760
    %4296 = vmatmul.mubr.f32.gmra.mrb[0].mxu0 %v4295
    %v4297 = vpop.f32.mrb[0].mxu0
    %v4298 = vadd.f32 %v4201, %v4297
    %v4299 = vpop.f32.mrb[0].mxu0
    %4300 = vmatprep.mubr.f32.mxu0 0.0
    %v4301 = vand.u32 %v638, 4294901760
    %4302 = vmatmul.mubr.f32.gmra.mrb[0].mxu0 %v4301
    %v4303 = vpop.f32.mrb[0].mxu0
    %v4304 = vadd.f32 %v4207, %v4303
    %v4305 = vpop.f32.mrb[0].mxu0
    %4306 = vmatprep.mubr.f32.mxu0 0.0
    %v4307 = vand.u32 %v641, 4294901760
    %4308 = vmatmul.mubr.f32.gmra.mrb[0].mxu0 %v4307
    %v4309 = vpop.f32.mrb[0].mxu0
    %v4310 = vadd.f32 %v4213, %v4309
    %v4311 = vpop.f32.mrb[0].mxu0
    %4312 = vmatprep.mubr.f32.mxu0 0.0
    %v4313 = vand.u32 %v644, 4294901760
    %4314 = vmatmul.mubr.f32.gmra.mrb[0].mxu0 %v4313
    %v4315 = vpop.f32.mrb[0].mxu0
    %v4316 = vadd.f32 %v4219, %v4315
    %v4317 = vpop.f32.mrb[0].mxu0
    %4318 = vdwg.mxu0
    %v4319 = vmax.f32 %v4292, 0.0
    %v4320 = vmax.f32 %v4298, 0.0
    %v4321 = vmax.f32 %v4304, 0.0
    %v4322 = vmax.f32 %v4310, 0.0
    %v4323 = vmax.f32 %v4316, 0.0
    %4324 = vmatprep.subr.mxu0 0.0
    %v4325 = vand.u32 %v4319, 4294901760
    %4326 = vmatpush1.msra.mxu0 %v4325
    %4327 = vmatprep.subr.mxu0 0.0
    %v4328 = vand.u32 %v4320, 4294901760
    %4329 = vmatpush1.msra.mxu0 %v4328
    %4330 = vmatprep.subr.mxu0 0.0
    %v4331 = vand.u32 %v4321, 4294901760
    %4332 = vmatpush1.msra.mxu0 %v4331
    %4333 = vmatprep.subr.mxu0 0.0
    %v4334 = vand.u32 %v4322, 4294901760
    %4335 = vmatpush1.msra.mxu0 %v4334
    %4336 = vmatprep.subr.mxu0 0.0
    %v4337 = vand.u32 %v4323, 4294901760
    %4338 = vmatpush1.msra.mxu0 %v4337
    %4339 = vmatprep.subr.mxu0 0.0
    %4340 = vmatpush1.msra.mxu0 0.0
    %4341 = vmatprep.subr.mxu0 0.0
    %4342 = vmatpush1.msra.mxu0 0.0
    %4343 = vmatprep.subr.mxu0 0.0
    %4344 = vmatpush1.msra.mxu0 0.0
    %4345 = vmatprep.subr.mxu0 0.0
    %4346 = vmatpush1.msra.mxu0 0.0
    %4347 = vmatprep.subr.mxu0 0.0
    %4348 = vmatpush1.msra.mxu0 0.0
    %4349 = vmatprep.subr.mxu0 0.0
    %4350 = vmatpush1.msra.mxu0 0.0
    %4351 = vmatprep.subr.mxu0 0.0
    %4352 = vmatpush1.msra.mxu0 0.0
    %4353 = vmatprep.subr.mxu0 0.0
    %4354 = vmatpush1.msra.mxu0 0.0
    %4355 = vmatprep.subr.mxu0 0.0
    %4356 = vmatpush1.msra.mxu0 0.0
    %4357 = vmatprep.subr.mxu0 0.0
    %4358 = vmatpush1.msra.mxu0 0.0
    %4359 = vmatprep.subr.mxu0 0.0
    %4360 = vmatpush1.msra.mxu0 0.0
    %4361 = vmatprep.subr.mxu0 0.0
    %4362 = vmatpush1.msra.mxu0 0.0
    %4363 = vmatprep.subr.mxu0 0.0
    %4364 = vmatpush1.msra.mxu0 0.0
    %4365 = vmatprep.subr.mxu0 0.0
    %4366 = vmatpush1.msra.mxu0 0.0
    %4367 = vmatprep.subr.mxu0 0.0
    %4368 = vmatpush1.msra.mxu0 0.0
    %4369 = vmatprep.subr.mxu0 0.0
    %4370 = vmatpush1.msra.mxu0 0.0
    %4371 = vmatprep.subr.mxu0 0.0
    %4372 = vmatpush1.msra.mxu0 0.0
    %4373 = vmatprep.subr.mxu0 0.0
    %4374 = vmatpush1.msra.mxu0 0.0
    %4375 = vmatprep.subr.mxu0 0.0
    %4376 = vmatpush1.msra.mxu0 0.0
    %4377 = vmatprep.subr.mxu0 0.0
    %4378 = vmatpush1.msra.mxu0 0.0
    %4379 = vmatprep.subr.mxu0 0.0
    %4380 = vmatpush1.msra.mxu0 0.0
    %4381 = vmatprep.subr.mxu0 0.0
    %4382 = vmatpush1.msra.mxu0 0.0
    %4383 = vmatprep.subr.mxu0 0.0
    %4384 = vmatpush1.msra.mxu0 0.0
    %4385 = vmatprep.subr.mxu0 0.0
    %4386 = vmatpush1.msra.mxu0 0.0
    %4387 = vmatprep.subr.mxu0 0.0
    %4388 = vmatpush1.msra.mxu0 0.0
    %4389 = vmatprep.subr.mxu0 0.0
    %4390 = vmatpush1.msra.mxu0 0.0
    %4391 = vmatprep.subr.mxu0 0.0
    %4392 = vmatpush1.msra.mxu0 0.0
    %4393 = vmatprep.mubr.f32.mxu0 0.0
    %v4394 = vand.u32 %v1284, 4294901760
    %v4395 = vsub.f32 %v1284, %v4394
    %v4396 = vand.u32 %v4395, 4294901760
    %v4397 = vsub.f32 %v4395, %v4396
    %v4398 = vand.u32 %v4397, 4294901760
    %4399 = vmatmul.mubr.f32.gmra.mrb[0].mxu0 %v4398
    %v4400 = vpop.f32.mrb[0].mxu0
    %v4401 = vadd.f32 0.0, %v4400
    %v4402 = vpop.f32.mrb[0].mxu0
    %4403 = vmatprep.mubr.f32.mxu0 0.0
    %v4404 = vand.u32 %v1287, 4294901760
    %v4405 = vsub.f32 %v1287, %v4404
    %v4406 = vand.u32 %v4405, 4294901760
    %v4407 = vsub.f32 %v4405, %v4406
    %v4408 = vand.u32 %v4407, 4294901760
    %4409 = vmatmul.mubr.f32.gmra.mrb[0].mxu0 %v4408
    %v4410 = vpop.f32.mrb[0].mxu0
    %v4411 = vadd.f32 0.0, %v4410
    %v4412 = vpop.f32.mrb[0].mxu0
    %4413 = vdwg.mxu0
    %4414 = vmatprep.subr.mxu0 0.0
    %v4415 = vand.u32 %v4319, 4294901760
    %v4416 = vsub.f32 %v4319, %v4415
    %v4417 = vand.u32 %v4416, 4294901760
    %v4418 = vsub.f32 %v4416, %v4417
    %v4419 = vand.u32 %v4418, 4294901760
    %4420 = vmatpush1.msra.mxu0 %v4419
    %4421 = vmatprep.subr.mxu0 0.0
    %v4422 = vand.u32 %v4320, 4294901760
    %v4423 = vsub.f32 %v4320, %v4422
    %v4424 = vand.u32 %v4423, 4294901760
    %v4425 = vsub.f32 %v4423, %v4424
    %v4426 = vand.u32 %v4425, 4294901760
    %4427 = vmatpush1.msra.mxu0 %v4426
    %4428 = vmatprep.subr.mxu0 0.0
    %v4429 = vand.u32 %v4321, 4294901760
    %v4430 = vsub.f32 %v4321, %v4429
    %v4431 = vand.u32 %v4430, 4294901760
    %v4432 = vsub.f32 %v4430, %v4431
    %v4433 = vand.u32 %v4432, 4294901760
    %4434 = vmatpush1.msra.mxu0 %v4433
    %4435 = vmatprep.subr.mxu0 0.0
    %v4436 = vand.u32 %v4322, 4294901760
    %v4437 = vsub.f32 %v4322, %v4436
    %v4438 = vand.u32 %v4437, 4294901760
    %v4439 = vsub.f32 %v4437, %v4438
    %v4440 = vand.u32 %v4439, 4294901760
    %4441 = vmatpush1.msra.mxu0 %v4440
    %4442 = vmatprep.subr.mxu0 0.0
    %v4443 = vand.u32 %v4323, 4294901760
    %v4444 = vsub.f32 %v4323, %v4443
    %v4445 = vand.u32 %v4444, 4294901760
    %v4446 = vsub.f32 %v4444, %v4445
    %v4447 = vand.u32 %v4446, 4294901760
    %4448 = vmatpush1.msra.mxu0 %v4447
    %4449 = vmatprep.subr.mxu0 0.0
    %4450 = vmatpush1.msra.mxu0 0.0
    %4451 = vmatprep.subr.mxu0 0.0
    %4452 = vmatpush1.msra.mxu0 0.0
    %4453 = vmatprep.subr.mxu0 0.0
    %4454 = vmatpush1.msra.mxu0 0.0
    %4455 = vmatprep.subr.mxu0 0.0
    %4456 = vmatpush1.msra.mxu0 0.0
    %4457 = vmatprep.subr.mxu0 0.0
    %4458 = vmatpush1.msra.mxu0 0.0
    %4459 = vmatprep.subr.mxu0 0.0
    %4460 = vmatpush1.msra.mxu0 0.0
    %4461 = vmatprep.subr.mxu0 0.0
    %4462 = vmatpush1.msra.mxu0 0.0
    %4463 = vmatprep.subr.mxu0 0.0
    %4464 = vmatpush1.msra.mxu0 0.0
    %4465 = vmatprep.subr.mxu0 0.0
    %4466 = vmatpush1.msra.mxu0 0.0
    %4467 = vmatprep.subr.mxu0 0.0
    %4468 = vmatpush1.msra.mxu0 0.0
    %4469 = vmatprep.subr.mxu0 0.0
    %4470 = vmatpush1.msra.mxu0 0.0
    %4471 = vmatprep.subr.mxu0 0.0
    %4472 = vmatpush1.msra.mxu0 0.0
    %4473 = vmatprep.subr.mxu0 0.0
    %4474 = vmatpush1.msra.mxu0 0.0
    %4475 = vmatprep.subr.mxu0 0.0
    %4476 = vmatpush1.msra.mxu0 0.0
    %4477 = vmatprep.subr.mxu0 0.0
    %4478 = vmatpush1.msra.mxu0 0.0
    %4479 = vmatprep.subr.mxu0 0.0
    %4480 = vmatpush1.msra.mxu0 0.0
    %4481 = vmatprep.subr.mxu0 0.0
    %4482 = vmatpush1.msra.mxu0 0.0
    %4483 = vmatprep.subr.mxu0 0.0
    %4484 = vmatpush1.msra.mxu0 0.0
    %4485 = vmatprep.subr.mxu0 0.0
    %4486 = vmatpush1.msra.mxu0 0.0
    %4487 = vmatprep.subr.mxu0 0.0
    %4488 = vmatpush1.msra.mxu0 0.0
    %4489 = vmatprep.subr.mxu0 0.0
    %4490 = vmatpush1.msra.mxu0 0.0
    %4491 = vmatprep.subr.mxu0 0.0
    %4492 = vmatpush1.msra.mxu0 0.0
    %4493 = vmatprep.subr.mxu0 0.0
    %4494 = vmatpush1.msra.mxu0 0.0
    %4495 = vmatprep.subr.mxu0 0.0
    %4496 = vmatpush1.msra.mxu0 0.0
    %4497 = vmatprep.subr.mxu0 0.0
    %4498 = vmatpush1.msra.mxu0 0.0
    %4499 = vmatprep.subr.mxu0 0.0
    %4500 = vmatpush1.msra.mxu0 0.0
    %4501 = vmatprep.subr.mxu0 0.0
    %4502 = vmatpush1.msra.mxu0 0.0
    %4503 = vmatprep.mubr.f32.mxu0 0.0
    %v4504 = vand.u32 %v1284, 4294901760
    %4505 = vmatmul.mubr.f32.gmra.mrb[0].mxu0 %v4504
    %v4506 = vpop.f32.mrb[0].mxu0
    %v4507 = vadd.f32 %v4401, %v4506
    %v4508 = vpop.f32.mrb[0].mxu0
    %4509 = vmatprep.mubr.f32.mxu0 0.0
    %v4510 = vand.u32 %v1287, 4294901760
    %4511 = vmatmul.mubr.f32.gmra.mrb[0].mxu0 %v4510
    %v4512 = vpop.f32.mrb[0].mxu0
    %v4513 = vadd.f32 %v4411, %v4512
    %v4514 = vpop.f32.mrb[0].mxu0
    %4515 = vdwg.mxu0
    %4516 = vmatprep.subr.mxu0 0.0
    %v4517 = vand.u32 %v4319, 4294901760
    %v4518 = vsub.f32 %v4319, %v4517
    %4519 = vmatpush1.msra.mxu0 %v4518
    %4520 = vmatprep.subr.mxu0 0.0
    %v4521 = vand.u32 %v4320, 4294901760
    %v4522 = vsub.f32 %v4320, %v4521
    %4523 = vmatpush1.msra.mxu0 %v4522
    %4524 = vmatprep.subr.mxu0 0.0
    %v4525 = vand.u32 %v4321, 4294901760
    %v4526 = vsub.f32 %v4321, %v4525
    %4527 = vmatpush1.msra.mxu0 %v4526
    %4528 = vmatprep.subr.mxu0 0.0
    %v4529 = vand.u32 %v4322, 4294901760
    %v4530 = vsub.f32 %v4322, %v4529
    %4531 = vmatpush1.msra.mxu0 %v4530
    %4532 = vmatprep.subr.mxu0 0.0
    %v4533 = vand.u32 %v4323, 4294901760
    %v4534 = vsub.f32 %v4323, %v4533
    %4535 = vmatpush1.msra.mxu0 %v4534
    %4536 = vmatprep.subr.mxu0 0.0
    %4537 = vmatpush1.msra.mxu0 0.0
    %4538 = vmatprep.subr.mxu0 0.0
    %4539 = vmatpush1.msra.mxu0 0.0
    %4540 = vmatprep.subr.mxu0 0.0
    %4541 = vmatpush1.msra.mxu0 0.0
    %4542 = vmatprep.subr.mxu0 0.0
    %4543 = vmatpush1.msra.mxu0 0.0
    %4544 = vmatprep.subr.mxu0 0.0
    %4545 = vmatpush1.msra.mxu0 0.0
    %4546 = vmatprep.subr.mxu0 0.0
    %4547 = vmatpush1.msra.mxu0 0.0
    %4548 = vmatprep.subr.mxu0 0.0
    %4549 = vmatpush1.msra.mxu0 0.0
    %4550 = vmatprep.subr.mxu0 0.0
    %4551 = vmatpush1.msra.mxu0 0.0
    %4552 = vmatprep.subr.mxu0 0.0
    %4553 = vmatpush1.msra.mxu0 0.0
    %4554 = vmatprep.subr.mxu0 0.0
    %4555 = vmatpush1.msra.mxu0 0.0
    %4556 = vmatprep.subr.mxu0 0.0
    %4557 = vmatpush1.msra.mxu0 0.0
    %4558 = vmatprep.subr.mxu0 0.0
    %4559 = vmatpush1.msra.mxu0 0.0
    %4560 = vmatprep.subr.mxu0 0.0
    %4561 = vmatpush1.msra.mxu0 0.0
    %4562 = vmatprep.subr.mxu0 0.0
    %4563 = vmatpush1.msra.mxu0 0.0
    %4564 = vmatprep.subr.mxu0 0.0
    %4565 = vmatpush1.msra.mxu0 0.0
    %4566 = vmatprep.subr.mxu0 0.0
    %4567 = vmatpush1.msra.mxu0 0.0
    %4568 = vmatprep.subr.mxu0 0.0
    %4569 = vmatpush1.msra.mxu0 0.0
    %4570 = vmatprep.subr.mxu0 0.0
    %4571 = vmatpush1.msra.mxu0 0.0
    %4572 = vmatprep.subr.mxu0 0.0
    %4573 = vmatpush1.msra.mxu0 0.0
    %4574 = vmatprep.subr.mxu0 0.0
    %4575 = vmatpush1.msra.mxu0 0.0
    %4576 = vmatprep.subr.mxu0 0.0
    %4577 = vmatpush1.msra.mxu0 0.0
    %4578 = vmatprep.subr.mxu0 0.0
    %4579 = vmatpush1.msra.mxu0 0.0
    %4580 = vmatprep.subr.mxu0 0.0
    %4581 = vmatpush1.msra.mxu0 0.0
    %4582 = vmatprep.subr.mxu0 0.0
    %4583 = vmatpush1.msra.mxu0 0.0
    %4584 = vmatprep.subr.mxu0 0.0
    %4585 = vmatpush1.msra.mxu0 0.0
    %4586 = vmatprep.subr.mxu0 0.0
    %4587 = vmatpush1.msra.mxu0 0.0
    %4588 = vmatprep.subr.mxu0 0.0
    %4589 = vmatpush1.msra.mxu0 0.0
    %4590 = vmatprep.mubr.f32.mxu0 0.0
    %v4591 = vand.u32 %v1284, 4294901760
    %v4592 = vsub.f32 %v1284, %v4591
    %4593 = vmatmul.mubr.f32.gmra.mrb[0].mxu0 %v4592
    %v4594 = vpop.f32.mrb[0].mxu0
    %v4595 = vadd.f32 %v4507, %v4594
    %v4596 = vpop.f32.mrb[0].mxu0
    %4597 = vmatprep.mubr.f32.mxu0 0.0
    %v4598 = vand.u32 %v1287, 4294901760
    %v4599 = vsub.f32 %v1287, %v4598
    %4600 = vmatmul.mubr.f32.gmra.mrb[0].mxu0 %v4599
    %v4601 = vpop.f32.mrb[0].mxu0
    %v4602 = vadd.f32 %v4513, %v4601
    %v4603 = vpop.f32.mrb[0].mxu0
    %4604 = vdwg.mxu0
    %4605 = vmatprep.subr.mxu0 0.0
    %v4606 = vand.u32 %v4319, 4294901760
    %4607 = vmatpush1.msra.mxu0 %v4606
    %4608 = vmatprep.subr.mxu0 0.0
    %v4609 = vand.u32 %v4320, 4294901760
    %4610 = vmatpush1.msra.mxu0 %v4609
    %4611 = vmatprep.subr.mxu0 0.0
    %v4612 = vand.u32 %v4321, 4294901760
    %4613 = vmatpush1.msra.mxu0 %v4612
    %4614 = vmatprep.subr.mxu0 0.0
    %v4615 = vand.u32 %v4322, 4294901760
    %4616 = vmatpush1.msra.mxu0 %v4615
    %4617 = vmatprep.subr.mxu0 0.0
    %v4618 = vand.u32 %v4323, 4294901760
    %4619 = vmatpush1.msra.mxu0 %v4618
    %4620 = vmatprep.subr.mxu0 0.0
    %4621 = vmatpush1.msra.mxu0 0.0
    %4622 = vmatprep.subr.mxu0 0.0
    %4623 = vmatpush1.msra.mxu0 0.0
    %4624 = vmatprep.subr.mxu0 0.0
    %4625 = vmatpush1.msra.mxu0 0.0
    %4626 = vmatprep.subr.mxu0 0.0
    %4627 = vmatpush1.msra.mxu0 0.0
    %4628 = vmatprep.subr.mxu0 0.0
    %4629 = vmatpush1.msra.mxu0 0.0
    %4630 = vmatprep.subr.mxu0 0.0
    %4631 = vmatpush1.msra.mxu0 0.0
    %4632 = vmatprep.subr.mxu0 0.0
    %4633 = vmatpush1.msra.mxu0 0.0
    %4634 = vmatprep.subr.mxu0 0.0
    %4635 = vmatpush1.msra.mxu0 0.0
    %4636 = vmatprep.subr.mxu0 0.0
    %4637 = vmatpush1.msra.mxu0 0.0
    %4638 = vmatprep.subr.mxu0 0.0
    %4639 = vmatpush1.msra.mxu0 0.0
    %4640 = vmatprep.subr.mxu0 0.0
    %4641 = vmatpush1.msra.mxu0 0.0
    %4642 = vmatprep.subr.mxu0 0.0
    %4643 = vmatpush1.msra.mxu0 0.0
    %4644 = vmatprep.subr.mxu0 0.0
    %4645 = vmatpush1.msra.mxu0 0.0
    %4646 = vmatprep.subr.mxu0 0.0
    %4647 = vmatpush1.msra.mxu0 0.0
    %4648 = vmatprep.subr.mxu0 0.0
    %4649 = vmatpush1.msra.mxu0 0.0
    %4650 = vmatprep.subr.mxu0 0.0
    %4651 = vmatpush1.msra.mxu0 0.0
    %4652 = vmatprep.subr.mxu0 0.0
    %4653 = vmatpush1.msra.mxu0 0.0
    %4654 = vmatprep.subr.mxu0 0.0
    %4655 = vmatpush1.msra.mxu0 0.0
    %4656 = vmatprep.subr.mxu0 0.0
    %4657 = vmatpush1.msra.mxu0 0.0
    %4658 = vmatprep.subr.mxu0 0.0
    %4659 = vmatpush1.msra.mxu0 0.0
    %4660 = vmatprep.subr.mxu0 0.0
    %4661 = vmatpush1.msra.mxu0 0.0
    %4662 = vmatprep.subr.mxu0 0.0
    %4663 = vmatpush1.msra.mxu0 0.0
    %4664 = vmatprep.subr.mxu0 0.0
    %4665 = vmatpush1.msra.mxu0 0.0
    %4666 = vmatprep.subr.mxu0 0.0
    %4667 = vmatpush1.msra.mxu0 0.0
    %4668 = vmatprep.subr.mxu0 0.0
    %4669 = vmatpush1.msra.mxu0 0.0
    %4670 = vmatprep.subr.mxu0 0.0
    %4671 = vmatpush1.msra.mxu0 0.0
    %4672 = vmatprep.subr.mxu0 0.0
    %4673 = vmatpush1.msra.mxu0 0.0
    %4674 = vmatprep.mubr.f32.mxu0 0.0
    %v4675 = vand.u32 %v1284, 4294901760
    %v4676 = vsub.f32 %v1284, %v4675
    %v4677 = vand.u32 %v4676, 4294901760
    %4678 = vmatmul.mubr.f32.gmra.mrb[0].mxu0 %v4677
    %v4679 = vpop.f32.mrb[0].mxu0
    %v4680 = vadd.f32 %v4595, %v4679
    %v4681 = vpop.f32.mrb[0].mxu0
    %4682 = vmatprep.mubr.f32.mxu0 0.0
    %v4683 = vand.u32 %v1287, 4294901760
    %v4684 = vsub.f32 %v1287, %v4683
    %v4685 = vand.u32 %v4684, 4294901760
    %4686 = vmatmul.mubr.f32.gmra.mrb[0].mxu0 %v4685
    %v4687 = vpop.f32.mrb[0].mxu0
    %v4688 = vadd.f32 %v4602, %v4687
    %v4689 = vpop.f32.mrb[0].mxu0
    %4690 = vdwg.mxu0
    %4691 = vmatprep.subr.mxu0 0.0
    %v4692 = vand.u32 %v4319, 4294901760
    %v4693 = vsub.f32 %v4319, %v4692
    %v4694 = vand.u32 %v4693, 4294901760
    %4695 = vmatpush1.msra.mxu0 %v4694
    %4696 = vmatprep.subr.mxu0 0.0
    %v4697 = vand.u32 %v4320, 4294901760
    %v4698 = vsub.f32 %v4320, %v4697
    %v4699 = vand.u32 %v4698, 4294901760
    %4700 = vmatpush1.msra.mxu0 %v4699
    %4701 = vmatprep.subr.mxu0 0.0
    %v4702 = vand.u32 %v4321, 4294901760
    %v4703 = vsub.f32 %v4321, %v4702
    %v4704 = vand.u32 %v4703, 4294901760
    %4705 = vmatpush1.msra.mxu0 %v4704
    %4706 = vmatprep.subr.mxu0 0.0
    %v4707 = vand.u32 %v4322, 4294901760
    %v4708 = vsub.f32 %v4322, %v4707
    %v4709 = vand.u32 %v4708, 4294901760
    %4710 = vmatpush1.msra.mxu0 %v4709
    %4711 = vmatprep.subr.mxu0 0.0
    %v4712 = vand.u32 %v4323, 4294901760
    %v4713 = vsub.f32 %v4323, %v4712
    %v4714 = vand.u32 %v4713, 4294901760
    %4715 = vmatpush1.msra.mxu0 %v4714
    %4716 = vmatprep.subr.mxu0 0.0
    %4717 = vmatpush1.msra.mxu0 0.0
    %4718 = vmatprep.subr.mxu0 0.0
    %4719 = vmatpush1.msra.mxu0 0.0
    %4720 = vmatprep.subr.mxu0 0.0
    %4721 = vmatpush1.msra.mxu0 0.0
    %4722 = vmatprep.subr.mxu0 0.0
    %4723 = vmatpush1.msra.mxu0 0.0
    %4724 = vmatprep.subr.mxu0 0.0
    %4725 = vmatpush1.msra.mxu0 0.0
    %4726 = vmatprep.subr.mxu0 0.0
    %4727 = vmatpush1.msra.mxu0 0.0
    %4728 = vmatprep.subr.mxu0 0.0
    %4729 = vmatpush1.msra.mxu0 0.0
    %4730 = vmatprep.subr.mxu0 0.0
    %4731 = vmatpush1.msra.mxu0 0.0
    %4732 = vmatprep.subr.mxu0 0.0
    %4733 = vmatpush1.msra.mxu0 0.0
    %4734 = vmatprep.subr.mxu0 0.0
    %4735 = vmatpush1.msra.mxu0 0.0
    %4736 = vmatprep.subr.mxu0 0.0
    %4737 = vmatpush1.msra.mxu0 0.0
    %4738 = vmatprep.subr.mxu0 0.0
    %4739 = vmatpush1.msra.mxu0 0.0
    %4740 = vmatprep.subr.mxu0 0.0
    %4741 = vmatpush1.msra.mxu0 0.0
    %4742 = vmatprep.subr.mxu0 0.0
    %4743 = vmatpush1.msra.mxu0 0.0
    %4744 = vmatprep.subr.mxu0 0.0
    %4745 = vmatpush1.msra.mxu0 0.0
    %4746 = vmatprep.subr.mxu0 0.0
    %4747 = vmatpush1.msra.mxu0 0.0
    %4748 = vmatprep.subr.mxu0 0.0
    %4749 = vmatpush1.msra.mxu0 0.0
    %4750 = vmatprep.subr.mxu0 0.0
    %4751 = vmatpush1.msra.mxu0 0.0
    %4752 = vmatprep.subr.mxu0 0.0
    %4753 = vmatpush1.msra.mxu0 0.0
    %4754 = vmatprep.subr.mxu0 0.0
    %4755 = vmatpush1.msra.mxu0 0.0
    %4756 = vmatprep.subr.mxu0 0.0
    %4757 = vmatpush1.msra.mxu0 0.0
    %4758 = vmatprep.subr.mxu0 0.0
    %4759 = vmatpush1.msra.mxu0 0.0
    %4760 = vmatprep.subr.mxu0 0.0
    %4761 = vmatpush1.msra.mxu0 0.0
    %4762 = vmatprep.subr.mxu0 0.0
    %4763 = vmatpush1.msra.mxu0 0.0
    %4764 = vmatprep.subr.mxu0 0.0
    %4765 = vmatpush1.msra.mxu0 0.0
    %4766 = vmatprep.subr.mxu0 0.0
    %4767 = vmatpush1.msra.mxu0 0.0
    %4768 = vmatprep.subr.mxu0 0.0
    %4769 = vmatpush1.msra.mxu0 0.0
    %4770 = vmatprep.mubr.f32.mxu0 0.0
    %v4771 = vand.u32 %v1284, 4294901760
    %4772 = vmatmul.mubr.f32.gmra.mrb[0].mxu0 %v4771
    %v4773 = vpop.f32.mrb[0].mxu0
    %v4774 = vadd.f32 %v4680, %v4773
    %v4775 = vpop.f32.mrb[0].mxu0
    %4776 = vmatprep.mubr.f32.mxu0 0.0
    %v4777 = vand.u32 %v1287, 4294901760
    %4778 = vmatmul.mubr.f32.gmra.mrb[0].mxu0 %v4777
    %v4779 = vpop.f32.mrb[0].mxu0
    %v4780 = vadd.f32 %v4688, %v4779
    %v4781 = vpop.f32.mrb[0].mxu0
    %4782 = vdwg.mxu0
    %4783 = vmatprep.subr.mxu0 0.0
    %v4784 = vand.u32 %v4319, 4294901760
    %4785 = vmatpush1.msra.mxu0 %v4784
    %4786 = vmatprep.subr.mxu0 0.0
    %v4787 = vand.u32 %v4320, 4294901760
    %4788 = vmatpush1.msra.mxu0 %v4787
    %4789 = vmatprep.subr.mxu0 0.0
    %v4790 = vand.u32 %v4321, 4294901760
    %4791 = vmatpush1.msra.mxu0 %v4790
    %4792 = vmatprep.subr.mxu0 0.0
    %v4793 = vand.u32 %v4322, 4294901760
    %4794 = vmatpush1.msra.mxu0 %v4793
    %4795 = vmatprep.subr.mxu0 0.0
    %v4796 = vand.u32 %v4323, 4294901760
    %4797 = vmatpush1.msra.mxu0 %v4796
    %4798 = vmatprep.subr.mxu0 0.0
    %4799 = vmatpush1.msra.mxu0 0.0
    %4800 = vmatprep.subr.mxu0 0.0
    %4801 = vmatpush1.msra.mxu0 0.0
    %4802 = vmatprep.subr.mxu0 0.0
    %4803 = vmatpush1.msra.mxu0 0.0
    %4804 = vmatprep.subr.mxu0 0.0
    %4805 = vmatpush1.msra.mxu0 0.0
    %4806 = vmatprep.subr.mxu0 0.0
    %4807 = vmatpush1.msra.mxu0 0.0
    %4808 = vmatprep.subr.mxu0 0.0
    %4809 = vmatpush1.msra.mxu0 0.0
    %4810 = vmatprep.subr.mxu0 0.0
    %4811 = vmatpush1.msra.mxu0 0.0
    %4812 = vmatprep.subr.mxu0 0.0
    %4813 = vmatpush1.msra.mxu0 0.0
    %4814 = vmatprep.subr.mxu0 0.0
    %4815 = vmatpush1.msra.mxu0 0.0
    %4816 = vmatprep.subr.mxu0 0.0
    %4817 = vmatpush1.msra.mxu0 0.0
    %4818 = vmatprep.subr.mxu0 0.0
    %4819 = vmatpush1.msra.mxu0 0.0
    %4820 = vmatprep.subr.mxu0 0.0
    %4821 = vmatpush1.msra.mxu0 0.0
    %4822 = vmatprep.subr.mxu0 0.0
    %4823 = vmatpush1.msra.mxu0 0.0
    %4824 = vmatprep.subr.mxu0 0.0
    %4825 = vmatpush1.msra.mxu0 0.0
    %4826 = vmatprep.subr.mxu0 0.0
    %4827 = vmatpush1.msra.mxu0 0.0
    %4828 = vmatprep.subr.mxu0 0.0
    %4829 = vmatpush1.msra.mxu0 0.0
    %4830 = vmatprep.subr.mxu0 0.0
    %4831 = vmatpush1.msra.mxu0 0.0
    %4832 = vmatprep.subr.mxu0 0.0
    %4833 = vmatpush1.msra.mxu0 0.0
    %4834 = vmatprep.subr.mxu0 0.0
    %4835 = vmatpush1.msra.mxu0 0.0
    %4836 = vmatprep.subr.mxu0 0.0
    %4837 = vmatpush1.msra.mxu0 0.0
    %4838 = vmatprep.subr.mxu0 0.0
    %4839 = vmatpush1.msra.mxu0 0.0
    %4840 = vmatprep.subr.mxu0 0.0
    %4841 = vmatpush1.msra.mxu0 0.0
    %4842 = vmatprep.subr.mxu0 0.0
    %4843 = vmatpush1.msra.mxu0 0.0
    %4844 = vmatprep.subr.mxu0 0.0
    %4845 = vmatpush1.msra.mxu0 0.0
    %4846 = vmatprep.subr.mxu0 0.0
    %4847 = vmatpush1.msra.mxu0 0.0
    %4848 = vmatprep.subr.mxu0 0.0
    %4849 = vmatpush1.msra.mxu0 0.0
    %4850 = vmatprep.subr.mxu0 0.0
    %4851 = vmatpush1.msra.mxu0 0.0
    %4852 = vmatprep.mubr.f32.mxu0 0.0
    %v4853 = vand.u32 %v1284, 4294901760
    %4854 = vmatmul.mubr.f32.gmra.mrb[0].mxu0 %v4853
    %v4855 = vpop.f32.mrb[0].mxu0
    %v4856 = vadd.f32 %v4774, %v4855
    %v4857 = vpop.f32.mrb[0].mxu0
    %4858 = vmatprep.mubr.f32.mxu0 0.0
    %v4859 = vand.u32 %v1287, 4294901760
    %4860 = vmatmul.mubr.f32.gmra.mrb[0].mxu0 %v4859
    %v4861 = vpop.f32.mrb[0].mxu0
    %v4862 = vadd.f32 %v4780, %v4861
    %v4863 = vpop.f32.mrb[0].mxu0
    %4864 = vdwg.mxu0
    %s4865 = sld [smem:[#allocation2 + $0x2]]
    %v4866 = vstv %s4865
    %v4867 = vmul.f32 %v4866, %v3542
    %v4868 = vmul.f32 %v4866, %v3543
    %v4869 = vadd.f32 %v4867, %v4856
    %v4870 = vadd.f32 %v4868, %v4862
    %s4871 = scalar_lea.vmem %s16, 32
    %v4872 = vld [vmem:[%s4871] sm:$0xff]
    %v4873 = vld [vmem:[%s4871 + $0x8] sm:$0xff]
    %v4874 = vld [vmem:[%s4871 + $0x10] sm:$0xff]
    %v4875 = vld [vmem:[%s4871 + $0x18] sm:$0xff]
    %s4876 = scalar_lea.vmem [#allocation16], 32
    %v4877 = vld [vmem:[%s4876] sm:$0xff]
    %v4878 = vld [vmem:[%s4876 + $0x8] sm:$0xff]
    %v4879 = vld [vmem:[%s4876 + $0x10] sm:$0xff]
    %v4880 = vld [vmem:[%s4876 + $0x18] sm:$0xff]
    %s4881 = scalar_lea.vmem %s18, 4
    %v4882 = vld [vmem:[%s4881] sm:$0xf]
    %v4883 = vlaneseq
    %v4884 = vshrl.u32 %v4883, 7
    %v4885 = vsub.s32 0, %v4884
    %v4886 = vrot.slane %v4882, %v4885
    %v4888 = vsel %vm1933, %v4869, 0
    %v4891 = vsel %vm1933, %v4870, 0
    %4893 = vmatprep.subr.mxu0 0.0
    %4894 = vmatpush1.msra.mxu0 %v4872
    %4895 = vmatprep.subr.mxu0 0.0
    %4896 = vmatpush1.msra.mxu0 %v4873
    %4897 = vmatprep.subr.mxu0 0.0
    %4898 = vmatpush1.msra.mxu0 %v4874
    %4899 = vmatprep.subr.mxu0 0.0
    %4900 = vmatpush1.msra.mxu0 %v4875
    %4901 = vmatprep.subr.mxu0 0.0
    %4902 = vmatpush1.msra.mxu0 0.0
    %4903 = vmatprep.subr.mxu0 0.0
    %4904 = vmatpush1.msra.mxu0 0.0
    %4905 = vmatprep.subr.mxu0 0.0
    %4906 = vmatpush1.msra.mxu0 0.0
    %4907 = vmatprep.subr.mxu0 0.0
    %4908 = vmatpush1.msra.mxu0 0.0
    %4909 = vmatprep.subr.mxu0 0.0
    %4910 = vmatpush1.msra.mxu0 0.0
    %4911 = vmatprep.subr.mxu0 0.0
    %4912 = vmatpush1.msra.mxu0 0.0
    %4913 = vmatprep.subr.mxu0 0.0
    %4914 = vmatpush1.msra.mxu0 0.0
    %4915 = vmatprep.subr.mxu0 0.0
    %4916 = vmatpush1.msra.mxu0 0.0
    %4917 = vmatprep.subr.mxu0 0.0
    %4918 = vmatpush1.msra.mxu0 0.0
    %4919 = vmatprep.subr.mxu0 0.0
    %4920 = vmatpush1.msra.mxu0 0.0
    %4921 = vmatprep.subr.mxu0 0.0
    %4922 = vmatpush1.msra.mxu0 0.0
    %4923 = vmatprep.subr.mxu0 0.0
    %4924 = vmatpush1.msra.mxu0 0.0
    %4925 = vmatprep.subr.mxu0 0.0
    %4926 = vmatpush1.msra.mxu0 0.0
    %4927 = vmatprep.subr.mxu0 0.0
    %4928 = vmatpush1.msra.mxu0 0.0
    %4929 = vmatprep.subr.mxu0 0.0
    %4930 = vmatpush1.msra.mxu0 0.0
    %4931 = vmatprep.subr.mxu0 0.0
    %4932 = vmatpush1.msra.mxu0 0.0
    %4933 = vmatprep.subr.mxu0 0.0
    %4934 = vmatpush1.msra.mxu0 0.0
    %4935 = vmatprep.subr.mxu0 0.0
    %4936 = vmatpush1.msra.mxu0 0.0
    %4937 = vmatprep.subr.mxu0 0.0
    %4938 = vmatpush1.msra.mxu0 0.0
    %4939 = vmatprep.subr.mxu0 0.0
    %4940 = vmatpush1.msra.mxu0 0.0
    %4941 = vmatprep.subr.mxu0 0.0
    %4942 = vmatpush1.msra.mxu0 0.0
    %4943 = vmatprep.subr.mxu0 0.0
    %4944 = vmatpush1.msra.mxu0 0.0
    %4945 = vmatprep.subr.mxu0 0.0
    %4946 = vmatpush1.msra.mxu0 0.0
    %4947 = vmatprep.subr.mxu0 0.0
    %4948 = vmatpush1.msra.mxu0 0.0
    %4949 = vmatprep.subr.mxu0 0.0
    %4950 = vmatpush1.msra.mxu0 0.0
    %4951 = vmatprep.subr.mxu0 0.0
    %4952 = vmatpush1.msra.mxu0 0.0
    %4953 = vmatprep.subr.mxu0 0.0
    %4954 = vmatpush1.msra.mxu0 0.0
    %4955 = vmatprep.subr.mxu0 0.0
    %4956 = vmatpush1.msra.mxu0 0.0
    %4957 = vmatprep.mubr.f32.mxu0 0.0
    %4958 = vmatmul.mubr.f32.gmra.mrb[0].mxu0 %v4888
    %v4959 = vpop.f32.mrb[0].mxu0
    %v4960 = vadd.f32 %v4886, %v4959
    %v4961 = vpop.f32.mrb[0].mxu0
    %4962 = vmatprep.mubr.f32.mxu0 0.0
    %4963 = vmatmul.mubr.f32.gmra.mrb[0].mxu0 %v4891
    %v4964 = vpop.f32.mrb[0].mxu0
    %v4965 = vadd.f32 %v4886, %v4964
    %v4966 = vpop.f32.mrb[0].mxu0
    %4967 = vdwg.mxu0
    %v4968 = vmax.f32 %v4960, 0.0
    %v4969 = vmax.f32 %v4965, 0.0
    %v4970 = vlaneseq
    %v4971 = vshrl.u32 %v4970, 7
    %v4972 = vsub.s32 1, %v4971
    %v4973 = vrot.slane %v4882, %v4972
    %v4975 = vsel %vm1933, %v4968, 0
    %v4978 = vsel %vm1933, %v4969, 0
    %4980 = vmatprep.subr.mxu0 0.0
    %4981 = vmatpush1.msra.mxu0 %v4877
    %4982 = vmatprep.subr.mxu0 0.0
    %4983 = vmatpush1.msra.mxu0 %v4878
    %4984 = vmatprep.subr.mxu0 0.0
    %4985 = vmatpush1.msra.mxu0 %v4879
    %4986 = vmatprep.subr.mxu0 0.0
    %4987 = vmatpush1.msra.mxu0 %v4880
    %4988 = vmatprep.subr.mxu0 0.0
    %4989 = vmatpush1.msra.mxu0 0.0
    %4990 = vmatprep.subr.mxu0 0.0
    %4991 = vmatpush1.msra.mxu0 0.0
    %4992 = vmatprep.subr.mxu0 0.0
    %4993 = vmatpush1.msra.mxu0 0.0
    %4994 = vmatprep.subr.mxu0 0.0
    %4995 = vmatpush1.msra.mxu0 0.0
    %4996 = vmatprep.subr.mxu0 0.0
    %4997 = vmatpush1.msra.mxu0 0.0
    %4998 = vmatprep.subr.mxu0 0.0
    %4999 = vmatpush1.msra.mxu0 0.0
    %5000 = vmatprep.subr.mxu0 0.0
    %5001 = vmatpush1.msra.mxu0 0.0
    %5002 = vmatprep.subr.mxu0 0.0
    %5003 = vmatpush1.msra.mxu0 0.0
    %5004 = vmatprep.subr.mxu0 0.0
    %5005 = vmatpush1.msra.mxu0 0.0
    %5006 = vmatprep.subr.mxu0 0.0
    %5007 = vmatpush1.msra.mxu0 0.0
    %5008 = vmatprep.subr.mxu0 0.0
    %5009 = vmatpush1.msra.mxu0 0.0
    %5010 = vmatprep.subr.mxu0 0.0
    %5011 = vmatpush1.msra.mxu0 0.0
    %5012 = vmatprep.subr.mxu0 0.0
    %5013 = vmatpush1.msra.mxu0 0.0
    %5014 = vmatprep.subr.mxu0 0.0
    %5015 = vmatpush1.msra.mxu0 0.0
    %5016 = vmatprep.subr.mxu0 0.0
    %5017 = vmatpush1.msra.mxu0 0.0
    %5018 = vmatprep.subr.mxu0 0.0
    %5019 = vmatpush1.msra.mxu0 0.0
    %5020 = vmatprep.subr.mxu0 0.0
    %5021 = vmatpush1.msra.mxu0 0.0
    %5022 = vmatprep.subr.mxu0 0.0
    %5023 = vmatpush1.msra.mxu0 0.0
    %5024 = vmatprep.subr.mxu0 0.0
    %5025 = vmatpush1.msra.mxu0 0.0
    %5026 = vmatprep.subr.mxu0 0.0
    %5027 = vmatpush1.msra.mxu0 0.0
    %5028 = vmatprep.subr.mxu0 0.0
    %5029 = vmatpush1.msra.mxu0 0.0
    %5030 = vmatprep.subr.mxu0 0.0
    %5031 = vmatpush1.msra.mxu0 0.0
    %5032 = vmatprep.subr.mxu0 0.0
    %5033 = vmatpush1.msra.mxu0 0.0
    %5034 = vmatprep.subr.mxu0 0.0
    %5035 = vmatpush1.msra.mxu0 0.0
    %5036 = vmatprep.subr.mxu0 0.0
    %5037 = vmatpush1.msra.mxu0 0.0
    %5038 = vmatprep.subr.mxu0 0.0
    %5039 = vmatpush1.msra.mxu0 0.0
    %5040 = vmatprep.subr.mxu0 0.0
    %5041 = vmatpush1.msra.mxu0 0.0
    %5042 = vmatprep.subr.mxu0 0.0
    %5043 = vmatpush1.msra.mxu0 0.0
    %5044 = vmatprep.mubr.f32.mxu0 0.0
    %5045 = vmatmul.mubr.f32.gmra.mrb[0].mxu0 %v4975
    %v5046 = vpop.f32.mrb[0].mxu0
    %v5047 = vadd.f32 %v4973, %v5046
    %v5048 = vpop.f32.mrb[0].mxu0
    %5049 = vmatprep.mubr.f32.mxu0 0.0
    %5050 = vmatmul.mubr.f32.gmra.mrb[0].mxu0 %v4978
    %v5051 = vpop.f32.mrb[0].mxu0
    %v5052 = vadd.f32 %v4973, %v5051
    %v5053 = vpop.f32.mrb[0].mxu0
    %5054 = vdwg.mxu0
    %v5055 = vmax.f32 %v5047, 0.0
    %v5056 = vmax.f32 %v5052, 0.0
    %v5057 = vlaneseq
    %v5058 = vshrl.u32 %v5057, 7
    %v5059 = vsub.s32 2, %v5058
    %v5060 = vrot.slane %v4882, %v5059
    %v5061 = vmul.f32 %v5055, %v5060
    %v5062 = vmul.f32 %v5056, %v5060
    %v5063 = vlaneseq
    %v5064 = vshrl.u32 %v5063, 7
    %v5065 = vsub.s32 3, %v5064
    %v5066 = vrot.slane %v4882, %v5065
    %v5067 = vadd.f32 %v5061, %v5066
    %v5068 = vadd.f32 %v5062, %v5066
    %v5069 = vld [vmem:[%s4] sm:$0x1]
    %v5070 = vlaneseq
    %v5071 = vshrl.u32 %v5070, 7
    %v5072 = vsub.s32 0, %v5071
    %v5073 = vrot.slane %v5069, %v5072
    %vm5074 = vcmp.eq.s32.totalorder %v213, %v5073
    %v5075 = vsel %vm5074, 1, 0
    %v5076 = vcvt.s32.f32 %v5075
    %vm5077 = vcmask 123904
    %v5078 = vsel %vm5077, %v5076, 0.0
    %5079 = vadd.xlane.f32.xlu0 %v5078
    %v5080 = vpop.xlane.xlu0 %5079
    %v5081 = vmax.f32 %v5080, 1.0
    %v5083 = vsel %vm630, %v5076, 0
    %5085 = vmatprep.subr.mxu0 0.0
    %v5086 = vand.u32 %v5067, 4294901760
    %5087 = vmatpush1.msra.mxu0 %v5086
    %5088 = vmatprep.subr.mxu0 0.0
    %v5089 = vand.u32 %v5068, 4294901760
    %5090 = vmatpush1.msra.mxu0 %v5089
    %5091 = vmatprep.subr.mxu0 0.0
    %5092 = vmatpush1.msra.mxu0 0.0
    %5093 = vmatprep.subr.mxu0 0.0
    %5094 = vmatpush1.msra.mxu0 0.0
    %5095 = vmatprep.subr.mxu0 0.0
    %5096 = vmatpush1.msra.mxu0 0.0
    %5097 = vmatprep.subr.mxu0 0.0
    %5098 = vmatpush1.msra.mxu0 0.0
    %5099 = vmatprep.subr.mxu0 0.0
    %5100 = vmatpush1.msra.mxu0 0.0
    %5101 = vmatprep.subr.mxu0 0.0
    %5102 = vmatpush1.msra.mxu0 0.0
    %5103 = vmatprep.subr.mxu0 0.0
    %5104 = vmatpush1.msra.mxu0 0.0
    %5105 = vmatprep.subr.mxu0 0.0
    %5106 = vmatpush1.msra.mxu0 0.0
    %5107 = vmatprep.subr.mxu0 0.0
    %5108 = vmatpush1.msra.mxu0 0.0
    %5109 = vmatprep.subr.mxu0 0.0
    %5110 = vmatpush1.msra.mxu0 0.0
    %5111 = vmatprep.subr.mxu0 0.0
    %5112 = vmatpush1.msra.mxu0 0.0
    %5113 = vmatprep.subr.mxu0 0.0
    %5114 = vmatpush1.msra.mxu0 0.0
    %5115 = vmatprep.subr.mxu0 0.0
    %5116 = vmatpush1.msra.mxu0 0.0
    %5117 = vmatprep.subr.mxu0 0.0
    %5118 = vmatpush1.msra.mxu0 0.0
    %5119 = vmatprep.subr.mxu0 0.0
    %5120 = vmatpush1.msra.mxu0 0.0
    %5121 = vmatprep.subr.mxu0 0.0
    %5122 = vmatpush1.msra.mxu0 0.0
    %5123 = vmatprep.subr.mxu0 0.0
    %5124 = vmatpush1.msra.mxu0 0.0
    %5125 = vmatprep.subr.mxu0 0.0
    %5126 = vmatpush1.msra.mxu0 0.0
    %5127 = vmatprep.subr.mxu0 0.0
    %5128 = vmatpush1.msra.mxu0 0.0
    %5129 = vmatprep.subr.mxu0 0.0
    %5130 = vmatpush1.msra.mxu0 0.0
    %5131 = vmatprep.subr.mxu0 0.0
    %5132 = vmatpush1.msra.mxu0 0.0
    %5133 = vmatprep.subr.mxu0 0.0
    %5134 = vmatpush1.msra.mxu0 0.0
    %5135 = vmatprep.subr.mxu0 0.0
    %5136 = vmatpush1.msra.mxu0 0.0
    %5137 = vmatprep.subr.mxu0 0.0
    %5138 = vmatpush1.msra.mxu0 0.0
    %5139 = vmatprep.subr.mxu0 0.0
    %5140 = vmatpush1.msra.mxu0 0.0
    %5141 = vmatprep.subr.mxu0 0.0
    %5142 = vmatpush1.msra.mxu0 0.0
    %5143 = vmatprep.subr.mxu0 0.0
    %5144 = vmatpush1.msra.mxu0 0.0
    %5145 = vmatprep.subr.mxu0 0.0
    %5146 = vmatpush1.msra.mxu0 0.0
    %5147 = vmatprep.subr.mxu0 0.0
    %5148 = vmatpush1.msra.mxu0 0.0
    %5149 = vmatprep.subr.mxu0 0.0
    %5150 = vmatpush1.msra.mxu0 0.0
    %5151 = vmatprep.mubr.f32.mxu0 0.0
    %v5152 = vand.u32 %v5083, 4294901760
    %v5153 = vsub.f32 %v5083, %v5152
    %v5154 = vand.u32 %v5153, 4294901760
    %v5155 = vsub.f32 %v5153, %v5154
    %v5156 = vand.u32 %v5155, 4294901760
    %5157 = vmatmul.mubr.f32.gmra.mrb[0].mxu0 %v5156
    %v5158 = vpop.f32.mrb[0].mxu0
    %v5159 = vadd.f32 0.0, %v5158
    %v5160 = vpop.f32.mrb[0].mxu0
    %5161 = vdwg.mxu0
    %5162 = vmatprep.subr.mxu0 0.0
    %v5163 = vand.u32 %v5067, 4294901760
    %v5164 = vsub.f32 %v5067, %v5163
    %v5165 = vand.u32 %v5164, 4294901760
    %v5166 = vsub.f32 %v5164, %v5165
    %v5167 = vand.u32 %v5166, 4294901760
    %5168 = vmatpush1.msra.mxu0 %v5167
    %5169 = vmatprep.subr.mxu0 0.0
    %v5170 = vand.u32 %v5068, 4294901760
    %v5171 = vsub.f32 %v5068, %v5170
    %v5172 = vand.u32 %v5171, 4294901760
    %v5173 = vsub.f32 %v5171, %v5172
    %v5174 = vand.u32 %v5173, 4294901760
    %5175 = vmatpush1.msra.mxu0 %v5174
    %5176 = vmatprep.subr.mxu0 0.0
    %5177 = vmatpush1.msra.mxu0 0.0
    %5178 = vmatprep.subr.mxu0 0.0
    %5179 = vmatpush1.msra.mxu0 0.0
    %5180 = vmatprep.subr.mxu0 0.0
    %5181 = vmatpush1.msra.mxu0 0.0
    %5182 = vmatprep.subr.mxu0 0.0
    %5183 = vmatpush1.msra.mxu0 0.0
    %5184 = vmatprep.subr.mxu0 0.0
    %5185 = vmatpush1.msra.mxu0 0.0
    %5186 = vmatprep.subr.mxu0 0.0
    %5187 = vmatpush1.msra.mxu0 0.0
    %5188 = vmatprep.subr.mxu0 0.0
    %5189 = vmatpush1.msra.mxu0 0.0
    %5190 = vmatprep.subr.mxu0 0.0
    %5191 = vmatpush1.msra.mxu0 0.0
    %5192 = vmatprep.subr.mxu0 0.0
    %5193 = vmatpush1.msra.mxu0 0.0
    %5194 = vmatprep.subr.mxu0 0.0
    %5195 = vmatpush1.msra.mxu0 0.0
    %5196 = vmatprep.subr.mxu0 0.0
    %5197 = vmatpush1.msra.mxu0 0.0
    %5198 = vmatprep.subr.mxu0 0.0
    %5199 = vmatpush1.msra.mxu0 0.0
    %5200 = vmatprep.subr.mxu0 0.0
    %5201 = vmatpush1.msra.mxu0 0.0
    %5202 = vmatprep.subr.mxu0 0.0
    %5203 = vmatpush1.msra.mxu0 0.0
    %5204 = vmatprep.subr.mxu0 0.0
    %5205 = vmatpush1.msra.mxu0 0.0
    %5206 = vmatprep.subr.mxu0 0.0
    %5207 = vmatpush1.msra.mxu0 0.0
    %5208 = vmatprep.subr.mxu0 0.0
    %5209 = vmatpush1.msra.mxu0 0.0
    %5210 = vmatprep.subr.mxu0 0.0
    %5211 = vmatpush1.msra.mxu0 0.0
    %5212 = vmatprep.subr.mxu0 0.0
    %5213 = vmatpush1.msra.mxu0 0.0
    %5214 = vmatprep.subr.mxu0 0.0
    %5215 = vmatpush1.msra.mxu0 0.0
    %5216 = vmatprep.subr.mxu0 0.0
    %5217 = vmatpush1.msra.mxu0 0.0
    %5218 = vmatprep.subr.mxu0 0.0
    %5219 = vmatpush1.msra.mxu0 0.0
    %5220 = vmatprep.subr.mxu0 0.0
    %5221 = vmatpush1.msra.mxu0 0.0
    %5222 = vmatprep.subr.mxu0 0.0
    %5223 = vmatpush1.msra.mxu0 0.0
    %5224 = vmatprep.subr.mxu0 0.0
    %5225 = vmatpush1.msra.mxu0 0.0
    %5226 = vmatprep.subr.mxu0 0.0
    %5227 = vmatpush1.msra.mxu0 0.0
    %5228 = vmatprep.subr.mxu0 0.0
    %5229 = vmatpush1.msra.mxu0 0.0
    %5230 = vmatprep.subr.mxu0 0.0
    %5231 = vmatpush1.msra.mxu0 0.0
    %5232 = vmatprep.subr.mxu0 0.0
    %5233 = vmatpush1.msra.mxu0 0.0
    %5234 = vmatprep.subr.mxu0 0.0
    %5235 = vmatpush1.msra.mxu0 0.0
    %5236 = vmatprep.mubr.f32.mxu0 0.0
    %v5237 = vand.u32 %v5083, 4294901760
    %5238 = vmatmul.mubr.f32.gmra.mrb[0].mxu0 %v5237
    %v5239 = vpop.f32.mrb[0].mxu0
    %v5240 = vadd.f32 %v5159, %v5239
    %v5241 = vpop.f32.mrb[0].mxu0
    %5242 = vdwg.mxu0
    %5243 = vmatprep.subr.mxu0 0.0
    %v5244 = vand.u32 %v5067, 4294901760
    %v5245 = vsub.f32 %v5067, %v5244
    %5246 = vmatpush1.msra.mxu0 %v5245
    %5247 = vmatprep.subr.mxu0 0.0
    %v5248 = vand.u32 %v5068, 4294901760
    %v5249 = vsub.f32 %v5068, %v5248
    %5250 = vmatpush1.msra.mxu0 %v5249
    %5251 = vmatprep.subr.mxu0 0.0
    %5252 = vmatpush1.msra.mxu0 0.0
    %5253 = vmatprep.subr.mxu0 0.0
    %5254 = vmatpush1.msra.mxu0 0.0
    %5255 = vmatprep.subr.mxu0 0.0
    %5256 = vmatpush1.msra.mxu0 0.0
    %5257 = vmatprep.subr.mxu0 0.0
    %5258 = vmatpush1.msra.mxu0 0.0
    %5259 = vmatprep.subr.mxu0 0.0
    %5260 = vmatpush1.msra.mxu0 0.0
    %5261 = vmatprep.subr.mxu0 0.0
    %5262 = vmatpush1.msra.mxu0 0.0
    %5263 = vmatprep.subr.mxu0 0.0
    %5264 = vmatpush1.msra.mxu0 0.0
    %5265 = vmatprep.subr.mxu0 0.0
    %5266 = vmatpush1.msra.mxu0 0.0
    %5267 = vmatprep.subr.mxu0 0.0
    %5268 = vmatpush1.msra.mxu0 0.0
    %5269 = vmatprep.subr.mxu0 0.0
    %5270 = vmatpush1.msra.mxu0 0.0
    %5271 = vmatprep.subr.mxu0 0.0
    %5272 = vmatpush1.msra.mxu0 0.0
    %5273 = vmatprep.subr.mxu0 0.0
    %5274 = vmatpush1.msra.mxu0 0.0
    %5275 = vmatprep.subr.mxu0 0.0
    %5276 = vmatpush1.msra.mxu0 0.0
    %5277 = vmatprep.subr.mxu0 0.0
    %5278 = vmatpush1.msra.mxu0 0.0
    %5279 = vmatprep.subr.mxu0 0.0
    %5280 = vmatpush1.msra.mxu0 0.0
    %5281 = vmatprep.subr.mxu0 0.0
    %5282 = vmatpush1.msra.mxu0 0.0
    %5283 = vmatprep.subr.mxu0 0.0
    %5284 = vmatpush1.msra.mxu0 0.0
    %5285 = vmatprep.subr.mxu0 0.0
    %5286 = vmatpush1.msra.mxu0 0.0
    %5287 = vmatprep.subr.mxu0 0.0
    %5288 = vmatpush1.msra.mxu0 0.0
    %5289 = vmatprep.subr.mxu0 0.0
    %5290 = vmatpush1.msra.mxu0 0.0
    %5291 = vmatprep.subr.mxu0 0.0
    %5292 = vmatpush1.msra.mxu0 0.0
    %5293 = vmatprep.subr.mxu0 0.0
    %5294 = vmatpush1.msra.mxu0 0.0
    %5295 = vmatprep.subr.mxu0 0.0
    %5296 = vmatpush1.msra.mxu0 0.0
    %5297 = vmatprep.subr.mxu0 0.0
    %5298 = vmatpush1.msra.mxu0 0.0
    %5299 = vmatprep.subr.mxu0 0.0
    %5300 = vmatpush1.msra.mxu0 0.0
    %5301 = vmatprep.subr.mxu0 0.0
    %5302 = vmatpush1.msra.mxu0 0.0
    %5303 = vmatprep.subr.mxu0 0.0
    %5304 = vmatpush1.msra.mxu0 0.0
    %5305 = vmatprep.subr.mxu0 0.0
    %5306 = vmatpush1.msra.mxu0 0.0
    %5307 = vmatprep.subr.mxu0 0.0
    %5308 = vmatpush1.msra.mxu0 0.0
    %5309 = vmatprep.subr.mxu0 0.0
    %5310 = vmatpush1.msra.mxu0 0.0
    %5311 = vmatprep.mubr.f32.mxu0 0.0
    %v5312 = vand.u32 %v5083, 4294901760
    %v5313 = vsub.f32 %v5083, %v5312
    %5314 = vmatmul.mubr.f32.gmra.mrb[0].mxu0 %v5313
    %v5315 = vpop.f32.mrb[0].mxu0
    %v5316 = vadd.f32 %v5240, %v5315
    %v5317 = vpop.f32.mrb[0].mxu0
    %5318 = vdwg.mxu0
    %5319 = vmatprep.subr.mxu0 0.0
    %v5320 = vand.u32 %v5067, 4294901760
    %5321 = vmatpush1.msra.mxu0 %v5320
    %5322 = vmatprep.subr.mxu0 0.0
    %v5323 = vand.u32 %v5068, 4294901760
    %5324 = vmatpush1.msra.mxu0 %v5323
    %5325 = vmatprep.subr.mxu0 0.0
    %5326 = vmatpush1.msra.mxu0 0.0
    %5327 = vmatprep.subr.mxu0 0.0
    %5328 = vmatpush1.msra.mxu0 0.0
    %5329 = vmatprep.subr.mxu0 0.0
    %5330 = vmatpush1.msra.mxu0 0.0
    %5331 = vmatprep.subr.mxu0 0.0
    %5332 = vmatpush1.msra.mxu0 0.0
    %5333 = vmatprep.subr.mxu0 0.0
    %5334 = vmatpush1.msra.mxu0 0.0
    %5335 = vmatprep.subr.mxu0 0.0
    %5336 = vmatpush1.msra.mxu0 0.0
    %5337 = vmatprep.subr.mxu0 0.0
    %5338 = vmatpush1.msra.mxu0 0.0
    %5339 = vmatprep.subr.mxu0 0.0
    %5340 = vmatpush1.msra.mxu0 0.0
    %5341 = vmatprep.subr.mxu0 0.0
    %5342 = vmatpush1.msra.mxu0 0.0
    %5343 = vmatprep.subr.mxu0 0.0
    %5344 = vmatpush1.msra.mxu0 0.0
    %5345 = vmatprep.subr.mxu0 0.0
    %5346 = vmatpush1.msra.mxu0 0.0
    %5347 = vmatprep.subr.mxu0 0.0
    %5348 = vmatpush1.msra.mxu0 0.0
    %5349 = vmatprep.subr.mxu0 0.0
    %5350 = vmatpush1.msra.mxu0 0.0
    %5351 = vmatprep.subr.mxu0 0.0
    %5352 = vmatpush1.msra.mxu0 0.0
    %5353 = vmatprep.subr.mxu0 0.0
    %5354 = vmatpush1.msra.mxu0 0.0
    %5355 = vmatprep.subr.mxu0 0.0
    %5356 = vmatpush1.msra.mxu0 0.0
    %5357 = vmatprep.subr.mxu0 0.0
    %5358 = vmatpush1.msra.mxu0 0.0
    %5359 = vmatprep.subr.mxu0 0.0
    %5360 = vmatpush1.msra.mxu0 0.0
    %5361 = vmatprep.subr.mxu0 0.0
    %5362 = vmatpush1.msra.mxu0 0.0
    %5363 = vmatprep.subr.mxu0 0.0
    %5364 = vmatpush1.msra.mxu0 0.0
    %5365 = vmatprep.subr.mxu0 0.0
    %5366 = vmatpush1.msra.mxu0 0.0
    %5367 = vmatprep.subr.mxu0 0.0
    %5368 = vmatpush1.msra.mxu0 0.0
    %5369 = vmatprep.subr.mxu0 0.0
    %5370 = vmatpush1.msra.mxu0 0.0
    %5371 = vmatprep.subr.mxu0 0.0
    %5372 = vmatpush1.msra.mxu0 0.0
    %5373 = vmatprep.subr.mxu0 0.0
    %5374 = vmatpush1.msra.mxu0 0.0
    %5375 = vmatprep.subr.mxu0 0.0
    %5376 = vmatpush1.msra.mxu0 0.0
    %5377 = vmatprep.subr.mxu0 0.0
    %5378 = vmatpush1.msra.mxu0 0.0
    %5379 = vmatprep.subr.mxu0 0.0
    %5380 = vmatpush1.msra.mxu0 0.0
    %5381 = vmatprep.subr.mxu0 0.0
    %5382 = vmatpush1.msra.mxu0 0.0
    %5383 = vmatprep.subr.mxu0 0.0
    %5384 = vmatpush1.msra.mxu0 0.0
    %5385 = vmatprep.mubr.f32.mxu0 0.0
    %v5386 = vand.u32 %v5083, 4294901760
    %v5387 = vsub.f32 %v5083, %v5386
    %v5388 = vand.u32 %v5387, 4294901760
    %5389 = vmatmul.mubr.f32.gmra.mrb[0].mxu0 %v5388
    %v5390 = vpop.f32.mrb[0].mxu0
    %v5391 = vadd.f32 %v5316, %v5390
    %v5392 = vpop.f32.mrb[0].mxu0
    %5393 = vdwg.mxu0
    %5394 = vmatprep.subr.mxu0 0.0
    %v5395 = vand.u32 %v5067, 4294901760
    %v5396 = vsub.f32 %v5067, %v5395
    %v5397 = vand.u32 %v5396, 4294901760
    %5398 = vmatpush1.msra.mxu0 %v5397
    %5399 = vmatprep.subr.mxu0 0.0
    %v5400 = vand.u32 %v5068, 4294901760
    %v5401 = vsub.f32 %v5068, %v5400
    %v5402 = vand.u32 %v5401, 4294901760
    %5403 = vmatpush1.msra.mxu0 %v5402
    %5404 = vmatprep.subr.mxu0 0.0
    %5405 = vmatpush1.msra.mxu0 0.0
    %5406 = vmatprep.subr.mxu0 0.0
    %5407 = vmatpush1.msra.mxu0 0.0
    %5408 = vmatprep.subr.mxu0 0.0
    %5409 = vmatpush1.msra.mxu0 0.0
    %5410 = vmatprep.subr.mxu0 0.0
    %5411 = vmatpush1.msra.mxu0 0.0
    %5412 = vmatprep.subr.mxu0 0.0
    %5413 = vmatpush1.msra.mxu0 0.0
    %5414 = vmatprep.subr.mxu0 0.0
    %5415 = vmatpush1.msra.mxu0 0.0
    %5416 = vmatprep.subr.mxu0 0.0
    %5417 = vmatpush1.msra.mxu0 0.0
    %5418 = vmatprep.subr.mxu0 0.0
    %5419 = vmatpush1.msra.mxu0 0.0
    %5420 = vmatprep.subr.mxu0 0.0
    %5421 = vmatpush1.msra.mxu0 0.0
    %5422 = vmatprep.subr.mxu0 0.0
    %5423 = vmatpush1.msra.mxu0 0.0
    %5424 = vmatprep.subr.mxu0 0.0
    %5425 = vmatpush1.msra.mxu0 0.0
    %5426 = vmatprep.subr.mxu0 0.0
    %5427 = vmatpush1.msra.mxu0 0.0
    %5428 = vmatprep.subr.mxu0 0.0
    %5429 = vmatpush1.msra.mxu0 0.0
    %5430 = vmatprep.subr.mxu0 0.0
    %5431 = vmatpush1.msra.mxu0 0.0
    %5432 = vmatprep.subr.mxu0 0.0
    %5433 = vmatpush1.msra.mxu0 0.0
    %5434 = vmatprep.subr.mxu0 0.0
    %5435 = vmatpush1.msra.mxu0 0.0
    %5436 = vmatprep.subr.mxu0 0.0
    %5437 = vmatpush1.msra.mxu0 0.0
    %5438 = vmatprep.subr.mxu0 0.0
    %5439 = vmatpush1.msra.mxu0 0.0
    %5440 = vmatprep.subr.mxu0 0.0
    %5441 = vmatpush1.msra.mxu0 0.0
    %5442 = vmatprep.subr.mxu0 0.0
    %5443 = vmatpush1.msra.mxu0 0.0
    %5444 = vmatprep.subr.mxu0 0.0
    %5445 = vmatpush1.msra.mxu0 0.0
    %5446 = vmatprep.subr.mxu0 0.0
    %5447 = vmatpush1.msra.mxu0 0.0
    %5448 = vmatprep.subr.mxu0 0.0
    %5449 = vmatpush1.msra.mxu0 0.0
    %5450 = vmatprep.subr.mxu0 0.0
    %5451 = vmatpush1.msra.mxu0 0.0
    %5452 = vmatprep.subr.mxu0 0.0
    %5453 = vmatpush1.msra.mxu0 0.0
    %5454 = vmatprep.subr.mxu0 0.0
    %5455 = vmatpush1.msra.mxu0 0.0
    %5456 = vmatprep.subr.mxu0 0.0
    %5457 = vmatpush1.msra.mxu0 0.0
    %5458 = vmatprep.subr.mxu0 0.0
    %5459 = vmatpush1.msra.mxu0 0.0
    %5460 = vmatprep.subr.mxu0 0.0
    %5461 = vmatpush1.msra.mxu0 0.0
    %5462 = vmatprep.subr.mxu0 0.0
    %5463 = vmatpush1.msra.mxu0 0.0
    %5464 = vmatprep.mubr.f32.mxu0 0.0
    %v5465 = vand.u32 %v5083, 4294901760
    %5466 = vmatmul.mubr.f32.gmra.mrb[0].mxu0 %v5465
    %v5467 = vpop.f32.mrb[0].mxu0
    %v5468 = vadd.f32 %v5391, %v5467
    %v5469 = vpop.f32.mrb[0].mxu0
    %5470 = vdwg.mxu0
    %5471 = vmatprep.subr.mxu0 0.0
    %v5472 = vand.u32 %v5067, 4294901760
    %5473 = vmatpush1.msra.mxu0 %v5472
    %5474 = vmatprep.subr.mxu0 0.0
    %v5475 = vand.u32 %v5068, 4294901760
    %5476 = vmatpush1.msra.mxu0 %v5475
    %5477 = vmatprep.subr.mxu0 0.0
    %5478 = vmatpush1.msra.mxu0 0.0
    %5479 = vmatprep.subr.mxu0 0.0
    %5480 = vmatpush1.msra.mxu0 0.0
    %5481 = vmatprep.subr.mxu0 0.0
    %5482 = vmatpush1.msra.mxu0 0.0
    %5483 = vmatprep.subr.mxu0 0.0
    %5484 = vmatpush1.msra.mxu0 0.0
    %5485 = vmatprep.subr.mxu0 0.0
    %5486 = vmatpush1.msra.mxu0 0.0
    %5487 = vmatprep.subr.mxu0 0.0
    %5488 = vmatpush1.msra.mxu0 0.0
    %5489 = vmatprep.subr.mxu0 0.0
    %5490 = vmatpush1.msra.mxu0 0.0
    %5491 = vmatprep.subr.mxu0 0.0
    %5492 = vmatpush1.msra.mxu0 0.0
    %5493 = vmatprep.subr.mxu0 0.0
    %5494 = vmatpush1.msra.mxu0 0.0
    %5495 = vmatprep.subr.mxu0 0.0
    %5496 = vmatpush1.msra.mxu0 0.0
    %5497 = vmatprep.subr.mxu0 0.0
    %5498 = vmatpush1.msra.mxu0 0.0
    %5499 = vmatprep.subr.mxu0 0.0
    %5500 = vmatpush1.msra.mxu0 0.0
    %5501 = vmatprep.subr.mxu0 0.0
    %5502 = vmatpush1.msra.mxu0 0.0
    %5503 = vmatprep.subr.mxu0 0.0
    %5504 = vmatpush1.msra.mxu0 0.0
    %5505 = vmatprep.subr.mxu0 0.0
    %5506 = vmatpush1.msra.mxu0 0.0
    %5507 = vmatprep.subr.mxu0 0.0
    %5508 = vmatpush1.msra.mxu0 0.0
    %5509 = vmatprep.subr.mxu0 0.0
    %5510 = vmatpush1.msra.mxu0 0.0
    %5511 = vmatprep.subr.mxu0 0.0
    %5512 = vmatpush1.msra.mxu0 0.0
    %5513 = vmatprep.subr.mxu0 0.0
    %5514 = vmatpush1.msra.mxu0 0.0
    %5515 = vmatprep.subr.mxu0 0.0
    %5516 = vmatpush1.msra.mxu0 0.0
    %5517 = vmatprep.subr.mxu0 0.0
    %5518 = vmatpush1.msra.mxu0 0.0
    %5519 = vmatprep.subr.mxu0 0.0
    %5520 = vmatpush1.msra.mxu0 0.0
    %5521 = vmatprep.subr.mxu0 0.0
    %5522 = vmatpush1.msra.mxu0 0.0
    %5523 = vmatprep.subr.mxu0 0.0
    %5524 = vmatpush1.msra.mxu0 0.0
    %5525 = vmatprep.subr.mxu0 0.0
    %5526 = vmatpush1.msra.mxu0 0.0
    %5527 = vmatprep.subr.mxu0 0.0
    %5528 = vmatpush1.msra.mxu0 0.0
    %5529 = vmatprep.subr.mxu0 0.0
    %5530 = vmatpush1.msra.mxu0 0.0
    %5531 = vmatprep.subr.mxu0 0.0
    %5532 = vmatpush1.msra.mxu0 0.0
    %5533 = vmatprep.subr.mxu0 0.0
    %5534 = vmatpush1.msra.mxu0 0.0
    %5535 = vmatprep.subr.mxu0 0.0
    %5536 = vmatpush1.msra.mxu0 0.0
    %5537 = vmatprep.mubr.f32.mxu0 0.0
    %v5538 = vand.u32 %v5083, 4294901760
    %5539 = vmatmul.mubr.f32.gmra.mrb[0].mxu0 %v5538
    %v5540 = vpop.f32.mrb[0].mxu0
    %v5541 = vadd.f32 %v5468, %v5540
    %v5542 = vpop.f32.mrb[0].mxu0
    %5543 = vdwg.mxu0
    %v5544 = vrcp.pop %v5081
    %v5545 = vmul.f32 %v5541, %v5544
    %v5546 = vld [vmem:[#allocation19] sm:$0x3]
    %v5547 = vld [vmem:[#allocation18] sm:$0xff]
    %v5548 = vld [vmem:[#allocation18 + $0x8] sm:$0xff]
    %v5549 = vld [vmem:[#allocation18 + $0x10] sm:$0xff]
    %v5550 = vld [vmem:[#allocation18 + $0x18] sm:$0xff]
    %v5551 = vlaneseq
    %v5552 = vshrl.u32 %v5551, 7
    %v5553 = vsub.s32 0, %v5552
    %v5554 = vrot.slane %v5546, %v5553
    %v5556 = vsel %vm1933, %v5545, 0
    %5558 = vmatprep.subr.mxu0 0.0
    %5559 = vmatpush1.msra.mxu0 %v5547
    %5560 = vmatprep.subr.mxu0 0.0
    %5561 = vmatpush1.msra.mxu0 %v5548
    %5562 = vmatprep.subr.mxu0 0.0
    %5563 = vmatpush1.msra.mxu0 %v5549
    %5564 = vmatprep.subr.mxu0 0.0
    %5565 = vmatpush1.msra.mxu0 %v5550
    %5566 = vmatprep.subr.mxu0 0.0
    %5567 = vmatpush1.msra.mxu0 0.0
    %5568 = vmatprep.subr.mxu0 0.0
    %5569 = vmatpush1.msra.mxu0 0.0
    %5570 = vmatprep.subr.mxu0 0.0
    %5571 = vmatpush1.msra.mxu0 0.0
    %5572 = vmatprep.subr.mxu0 0.0
    %5573 = vmatpush1.msra.mxu0 0.0
    %5574 = vmatprep.subr.mxu0 0.0
    %5575 = vmatpush1.msra.mxu0 0.0
    %5576 = vmatprep.subr.mxu0 0.0
    %5577 = vmatpush1.msra.mxu0 0.0
    %5578 = vmatprep.subr.mxu0 0.0
    %5579 = vmatpush1.msra.mxu0 0.0
    %5580 = vmatprep.subr.mxu0 0.0
    %5581 = vmatpush1.msra.mxu0 0.0
    %5582 = vmatprep.subr.mxu0 0.0
    %5583 = vmatpush1.msra.mxu0 0.0
    %5584 = vmatprep.subr.mxu0 0.0
    %5585 = vmatpush1.msra.mxu0 0.0
    %5586 = vmatprep.subr.mxu0 0.0
    %5587 = vmatpush1.msra.mxu0 0.0
    %5588 = vmatprep.subr.mxu0 0.0
    %5589 = vmatpush1.msra.mxu0 0.0
    %5590 = vmatprep.subr.mxu0 0.0
    %5591 = vmatpush1.msra.mxu0 0.0
    %5592 = vmatprep.subr.mxu0 0.0
    %5593 = vmatpush1.msra.mxu0 0.0
    %5594 = vmatprep.subr.mxu0 0.0
    %5595 = vmatpush1.msra.mxu0 0.0
    %5596 = vmatprep.subr.mxu0 0.0
    %5597 = vmatpush1.msra.mxu0 0.0
    %5598 = vmatprep.subr.mxu0 0.0
    %5599 = vmatpush1.msra.mxu0 0.0
    %5600 = vmatprep.subr.mxu0 0.0
    %5601 = vmatpush1.msra.mxu0 0.0
    %5602 = vmatprep.subr.mxu0 0.0
    %5603 = vmatpush1.msra.mxu0 0.0
    %5604 = vmatprep.subr.mxu0 0.0
    %5605 = vmatpush1.msra.mxu0 0.0
    %5606 = vmatprep.subr.mxu0 0.0
    %5607 = vmatpush1.msra.mxu0 0.0
    %5608 = vmatprep.subr.mxu0 0.0
    %5609 = vmatpush1.msra.mxu0 0.0
    %5610 = vmatprep.subr.mxu0 0.0
    %5611 = vmatpush1.msra.mxu0 0.0
    %5612 = vmatprep.subr.mxu0 0.0
    %5613 = vmatpush1.msra.mxu0 0.0
    %5614 = vmatprep.subr.mxu0 0.0
    %5615 = vmatpush1.msra.mxu0 0.0
    %5616 = vmatprep.subr.mxu0 0.0
    %5617 = vmatpush1.msra.mxu0 0.0
    %5618 = vmatprep.subr.mxu0 0.0
    %5619 = vmatpush1.msra.mxu0 0.0
    %5620 = vmatprep.subr.mxu0 0.0
    %5621 = vmatpush1.msra.mxu0 0.0
    %5622 = vmatprep.mubr.f32.mxu0 0.0
    %5623 = vmatmul.mubr.f32.gmra.mrb[0].mxu0 %v5556
    %v5624 = vpop.f32.mrb[0].mxu0
    %v5625 = vadd.f32 %v5554, %v5624
    %v5626 = vpop.f32.mrb[0].mxu0
    %5627 = vdwg.mxu0
    %v5628 = vmax.f32 %v5625, 0.0
    %v5629 = vld [vmem:[%s20] sm:$0xff]
    %v5630 = vld [vmem:[%s20 + $0x8] sm:$0xff]
    %v5631 = vld [vmem:[%s20 + $0x10] sm:$0xff]
    %v5632 = vld [vmem:[%s20 + $0x18] sm:$0xff]
    %v5633 = vlaneseq
    %v5634 = vshrl.u32 %v5633, 7
    %v5635 = vsub.s32 1, %v5634
    %v5636 = vrot.slane %v5546, %v5635
    %v5638 = vsel %vm1933, %v5628, 0
    %5640 = vmatprep.subr.mxu0 0.0
    %5641 = vmatpush1.msra.mxu0 %v5629
    %5642 = vmatprep.subr.mxu0 0.0
    %5643 = vmatpush1.msra.mxu0 %v5630
    %5644 = vmatprep.subr.mxu0 0.0
    %5645 = vmatpush1.msra.mxu0 %v5631
    %5646 = vmatprep.subr.mxu0 0.0
    %5647 = vmatpush1.msra.mxu0 %v5632
    %5648 = vmatprep.subr.mxu0 0.0
    %5649 = vmatpush1.msra.mxu0 0.0
    %5650 = vmatprep.subr.mxu0 0.0
    %5651 = vmatpush1.msra.mxu0 0.0
    %5652 = vmatprep.subr.mxu0 0.0
    %5653 = vmatpush1.msra.mxu0 0.0
    %5654 = vmatprep.subr.mxu0 0.0
    %5655 = vmatpush1.msra.mxu0 0.0
    %5656 = vmatprep.subr.mxu0 0.0
    %5657 = vmatpush1.msra.mxu0 0.0
    %5658 = vmatprep.subr.mxu0 0.0
    %5659 = vmatpush1.msra.mxu0 0.0
    %5660 = vmatprep.subr.mxu0 0.0
    %5661 = vmatpush1.msra.mxu0 0.0
    %5662 = vmatprep.subr.mxu0 0.0
    %5663 = vmatpush1.msra.mxu0 0.0
    %5664 = vmatprep.subr.mxu0 0.0
    %5665 = vmatpush1.msra.mxu0 0.0
    %5666 = vmatprep.subr.mxu0 0.0
    %5667 = vmatpush1.msra.mxu0 0.0
    %5668 = vmatprep.subr.mxu0 0.0
    %5669 = vmatpush1.msra.mxu0 0.0
    %5670 = vmatprep.subr.mxu0 0.0
    %5671 = vmatpush1.msra.mxu0 0.0
    %5672 = vmatprep.subr.mxu0 0.0
    %5673 = vmatpush1.msra.mxu0 0.0
    %5674 = vmatprep.subr.mxu0 0.0
    %5675 = vmatpush1.msra.mxu0 0.0
    %5676 = vmatprep.subr.mxu0 0.0
    %5677 = vmatpush1.msra.mxu0 0.0
    %5678 = vmatprep.subr.mxu0 0.0
    %5679 = vmatpush1.msra.mxu0 0.0
    %5680 = vmatprep.subr.mxu0 0.0
    %5681 = vmatpush1.msra.mxu0 0.0
    %5682 = vmatprep.subr.mxu0 0.0
    %5683 = vmatpush1.msra.mxu0 0.0
    %5684 = vmatprep.subr.mxu0 0.0
    %5685 = vmatpush1.msra.mxu0 0.0
    %5686 = vmatprep.subr.mxu0 0.0
    %5687 = vmatpush1.msra.mxu0 0.0
    %5688 = vmatprep.subr.mxu0 0.0
    %5689 = vmatpush1.msra.mxu0 0.0
    %5690 = vmatprep.subr.mxu0 0.0
    %5691 = vmatpush1.msra.mxu0 0.0
    %5692 = vmatprep.subr.mxu0 0.0
    %5693 = vmatpush1.msra.mxu0 0.0
    %5694 = vmatprep.subr.mxu0 0.0
    %5695 = vmatpush1.msra.mxu0 0.0
    %5696 = vmatprep.subr.mxu0 0.0
    %5697 = vmatpush1.msra.mxu0 0.0
    %5698 = vmatprep.subr.mxu0 0.0
    %5699 = vmatpush1.msra.mxu0 0.0
    %5700 = vmatprep.subr.mxu0 0.0
    %5701 = vmatpush1.msra.mxu0 0.0
    %5702 = vmatprep.subr.mxu0 0.0
    %5703 = vmatpush1.msra.mxu0 0.0
    %5704 = vmatprep.mubr.f32.mxu0 0.0
    %5705 = vmatmul.mubr.f32.gmra.mrb[0].mxu0 %v5638
    %v5706 = vpop.f32.mrb[0].mxu0
    %v5707 = vadd.f32 %v5636, %v5706
    %v5708 = vpop.f32.mrb[0].mxu0
    %5709 = vdwg.mxu0
    %vm5710 = vcmask 17408
    %v5711 = vsel %vm5710, %v5707, -inf
    %5712 = vmax.xlane.f32.xlu0 %v5711
    %v5713 = vpop.xlane.xlu0 %5712
    %v5714 = vsub.f32 %v5707, %v5713
    %v5715 = vmul.f32 %v5714, 1.442695
    %v5716 = vpow.pop %v5715
    %v5717 = vsel %vm5710, %v5716, 0.0
    %5718 = vadd.xlane.f32.xlu0 %v5717
    %v5719 = vpop.xlane.xlu0 %5718
    %v5720 = vlog2.pop %v5719
    %v5721 = vmul.f32 %v5720, 0.6931472
    %v5722 = vsub.f32 %v5714, %v5721
    %5723 = vst.msk [vmem:[#allocation21] sm:$0x3] %vm5710, %v5722
    // Predicated region
    $region134: #{gine_forward.1} parent=1 // pred_check
      _
    $region135: #{gine_forward.1} parent=1 // pred_check_branch
      %5725 = sbr.rel (0) target = $region137
    $region136: #{gine_forward.1} parent=1 // pred_region
      %s5727 = ssub.s32 32, 32
      %5728 = vsyncadd [#allocation4], %s5727
      %s5730 = sshll.u32 [#allocation21], 4
      %s5731 = int_to_ptr.vmem [resolvable:$true] %s5730
      %5733 = dma.vmem_to_hbm [thread:$0]  %s5731, 32, %s22, [#allocation4]
    $region137: #{gine_forward.1} parent=1 // pred_fallthru
      _
    // Predicated region
    $region138: #{gine_forward.1} parent=1 // pred_check
      _
    $region139: #{gine_forward.1} parent=1 // pred_check_branch
      %5735 = sbr.rel (0) target = $region141
    $region140: #{gine_forward.1} parent=1 // pred_region
      %5736 = dma.done [#allocation4], 32
    $region141: #{gine_forward.1} parent=1 // pred_fallthru
      _
    %5737 = vsyncpa [#allocation3], 1
    %5738 = vsyncpa [#allocation8], 1
    %5739 = vsyncpa [#allocation11], 1
    %5740 = vsyncpa [#allocation14], 1
    %5741 = vsyncpa [#allocation17], 1
    %5742 = vsyncpa [#allocation20], 1
    %5743 = vsyncpa [#allocation4], 1
    %5744 = vsyncpa [#allocation5], 1

</llo_original>
